<compile_context>
chip_gen: v7x
topology: tpu7x:2x2x1
jax: 0.10.0
libtpu: 0.0.40
codegen_flags: <defaults>
</compile_context>

<pallas_src>
import functools

import jax
import jax.numpy as jnp
import numpy as np
from jax.experimental import pallas as pl
from jax.experimental.pallas import tpu as pltpu


def _im2col(pad_ref, H, W):
    """Gather the 9 taps of a 3x3 conv from a zero-padded (H+2, Wp, C) VMEM
    buffer into a single (H*W, 9*C) matrix.  Column order is (ky, kx, c),
    matching the (3, 3, C, Cout) -> (9*C, Cout) weight reshape."""
    C = pad_ref.shape[-1]
    cols = []
    for ky in range(3):
        for kx in range(3):
            cols.append(pad_ref[ky:ky + H, kx:kx + W, :].reshape(H * W, C))
    return jnp.concatenate(cols, axis=-1)


def _disc_kernel(x_ref, w1_ref, b1_ref, w2_ref, b2_ref, w3_ref, b3_ref,
                 o_ref, pad1, pad2, pad3, *, H, W):
    """Fused 3-layer discriminator for one batch element.

    x_ref : (1, H, W, Cin) f32        input tile
    w1_ref: (9*Cin, 64)  bf16         b1_ref: (1, 64)  f32
    w2_ref: (9*64, 128)  bf16         b2_ref: (1, 128) f32
    w3_ref: (9, 128)     f32          b3_ref: (1, 1)   f32
    o_ref : (1, H, W)    f32          output tile
    pad1/2/3 : zero-halo VMEM scratch (H+2, Wp, {Cin,64,128}) f32
    """
    # Zero halo buffers every step (borders + alignment columns must stay 0;
    # interiors are fully overwritten below; scratch persists across steps and
    # cores, so never gate this on program_id).  Cost is negligible.
    pad1[...] = jnp.zeros_like(pad1)
    pad2[...] = jnp.zeros_like(pad2)
    pad3[...] = jnp.zeros_like(pad3)

    # ---- layer 1: Conv3x3(Cin -> 64) + LeakyReLU(0.2) ----------------------
    pad1[1:H + 1, 1:W + 1, :] = x_ref[0].astype(pad1.dtype)
    p1 = _im2col(pad1, H, W).astype(jnp.bfloat16)             # (HW, 9*Cin)
    a1 = jnp.dot(p1, w1_ref[...], preferred_element_type=jnp.float32)
    a1 = a1 + b1_ref[...]
    a1 = jnp.maximum(a1, 0.2 * a1)                            # LeakyReLU(0.2)
    pad2[1:H + 1, 1:W + 1, :] = a1.reshape(H, W, a1.shape[-1])

    # ---- layer 2: Conv3x3(64 -> 128) + LeakyReLU(0.2) ----------------------
    p2 = _im2col(pad2, H, W).astype(jnp.bfloat16)             # (HW, 576)
    a2 = jnp.dot(p2, w2_ref[...], preferred_element_type=jnp.float32)
    a2 = a2 + b2_ref[...]
    a2 = jnp.maximum(a2, 0.2 * a2)
    pad3[1:H + 1, 1:W + 1, :] = a2.reshape(H, W, a2.shape[-1])

    # ---- layer 3: Conv3x3(128 -> 1) + Sigmoid ------------------------------
    # Cout == 1: a 1-wide MXU matmul wastes the systolic array, so use VPU
    # multiplies + lane (XLU) reductions, accumulated in f32, directly in
    # (H, W) layout so the output store needs no relayout.
    acc = jnp.zeros((H, W), jnp.float32)
    t = 0
    for ky in range(3):
        for kx in range(3):
            patch = pad3[ky:ky + H, kx:kx + W, :]             # (H, W, 128)
            acc = acc + jnp.sum(patch * w3_ref[t:t + 1, :], axis=-1)
            t += 1
    acc = acc + b3_ref[...]
    o_ref[...] = (1.0 / (1.0 + jnp.exp(-acc))).reshape(1, H, W)


def discriminator_pallas(x_nhwc, params):
    """x_nhwc: (N, H, W, Cin) f32 -> (N, H, W) f32."""
    N, H, W, C_in = x_nhwc.shape
    Wp = ((W + 2 + 7) // 8) * 8          # sublane-aligned padded width

    (w1, b1), (w2, b2), (w3, b3) = params
    # Pre-reshape weights to (9*Cin, Cout); bf16 for the MXU layers.
    w1f = w1.reshape(9 * C_in, 64).astype(jnp.bfloat16)
    w2f = w2.reshape(9 * 64, 128).astype(jnp.bfloat16)
    w3f = w3.reshape(9, 128).astype(jnp.float32)              # (tap, cin), Cout=1
    b1f = b1.reshape(1, 64).astype(jnp.float32)
    b2f = b2.reshape(1, 128).astype(jnp.float32)
    b3f = b3.reshape(1, 1).astype(jnp.float32)

    kernel = functools.partial(_disc_kernel, H=H, W=W)
    out = pl.pallas_call(
        kernel,
        out_shape=jax.ShapeDtypeStruct((N, H, W), jnp.float32),
        grid=(N,),
        in_specs=[
            pl.BlockSpec((1, H, W, C_in), lambda n: (n, 0, 0, 0)),
            pl.BlockSpec((9 * C_in, 64), lambda n: (0, 0)),
            pl.BlockSpec((1, 64), lambda n: (0, 0)),
            pl.BlockSpec((9 * 64, 128), lambda n: (0, 0)),
            pl.BlockSpec((1, 128), lambda n: (0, 0)),
            pl.BlockSpec((9, 128), lambda n: (0, 0)),
            pl.BlockSpec((1, 1), lambda n: (0, 0)),
        ],
        out_specs=pl.BlockSpec((1, H, W), lambda n: (n, 0, 0)),
        scratch_shapes=[
            pltpu.VMEM((H + 2, Wp, C_in), jnp.float32),
            pltpu.VMEM((H + 2, Wp, 64), jnp.float32),
            pltpu.VMEM((H + 2, Wp, 128), jnp.float32),
        ],
        compiler_params=pltpu.CompilerParams(
            dimension_semantics=("parallel",)),
    )(x_nhwc.astype(jnp.float32), w1f, b1f, w2f, b2f, w3f, b3f)
    return out


def init_params(key, input_channels):
    """Deterministic init mimicking torch Conv2d default (U(+-1/sqrt(fan_in)))."""
    dims = [(input_channels, 64), (64, 128), (128, 1)]
    params = []
    for i, (cin, cout) in enumerate(dims):
        kw, kb = jax.random.split(jax.random.fold_in(key, i))
        fan_in = cin * 3 * 3
        bound = 1.0 / np.sqrt(fan_in)
        w = jax.random.uniform(kw, (3, 3, cin, cout), jnp.float32, -bound, bound)
        b = jax.random.uniform(kb, (cout,), jnp.float32, -bound, bound)
        params.append((w, b))
    return params


@jax.jit
def discriminator_forward(x_nchw, params):
    """Matches PyTorch Discriminator.forward; x_nchw: (N, C, H, W) -> (N, 1, H, W)."""
    x_nhwc = jnp.transpose(x_nchw, (0, 2, 3, 1)).astype(jnp.float32)
    out_nhw = discriminator_pallas(x_nhwc, params)            # (N, H, W)
    return out_nhw[:, None, :, :]                             # -> (N, 1, H, W)


def _reference_forward(x_nchw, params):
    """Pure-JAX f32 reference (lax.conv at HIGHEST precision)."""
    x = x_nchw.astype(jnp.float32)
    for i, (w, b) in enumerate(params):
        w_oihw = jnp.transpose(w, (3, 2, 0, 1))               # HWIO -> OIHW
        x = jax.lax.conv_general_dilated(
            x, w_oihw, window_strides=(1, 1), padding="SAME",
            dimension_numbers=("NCHW", "OIHW", "NCHW"),
            precision=jax.lax.Precision.HIGHEST)
        x = x + b.reshape(1, -1, 1, 1)
        if i < 2:
            x = jnp.where(x >= 0, x, 0.2 * x)
        else:
            x = jax.nn.sigmoid(x)
    return x


if __name__ == "__main__":
    key = jax.random.PRNGKey(0)
    k_in, k_par = jax.random.split(key)

    N, C, H, W = 2, 4, 16, 16
    x = jax.random.normal(k_in, (N, C, H, W), jnp.float32)
    params = init_params(k_par, input_channels=C)

    out = discriminator_forward(x, params)
    out = jax.block_until_ready(out)
    assert out.shape == (N, 1, H, W), out.shape

    ref = jax.block_until_ready(_reference_forward(x, params))
    # bf16 MXU inputs (f32 accumulation) vs f32 reference -> loosened tolerance.
    err = float(np.max(np.abs(np.asarray(out) - np.asarray(ref))))
    assert np.allclose(np.asarray(out), np.asarray(ref), atol=2e-2, rtol=2e-2), err

    print("KERNEL_OK")
</pallas_src>

<mosaic_0001>
module attributes {stable_mosaic.version = 11 : i64} {
  func.func @_disc_kernel(%arg0: i32, %arg1: memref<1x16x16x4xf32, #tpu.memory_space<vmem>>, %arg2: memref<36x64xbf16, #tpu.memory_space<vmem>>, %arg3: memref<1x64xf32, #tpu.memory_space<vmem>>, %arg4: memref<576x128xbf16, #tpu.memory_space<vmem>>, %arg5: memref<1x128xf32, #tpu.memory_space<vmem>>, %arg6: memref<9x128xf32, #tpu.memory_space<vmem>>, %arg7: memref<1x1xf32, #tpu.memory_space<vmem>>, %arg8: memref<1x16x16xf32, #tpu.memory_space<vmem>>, %arg9: memref<18x24x4xf32, #tpu.memory_space<vmem>>, %arg10: memref<18x24x64xf32, #tpu.memory_space<vmem>>, %arg11: memref<18x24x128xf32, #tpu.memory_space<vmem>>) attributes {dimension_semantics = [#tpu.dimension_semantics<parallel>], iteration_bounds = array<i64: 2>, scalar_prefetch = 0 : i64, scratch_operands = 3 : i64, tpu.core_type = #tpu.core_type<tc>, window_params = [{transform_indices = @transform_0, window_bounds = array<i64: 1, 16, 16, 4>}, {pipeline_mode = #tpu.pipeline_mode<synchronous>, transform_indices = @transform_1, window_bounds = array<i64: 36, 64>}, {pipeline_mode = #tpu.pipeline_mode<synchronous>, transform_indices = @transform_2, window_bounds = array<i64: 1, 64>}, {pipeline_mode = #tpu.pipeline_mode<synchronous>, transform_indices = @transform_3, window_bounds = array<i64: 576, 128>}, {pipeline_mode = #tpu.pipeline_mode<synchronous>, transform_indices = @transform_4, window_bounds = array<i64: 1, 128>}, {pipeline_mode = #tpu.pipeline_mode<synchronous>, transform_indices = @transform_5, window_bounds = array<i64: 9, 128>}, {pipeline_mode = #tpu.pipeline_mode<synchronous>, transform_indices = @transform_6, window_bounds = array<i64: 1, 1>}, {transform_indices = @transform_7, window_bounds = array<i64: 1, 16, 16>}]} {
    %cst = arith.constant 0.000000e+00 : f32
    %0 = vector.broadcast %cst : f32 to vector<18x24x4xf32>
    %c0 = arith.constant 0 : index
    %c0_0 = arith.constant 0 : index
    %c0_1 = arith.constant 0 : index
    %1 = vector.load %arg9[%c0, %c0_0, %c0_1] : memref<18x24x4xf32, #tpu.memory_space<vmem>>, vector<18x24x4xf32>
    tpu.vector_store %arg9[%c0, %c0_0, %c0_1], %0 {strides = array<i32>} : memref<18x24x4xf32, #tpu.memory_space<vmem>>, vector<18x24x4xf32>,
    %cst_2 = arith.constant 0.000000e+00 : f32
    %2 = vector.broadcast %cst_2 : f32 to vector<18x24x64xf32>
    %c0_3 = arith.constant 0 : index
    %c0_4 = arith.constant 0 : index
    %c0_5 = arith.constant 0 : index
    %3 = vector.load %arg10[%c0_3, %c0_4, %c0_5] : memref<18x24x64xf32, #tpu.memory_space<vmem>>, vector<18x24x64xf32>
    tpu.vector_store %arg10[%c0_3, %c0_4, %c0_5], %2 {strides = array<i32>} : memref<18x24x64xf32, #tpu.memory_space<vmem>>, vector<18x24x64xf32>,
    %cst_6 = arith.constant 0.000000e+00 : f32
    %4 = vector.broadcast %cst_6 : f32 to vector<18x24x128xf32>
    %c0_7 = arith.constant 0 : index
    %c0_8 = arith.constant 0 : index
    %c0_9 = arith.constant 0 : index
    %5 = vector.load %arg11[%c0_7, %c0_8, %c0_9] : memref<18x24x128xf32, #tpu.memory_space<vmem>>, vector<18x24x128xf32>
    tpu.vector_store %arg11[%c0_7, %c0_8, %c0_9], %4 {strides = array<i32>} : memref<18x24x128xf32, #tpu.memory_space<vmem>>, vector<18x24x128xf32>,
    %c0_10 = arith.constant 0 : index
    %c0_11 = arith.constant 0 : index
    %c0_12 = arith.constant 0 : index
    %c0_13 = arith.constant 0 : index
    %6 = vector.load %arg1[%c0_10, %c0_11, %c0_12, %c0_13] : memref<1x16x16x4xf32, #tpu.memory_space<vmem>>, vector<1x16x16x4xf32>
    %7 = vector.shape_cast %6 : vector<1x16x16x4xf32> to vector<16x16x4xf32>
    %c1 = arith.constant 1 : index
    %c1_14 = arith.constant 1 : index
    %c0_15 = arith.constant 0 : index
    %8 = vector.load %arg9[%c1, %c1_14, %c0_15] : memref<18x24x4xf32, #tpu.memory_space<vmem>>, vector<16x16x4xf32>
    tpu.vector_store %arg9[%c1, %c1_14, %c0_15], %7 {strides = array<i32>} : memref<18x24x4xf32, #tpu.memory_space<vmem>>, vector<16x16x4xf32>,
    %c0_16 = arith.constant 0 : index
    %c0_17 = arith.constant 0 : index
    %c0_18 = arith.constant 0 : index
    %9 = vector.load %arg9[%c0_16, %c0_17, %c0_18] : memref<18x24x4xf32, #tpu.memory_space<vmem>>, vector<16x16x4xf32>
    %10 = vector.shape_cast %9 : vector<16x16x4xf32> to vector<256x4xf32>
    %c0_19 = arith.constant 0 : index
    %c1_20 = arith.constant 1 : index
    %c0_21 = arith.constant 0 : index
    %11 = vector.load %arg9[%c0_19, %c1_20, %c0_21] : memref<18x24x4xf32, #tpu.memory_space<vmem>>, vector<16x16x4xf32>
    %12 = vector.shape_cast %11 : vector<16x16x4xf32> to vector<256x4xf32>
    %c0_22 = arith.constant 0 : index
    %c2 = arith.constant 2 : index
    %c0_23 = arith.constant 0 : index
    %13 = vector.load %arg9[%c0_22, %c2, %c0_23] : memref<18x24x4xf32, #tpu.memory_space<vmem>>, vector<16x16x4xf32>
    %14 = vector.shape_cast %13 : vector<16x16x4xf32> to vector<256x4xf32>
    %c1_24 = arith.constant 1 : index
    %c0_25 = arith.constant 0 : index
    %c0_26 = arith.constant 0 : index
    %15 = vector.load %arg9[%c1_24, %c0_25, %c0_26] : memref<18x24x4xf32, #tpu.memory_space<vmem>>, vector<16x16x4xf32>
    %16 = vector.shape_cast %15 : vector<16x16x4xf32> to vector<256x4xf32>
    %c1_27 = arith.constant 1 : index
    %c1_28 = arith.constant 1 : index
    %c0_29 = arith.constant 0 : index
    %17 = vector.load %arg9[%c1_27, %c1_28, %c0_29] : memref<18x24x4xf32, #tpu.memory_space<vmem>>, vector<16x16x4xf32>
    %18 = vector.shape_cast %17 : vector<16x16x4xf32> to vector<256x4xf32>
    %c1_30 = arith.constant 1 : index
    %c2_31 = arith.constant 2 : index
    %c0_32 = arith.constant 0 : index
    %19 = vector.load %arg9[%c1_30, %c2_31, %c0_32] : memref<18x24x4xf32, #tpu.memory_space<vmem>>, vector<16x16x4xf32>
    %20 = vector.shape_cast %19 : vector<16x16x4xf32> to vector<256x4xf32>
    %c2_33 = arith.constant 2 : index
    %c0_34 = arith.constant 0 : index
    %c0_35 = arith.constant 0 : index
    %21 = vector.load %arg9[%c2_33, %c0_34, %c0_35] : memref<18x24x4xf32, #tpu.memory_space<vmem>>, vector<16x16x4xf32>
    %22 = vector.shape_cast %21 : vector<16x16x4xf32> to vector<256x4xf32>
    %c2_36 = arith.constant 2 : index
    %c1_37 = arith.constant 1 : index
    %c0_38 = arith.constant 0 : index
    %23 = vector.load %arg9[%c2_36, %c1_37, %c0_38] : memref<18x24x4xf32, #tpu.memory_space<vmem>>, vector<16x16x4xf32>
    %24 = vector.shape_cast %23 : vector<16x16x4xf32> to vector<256x4xf32>
    %c2_39 = arith.constant 2 : index
    %c2_40 = arith.constant 2 : index
    %c0_41 = arith.constant 0 : index
    %25 = vector.load %arg9[%c2_39, %c2_40, %c0_41] : memref<18x24x4xf32, #tpu.memory_space<vmem>>, vector<16x16x4xf32>
    %26 = vector.shape_cast %25 : vector<16x16x4xf32> to vector<256x4xf32>
    %27 = tpu.concatenate %10, %12, %14, %16, %18, %20, %22, %24, %26 in 1 : vector<256x4xf32>, vector<256x4xf32>, vector<256x4xf32>, vector<256x4xf32>, vector<256x4xf32>, vector<256x4xf32>, vector<256x4xf32>, vector<256x4xf32>, vector<256x4xf32> -> vector<256x36xf32>
    %28 = arith.truncf %27 : vector<256x36xf32> to vector<256x36xbf16>
    %c0_42 = arith.constant 0 : index
    %c0_43 = arith.constant 0 : index
    %29 = vector.load %arg2[%c0_42, %c0_43] : memref<36x64xbf16, #tpu.memory_space<vmem>>, vector<36x64xbf16>
    %cst_44 = arith.constant dense<0.000000e+00> : vector<256x64xf32>
    %30 = tpu.matmul %28, %29, %cst_44 {dimension_numbers = #tpu.dot_dimension_numbers<[1], [0], [0], [1], [0, 0, 1, 1], [], []>} : vector<256x36xbf16>, vector<36x64xbf16>, vector<256x64xf32> -> vector<256x64xf32>
    %c0_45 = arith.constant 0 : index
    %c0_46 = arith.constant 0 : index
    %31 = vector.load %arg3[%c0_45, %c0_46] : memref<1x64xf32, #tpu.memory_space<vmem>>, vector<1x64xf32>
    %32 = vector.broadcast %31 : vector<1x64xf32> to vector<256x64xf32>
    %33 = arith.addf %30, %32 : vector<256x64xf32>
    %cst_47 = arith.constant 2.000000e-01 : f32
    %34 = vector.broadcast %cst_47 : f32 to vector<256x64xf32>
    %35 = arith.mulf %34, %33 : vector<256x64xf32>
    %36 = arith.maximumf %33, %35 : vector<256x64xf32>
    %37 = vector.shape_cast %36 : vector<256x64xf32> to vector<16x16x64xf32>
    %c1_48 = arith.constant 1 : index
    %c1_49 = arith.constant 1 : index
    %c0_50 = arith.constant 0 : index
    %38 = vector.load %arg10[%c1_48, %c1_49, %c0_50] : memref<18x24x64xf32, #tpu.memory_space<vmem>>, vector<16x16x64xf32>
    tpu.vector_store %arg10[%c1_48, %c1_49, %c0_50], %37 {strides = array<i32>} : memref<18x24x64xf32, #tpu.memory_space<vmem>>, vector<16x16x64xf32>,
    %c0_51 = arith.constant 0 : index
    %c0_52 = arith.constant 0 : index
    %c0_53 = arith.constant 0 : index
    %39 = vector.load %arg10[%c0_51, %c0_52, %c0_53] : memref<18x24x64xf32, #tpu.memory_space<vmem>>, vector<16x16x64xf32>
    %40 = vector.shape_cast %39 : vector<16x16x64xf32> to vector<256x64xf32>
    %c0_54 = arith.constant 0 : index
    %c1_55 = arith.constant 1 : index
    %c0_56 = arith.constant 0 : index
    %41 = vector.load %arg10[%c0_54, %c1_55, %c0_56] : memref<18x24x64xf32, #tpu.memory_space<vmem>>, vector<16x16x64xf32>
    %42 = vector.shape_cast %41 : vector<16x16x64xf32> to vector<256x64xf32>
    %c0_57 = arith.constant 0 : index
    %c2_58 = arith.constant 2 : index
    %c0_59 = arith.constant 0 : index
    %43 = vector.load %arg10[%c0_57, %c2_58, %c0_59] : memref<18x24x64xf32, #tpu.memory_space<vmem>>, vector<16x16x64xf32>
    %44 = vector.shape_cast %43 : vector<16x16x64xf32> to vector<256x64xf32>
    %c1_60 = arith.constant 1 : index
    %c0_61 = arith.constant 0 : index
    %c0_62 = arith.constant 0 : index
    %45 = vector.load %arg10[%c1_60, %c0_61, %c0_62] : memref<18x24x64xf32, #tpu.memory_space<vmem>>, vector<16x16x64xf32>
    %46 = vector.shape_cast %45 : vector<16x16x64xf32> to vector<256x64xf32>
    %c1_63 = arith.constant 1 : index
    %c1_64 = arith.constant 1 : index
    %c0_65 = arith.constant 0 : index
    %47 = vector.load %arg10[%c1_63, %c1_64, %c0_65] : memref<18x24x64xf32, #tpu.memory_space<vmem>>, vector<16x16x64xf32>
    %48 = vector.shape_cast %47 : vector<16x16x64xf32> to vector<256x64xf32>
    %c1_66 = arith.constant 1 : index
    %c2_67 = arith.constant 2 : index
    %c0_68 = arith.constant 0 : index
    %49 = vector.load %arg10[%c1_66, %c2_67, %c0_68] : memref<18x24x64xf32, #tpu.memory_space<vmem>>, vector<16x16x64xf32>
    %50 = vector.shape_cast %49 : vector<16x16x64xf32> to vector<256x64xf32>
    %c2_69 = arith.constant 2 : index
    %c0_70 = arith.constant 0 : index
    %c0_71 = arith.constant 0 : index
    %51 = vector.load %arg10[%c2_69, %c0_70, %c0_71] : memref<18x24x64xf32, #tpu.memory_space<vmem>>, vector<16x16x64xf32>
    %52 = vector.shape_cast %51 : vector<16x16x64xf32> to vector<256x64xf32>
    %c2_72 = arith.constant 2 : index
    %c1_73 = arith.constant 1 : index
    %c0_74 = arith.constant 0 : index
    %53 = vector.load %arg10[%c2_72, %c1_73, %c0_74] : memref<18x24x64xf32, #tpu.memory_space<vmem>>, vector<16x16x64xf32>
    %54 = vector.shape_cast %53 : vector<16x16x64xf32> to vector<256x64xf32>
    %c2_75 = arith.constant 2 : index
    %c2_76 = arith.constant 2 : index
    %c0_77 = arith.constant 0 : index
    %55 = vector.load %arg10[%c2_75, %c2_76, %c0_77] : memref<18x24x64xf32, #tpu.memory_space<vmem>>, vector<16x16x64xf32>
    %56 = vector.shape_cast %55 : vector<16x16x64xf32> to vector<256x64xf32>
    %57 = tpu.concatenate %40, %42, %44, %46, %48, %50, %52, %54, %56 in 1 : vector<256x64xf32>, vector<256x64xf32>, vector<256x64xf32>, vector<256x64xf32>, vector<256x64xf32>, vector<256x64xf32>, vector<256x64xf32>, vector<256x64xf32>, vector<256x64xf32> -> vector<256x576xf32>
    %58 = arith.truncf %57 : vector<256x576xf32> to vector<256x576xbf16>
    %c0_78 = arith.constant 0 : index
    %c0_79 = arith.constant 0 : index
    %59 = vector.load %arg4[%c0_78, %c0_79] : memref<576x128xbf16, #tpu.memory_space<vmem>>, vector<576x128xbf16>
    %cst_80 = arith.constant dense<0.000000e+00> : vector<256x128xf32>
    %60 = tpu.matmul %58, %59, %cst_80 {dimension_numbers = #tpu.dot_dimension_numbers<[1], [0], [0], [1], [0, 0, 1, 1], [], []>} : vector<256x576xbf16>, vector<576x128xbf16>, vector<256x128xf32> -> vector<256x128xf32>
    %c0_81 = arith.constant 0 : index
    %c0_82 = arith.constant 0 : index
    %61 = vector.load %arg5[%c0_81, %c0_82] : memref<1x128xf32, #tpu.memory_space<vmem>>, vector<1x128xf32>
    %62 = vector.broadcast %61 : vector<1x128xf32> to vector<256x128xf32>
    %63 = arith.addf %60, %62 : vector<256x128xf32>
    %cst_83 = arith.constant 2.000000e-01 : f32
    %64 = vector.broadcast %cst_83 : f32 to vector<256x128xf32>
    %65 = arith.mulf %64, %63 : vector<256x128xf32>
    %66 = arith.maximumf %63, %65 : vector<256x128xf32>
    %67 = vector.shape_cast %66 : vector<256x128xf32> to vector<16x16x128xf32>
    %c1_84 = arith.constant 1 : index
    %c1_85 = arith.constant 1 : index
    %c0_86 = arith.constant 0 : index
    %68 = vector.load %arg11[%c1_84, %c1_85, %c0_86] : memref<18x24x128xf32, #tpu.memory_space<vmem>>, vector<16x16x128xf32>
    tpu.vector_store %arg11[%c1_84, %c1_85, %c0_86], %67 {strides = array<i32>} : memref<18x24x128xf32, #tpu.memory_space<vmem>>, vector<16x16x128xf32>,
    %cst_87 = arith.constant 0.000000e+00 : f32
    %69 = vector.broadcast %cst_87 : f32 to vector<16x16xf32>
    %c0_88 = arith.constant 0 : index
    %c0_89 = arith.constant 0 : index
    %c0_90 = arith.constant 0 : index
    %70 = vector.load %arg11[%c0_88, %c0_89, %c0_90] : memref<18x24x128xf32, #tpu.memory_space<vmem>>, vector<16x16x128xf32>
    %c0_91 = arith.constant 0 : index
    %c0_92 = arith.constant 0 : index
    %71 = vector.load %arg6[%c0_91, %c0_92] : memref<9x128xf32, #tpu.memory_space<vmem>>, vector<1x128xf32>
    %72 = vector.shape_cast %71 : vector<1x128xf32> to vector<1x1x128xf32>
    %73 = vector.broadcast %72 : vector<1x1x128xf32> to vector<16x16x128xf32>
    %74 = arith.mulf %70, %73 : vector<16x16x128xf32>
    %cst_93 = arith.constant dense<0.000000e+00> : vector<16x16xf32>
    %75 = vector.multi_reduction <add>, %74, %cst_93 [2] : vector<16x16x128xf32> to vector<16x16xf32>
    %76 = arith.addf %69, %75 : vector<16x16xf32>
    %c0_94 = arith.constant 0 : index
    %c1_95 = arith.constant 1 : index
    %c0_96 = arith.constant 0 : index
    %77 = vector.load %arg11[%c0_94, %c1_95, %c0_96] : memref<18x24x128xf32, #tpu.memory_space<vmem>>, vector<16x16x128xf32>
    %c1_97 = arith.constant 1 : index
    %c0_98 = arith.constant 0 : index
    %78 = vector.load %arg6[%c1_97, %c0_98] : memref<9x128xf32, #tpu.memory_space<vmem>>, vector<1x128xf32>
    %79 = vector.shape_cast %78 : vector<1x128xf32> to vector<1x1x128xf32>
    %80 = vector.broadcast %79 : vector<1x1x128xf32> to vector<16x16x128xf32>
    %81 = arith.mulf %77, %80 : vector<16x16x128xf32>
    %cst_99 = arith.constant dense<0.000000e+00> : vector<16x16xf32>
    %82 = vector.multi_reduction <add>, %81, %cst_99 [2] : vector<16x16x128xf32> to vector<16x16xf32>
    %83 = arith.addf %76, %82 : vector<16x16xf32>
    %c0_100 = arith.constant 0 : index
    %c2_101 = arith.constant 2 : index
    %c0_102 = arith.constant 0 : index
    %84 = vector.load %arg11[%c0_100, %c2_101, %c0_102] : memref<18x24x128xf32, #tpu.memory_space<vmem>>, vector<16x16x128xf32>
    %c2_103 = arith.constant 2 : index
    %c0_104 = arith.constant 0 : index
    %85 = vector.load %arg6[%c2_103, %c0_104] : memref<9x128xf32, #tpu.memory_space<vmem>>, vector<1x128xf32>
    %86 = vector.shape_cast %85 : vector<1x128xf32> to vector<1x1x128xf32>
    %87 = vector.broadcast %86 : vector<1x1x128xf32> to vector<16x16x128xf32>
    %88 = arith.mulf %84, %87 : vector<16x16x128xf32>
    %cst_105 = arith.constant dense<0.000000e+00> : vector<16x16xf32>
    %89 = vector.multi_reduction <add>, %88, %cst_105 [2] : vector<16x16x128xf32> to vector<16x16xf32>
    %90 = arith.addf %83, %89 : vector<16x16xf32>
    %c1_106 = arith.constant 1 : index
    %c0_107 = arith.constant 0 : index
    %c0_108 = arith.constant 0 : index
    %91 = vector.load %arg11[%c1_106, %c0_107, %c0_108] : memref<18x24x128xf32, #tpu.memory_space<vmem>>, vector<16x16x128xf32>
    %c3 = arith.constant 3 : index
    %c0_109 = arith.constant 0 : index
    %92 = vector.load %arg6[%c3, %c0_109] : memref<9x128xf32, #tpu.memory_space<vmem>>, vector<1x128xf32>
    %93 = vector.shape_cast %92 : vector<1x128xf32> to vector<1x1x128xf32>
    %94 = vector.broadcast %93 : vector<1x1x128xf32> to vector<16x16x128xf32>
    %95 = arith.mulf %91, %94 : vector<16x16x128xf32>
    %cst_110 = arith.constant dense<0.000000e+00> : vector<16x16xf32>
    %96 = vector.multi_reduction <add>, %95, %cst_110 [2] : vector<16x16x128xf32> to vector<16x16xf32>
    %97 = arith.addf %90, %96 : vector<16x16xf32>
    %c1_111 = arith.constant 1 : index
    %c1_112 = arith.constant 1 : index
    %c0_113 = arith.constant 0 : index
    %98 = vector.load %arg11[%c1_111, %c1_112, %c0_113] : memref<18x24x128xf32, #tpu.memory_space<vmem>>, vector<16x16x128xf32>
    %c4 = arith.constant 4 : index
    %c0_114 = arith.constant 0 : index
    %99 = vector.load %arg6[%c4, %c0_114] : memref<9x128xf32, #tpu.memory_space<vmem>>, vector<1x128xf32>
    %100 = vector.shape_cast %99 : vector<1x128xf32> to vector<1x1x128xf32>
    %101 = vector.broadcast %100 : vector<1x1x128xf32> to vector<16x16x128xf32>
    %102 = arith.mulf %98, %101 : vector<16x16x128xf32>
    %cst_115 = arith.constant dense<0.000000e+00> : vector<16x16xf32>
    %103 = vector.multi_reduction <add>, %102, %cst_115 [2] : vector<16x16x128xf32> to vector<16x16xf32>
    %104 = arith.addf %97, %103 : vector<16x16xf32>
    %c1_116 = arith.constant 1 : index
    %c2_117 = arith.constant 2 : index
    %c0_118 = arith.constant 0 : index
    %105 = vector.load %arg11[%c1_116, %c2_117, %c0_118] : memref<18x24x128xf32, #tpu.memory_space<vmem>>, vector<16x16x128xf32>
    %c5 = arith.constant 5 : index
    %c0_119 = arith.constant 0 : index
    %106 = vector.load %arg6[%c5, %c0_119] : memref<9x128xf32, #tpu.memory_space<vmem>>, vector<1x128xf32>
    %107 = vector.shape_cast %106 : vector<1x128xf32> to vector<1x1x128xf32>
    %108 = vector.broadcast %107 : vector<1x1x128xf32> to vector<16x16x128xf32>
    %109 = arith.mulf %105, %108 : vector<16x16x128xf32>
    %cst_120 = arith.constant dense<0.000000e+00> : vector<16x16xf32>
    %110 = vector.multi_reduction <add>, %109, %cst_120 [2] : vector<16x16x128xf32> to vector<16x16xf32>
    %111 = arith.addf %104, %110 : vector<16x16xf32>
    %c2_121 = arith.constant 2 : index
    %c0_122 = arith.constant 0 : index
    %c0_123 = arith.constant 0 : index
    %112 = vector.load %arg11[%c2_121, %c0_122, %c0_123] : memref<18x24x128xf32, #tpu.memory_space<vmem>>, vector<16x16x128xf32>
    %c6 = arith.constant 6 : index
    %c0_124 = arith.constant 0 : index
    %113 = vector.load %arg6[%c6, %c0_124] : memref<9x128xf32, #tpu.memory_space<vmem>>, vector<1x128xf32>
    %114 = vector.shape_cast %113 : vector<1x128xf32> to vector<1x1x128xf32>
    %115 = vector.broadcast %114 : vector<1x1x128xf32> to vector<16x16x128xf32>
    %116 = arith.mulf %112, %115 : vector<16x16x128xf32>
    %cst_125 = arith.constant dense<0.000000e+00> : vector<16x16xf32>
    %117 = vector.multi_reduction <add>, %116, %cst_125 [2] : vector<16x16x128xf32> to vector<16x16xf32>
    %118 = arith.addf %111, %117 : vector<16x16xf32>
    %c2_126 = arith.constant 2 : index
    %c1_127 = arith.constant 1 : index
    %c0_128 = arith.constant 0 : index
    %119 = vector.load %arg11[%c2_126, %c1_127, %c0_128] : memref<18x24x128xf32, #tpu.memory_space<vmem>>, vector<16x16x128xf32>
    %c7 = arith.constant 7 : index
    %c0_129 = arith.constant 0 : index
    %120 = vector.load %arg6[%c7, %c0_129] : memref<9x128xf32, #tpu.memory_space<vmem>>, vector<1x128xf32>
    %121 = vector.shape_cast %120 : vector<1x128xf32> to vector<1x1x128xf32>
    %122 = vector.broadcast %121 : vector<1x1x128xf32> to vector<16x16x128xf32>
    %123 = arith.mulf %119, %122 : vector<16x16x128xf32>
    %cst_130 = arith.constant dense<0.000000e+00> : vector<16x16xf32>
    %124 = vector.multi_reduction <add>, %123, %cst_130 [2] : vector<16x16x128xf32> to vector<16x16xf32>
    %125 = arith.addf %118, %124 : vector<16x16xf32>
    %c2_131 = arith.constant 2 : index
    %c2_132 = arith.constant 2 : index
    %c0_133 = arith.constant 0 : index
    %126 = vector.load %arg11[%c2_131, %c2_132, %c0_133] : memref<18x24x128xf32, #tpu.memory_space<vmem>>, vector<16x16x128xf32>
    %c8 = arith.constant 8 : index
    %c0_134 = arith.constant 0 : index
    %127 = vector.load %arg6[%c8, %c0_134] : memref<9x128xf32, #tpu.memory_space<vmem>>, vector<1x128xf32>
    %128 = vector.shape_cast %127 : vector<1x128xf32> to vector<1x1x128xf32>
    %129 = vector.broadcast %128 : vector<1x1x128xf32> to vector<16x16x128xf32>
    %130 = arith.mulf %126, %129 : vector<16x16x128xf32>
    %cst_135 = arith.constant dense<0.000000e+00> : vector<16x16xf32>
    %131 = vector.multi_reduction <add>, %130, %cst_135 [2] : vector<16x16x128xf32> to vector<16x16xf32>
    %132 = arith.addf %125, %131 : vector<16x16xf32>
    %c0_136 = arith.constant 0 : index
    %c0_137 = arith.constant 0 : index
    %133 = vector.load %arg7[%c0_136, %c0_137] : memref<1x1xf32, #tpu.memory_space<vmem>>, vector<1x1xf32>
    %134 = vector.broadcast %133 : vector<1x1xf32> to vector<16x16xf32>
    %135 = arith.addf %132, %134 : vector<16x16xf32>
    %cst_138 = arith.constant 0.000000e+00 : f32
    %136 = vector.broadcast %cst_138 : f32 to vector<16x16xf32>
    %137 = arith.subf %136, %135 : vector<16x16xf32>
    %138 = math.exp %137 : vector<16x16xf32>
    %cst_139 = arith.constant 1.000000e+00 : f32
    %139 = vector.broadcast %cst_139 : f32 to vector<16x16xf32>
    %140 = arith.addf %139, %138 : vector<16x16xf32>
    %cst_140 = arith.constant 1.000000e+00 : f32
    %141 = vector.broadcast %cst_140 : f32 to vector<16x16xf32>
    %142 = arith.divf %141, %140 : vector<16x16xf32>
    %143 = vector.shape_cast %142 : vector<16x16xf32> to vector<1x16x16xf32>
    %c0_141 = arith.constant 0 : index
    %c0_142 = arith.constant 0 : index
    %c0_143 = arith.constant 0 : index
    %144 = vector.load %arg8[%c0_141, %c0_142, %c0_143] : memref<1x16x16xf32, #tpu.memory_space<vmem>>, vector<1x16x16xf32>
    tpu.vector_store %arg8[%c0_141, %c0_142, %c0_143], %143 {strides = array<i32>} : memref<1x16x16xf32, #tpu.memory_space<vmem>>, vector<1x16x16xf32>,
    return
  }
  func.func @transform_0(%arg0: i32) -> (i32, i32, i32, i32) {
    %c0_i32 = arith.constant 0 : i32
    %c0_i32_0 = arith.constant 0 : i32
    %c0_i32_1 = arith.constant 0 : i32
    %c0_i32_2 = arith.constant 0 : i32
    return %arg0, %c0_i32, %c0_i32_0, %c0_i32_1 : i32, i32, i32, i32
  }
  func.func @transform_1(%arg0: i32) -> (i32, i32) {
    %c0_i32 = arith.constant 0 : i32
    %c0_i32_0 = arith.constant 0 : i32
    %c0_i32_1 = arith.constant 0 : i32
    return %c0_i32, %c0_i32_0 : i32, i32
  }
  func.func @transform_2(%arg0: i32) -> (i32, i32) {
    %c0_i32 = arith.constant 0 : i32
    %c0_i32_0 = arith.constant 0 : i32
    %c0_i32_1 = arith.constant 0 : i32
    return %c0_i32, %c0_i32_0 : i32, i32
  }
  func.func @transform_3(%arg0: i32) -> (i32, i32) {
    %c0_i32 = arith.constant 0 : i32
    %c0_i32_0 = arith.constant 0 : i32
    %c0_i32_1 = arith.constant 0 : i32
    return %c0_i32, %c0_i32_0 : i32, i32
  }
  func.func @transform_4(%arg0: i32) -> (i32, i32) {
    %c0_i32 = arith.constant 0 : i32
    %c0_i32_0 = arith.constant 0 : i32
    %c0_i32_1 = arith.constant 0 : i32
    return %c0_i32, %c0_i32_0 : i32, i32
  }
  func.func @transform_5(%arg0: i32) -> (i32, i32) {
    %c0_i32 = arith.constant 0 : i32
    %c0_i32_0 = arith.constant 0 : i32
    %c0_i32_1 = arith.constant 0 : i32
    return %c0_i32, %c0_i32_0 : i32, i32
  }
  func.func @transform_6(%arg0: i32) -> (i32, i32) {
    %c0_i32 = arith.constant 0 : i32
    %c0_i32_0 = arith.constant 0 : i32
    %c0_i32_1 = arith.constant 0 : i32
    return %c0_i32, %c0_i32_0 : i32, i32
  }
  func.func @transform_7(%arg0: i32) -> (i32, i32, i32) {
    %c0_i32 = arith.constant 0 : i32
    %c0_i32_0 = arith.constant 0 : i32
    %c0_i32_1 = arith.constant 0 : i32
    return %arg0, %c0_i32, %c0_i32_0 : i32, i32, i32
  }
}

</mosaic_0001>

<llo_original>
// kernel: discriminator_forward.1
$region0: #{discriminator_forward.1}
  #allocation0 [shape = 'u32[]', space=smem, size = 0x4, offset = 0x4, fixed_abs, tag = 'smem constant byte address 0x4 - core index']
  #allocation1 [shape = 'u32[144,128]{1,0:T(1,128)}', space=vmem, size = 0x12000, scoped, tag = 'internal scratch']
  #allocation2 [shape = 'f32[18,24,4]{2,1,0:T(8,128)}', space=vmem, size = 0x36000, scoped, tag = 'scratch operand']
  #allocation3 [shape = 'f32[18,24,64]{2,1,0:T(8,128)}', space=vmem, size = 0x36000, scoped, tag = 'scratch operand']
  #allocation4 [shape = 'f32[18,24,128]{2,1,0:T(8,128)}', space=vmem, size = 0x36000, scoped, tag = 'scratch operand']
  #allocation5 [shape = 'f32[1,1]{1,0:T(1,128)S(1)}', space=vmem, size = 0x200, scoped, tag = 'scoped memory for discriminator_forward.1']
  %s0 = inlined_call_operand.vmem [shape: f32[2,16,16,4], index: 0, kind: input, shape index: {}]
  %s1 = inlined_call_operand.vmem [shape: bf16[36,64], index: 1, kind: input, shape index: {}]
  %s2 = inlined_call_operand.vmem [shape: f32[1,64], index: 2, kind: input, shape index: {}]
  %s3 = inlined_call_operand.vmem [shape: bf16[576,128], index: 3, kind: input, shape index: {}]
  %s4 = inlined_call_operand.vmem [shape: f32[1,128], index: 4, kind: input, shape index: {}]
  %s5 = inlined_call_operand.vmem [shape: f32[9,128], index: 5, kind: input, shape index: {}]
  %s6 = inlined_call_operand.<no memory space> [shape: f32[1,1], index: 6, kind: input, shape index: {}]
  %s7 = inlined_call_operand.hbm [shape: f32[2,16,16], index: 7, kind: output, shape index: {}]
  %s8 = sld [smem:[#allocation0]]
  $region61: #{discriminator_forward.1} parent=0
    _
  %s10 = ssub.s32 1, %s8
  %s11 = scalar_select 0, %s10, %s8
  %v12 = vstv %s6
  %13 = vst [vmem:[#allocation5] sm:$0x1] %v12
  $region1: #{discriminator_forward.1} parent=0
    #allocation6 [shape = 'u8[16384]{0}', space=vmem, size = 0x4000, scoped, tag = 'output window, operand 0']
    #allocation7 [shape = 's32[2]{0}', space=sflag, size = 0x8, scoped, tag = 'scoped memory for discriminator_forward.1']
    %14 = vsyncpa [#allocation7], 0
    %s15 = scalar_lea.sflag [#allocation7], 1
    %16 = vsyncpa %s15, 0
    loop: start=0, step=1, limit=4
    $region2: #{discriminator_forward.1} parent=1 // loop_pre_header
      _
    $region3: #{discriminator_forward.1} parent=1 // loop_header
      %s18 = sphi 0, %s22
      %p19 = scmp.ge.s32.totalorder %s18, 4
      %s28 = sphi 0, %s30
      %s31 = sphi 0, %s28
      %s32 = sphi 0, %s31
      %s48 = sphi 0, %s32
      %s52 = sphi 0, %s52
      %s54 = sphi 0, %s52
      %s55 = sphi 0, %s54
      %s69 = sphi 0, %s55
      %s73 = sphi 0, %s73
      %s75 = sphi 0, %s73
      %s76 = sphi 0, %s75
      %s90 = sphi 0, %s76
      %s94 = sphi 0, %s94
      %s96 = sphi 0, %s94
      %s97 = sphi 0, %s96
      %s111 = sphi 0, %s97
      %s115 = sphi 0, %s115
      %s117 = sphi 0, %s115
      %s118 = sphi 0, %s117
      %s132 = sphi 0, %s118
      %s136 = sphi 0, %s136
      %s138 = sphi 0, %s136
      %s139 = sphi 0, %s138
      %s153 = sphi 0, %s139
      %s157 = sphi 0, %s157
      %s159 = sphi 0, %s157
      %s160 = sphi 0, %s159
      %s174 = sphi 0, %s160
      %s180 = sphi 0, %s182
      %s183 = sphi 0, %s180
      %s184 = sphi 0, %s183
      %s200 = sphi 0, %s184
    $region4: #{discriminator_forward.1} parent=1 // loop_header_branch
      %21 = sbr.rel (%p19) target = $region8
    $region5: #{discriminator_forward.1} parent=1 // loop_body
      %s23 = ssub.s32 %s18, 1
      %s24 = ssub.s32 %s18, 2
      %s25 = sadd.s32 %s18, 1
      %s26 = ssub.s32 %s18, %s25
      %p27 = scmp.eq.s32.totalorder %s26, 0
      %s29 = sadd.s32 %s28, 1
      %s30 = scalar_select %p27, %s28, %s29
      %p33 = pneg %p27
      %p34 = scmp.eq.s32.totalorder %s18, 1
      %p35 = por %p33, %p34
      %p36 = scmp.ne.s32.totalorder %s28, %s31
      %p37 = scmp.eq.s32.totalorder %s18, 0
      %p38 = por %p36, %p37
      %p39 = scmp.ne.s32.totalorder %s28, %s31
      %p40 = scmp.eq.s32.totalorder %s23, 1
      %p41 = por %p39, %p40
      %p42 = scmp.ne.s32.totalorder %s31, %s32
      %p43 = scmp.eq.s32.totalorder %s23, 0
      %p44 = por %p42, %p43
      %p45 = scmp.ne.s32.totalorder %s31, %s32
      %p46 = scmp.eq.s32.totalorder %s24, 1
      %p47 = por %p45, %p46
      %p49 = scmp.ne.s32.totalorder %s32, %s48
      %p50 = scmp.eq.s32.totalorder %s24, 0
      %p51 = por %p49, %p50
      %s53 = sadd.s32 %s52, 1
      %p56 = scmp.eq.s32.totalorder %s18, 1
      %p57 = scmp.ne.s32.totalorder %s52, %s54
      %p58 = scmp.eq.s32.totalorder %s18, 0
      %p59 = por %p57, %p58
      %p60 = scmp.ne.s32.totalorder %s52, %s54
      %p61 = scmp.eq.s32.totalorder %s23, 1
      %p62 = por %p60, %p61
      %p63 = scmp.ne.s32.totalorder %s54, %s55
      %p64 = scmp.eq.s32.totalorder %s23, 0
      %p65 = por %p63, %p64
      %p66 = scmp.ne.s32.totalorder %s54, %s55
      %p67 = scmp.eq.s32.totalorder %s24, 1
      %p68 = por %p66, %p67
      %p70 = scmp.ne.s32.totalorder %s55, %s69
      %p71 = scmp.eq.s32.totalorder %s24, 0
      %p72 = por %p70, %p71
      %s74 = sadd.s32 %s73, 1
      %p77 = scmp.eq.s32.totalorder %s18, 1
      %p78 = scmp.ne.s32.totalorder %s73, %s75
      %p79 = scmp.eq.s32.totalorder %s18, 0
      %p80 = por %p78, %p79
      %p81 = scmp.ne.s32.totalorder %s73, %s75
      %p82 = scmp.eq.s32.totalorder %s23, 1
      %p83 = por %p81, %p82
      %p84 = scmp.ne.s32.totalorder %s75, %s76
      %p85 = scmp.eq.s32.totalorder %s23, 0
      %p86 = por %p84, %p85
      %p87 = scmp.ne.s32.totalorder %s75, %s76
      %p88 = scmp.eq.s32.totalorder %s24, 1
      %p89 = por %p87, %p88
      %p91 = scmp.ne.s32.totalorder %s76, %s90
      %p92 = scmp.eq.s32.totalorder %s24, 0
      %p93 = por %p91, %p92
      %s95 = sadd.s32 %s94, 1
      %p98 = scmp.eq.s32.totalorder %s18, 1
      %p99 = scmp.ne.s32.totalorder %s94, %s96
      %p100 = scmp.eq.s32.totalorder %s18, 0
      %p101 = por %p99, %p100
      %p102 = scmp.ne.s32.totalorder %s94, %s96
      %p103 = scmp.eq.s32.totalorder %s23, 1
      %p104 = por %p102, %p103
      %p105 = scmp.ne.s32.totalorder %s96, %s97
      %p106 = scmp.eq.s32.totalorder %s23, 0
      %p107 = por %p105, %p106
      %p108 = scmp.ne.s32.totalorder %s96, %s97
      %p109 = scmp.eq.s32.totalorder %s24, 1
      %p110 = por %p108, %p109
      %p112 = scmp.ne.s32.totalorder %s97, %s111
      %p113 = scmp.eq.s32.totalorder %s24, 0
      %p114 = por %p112, %p113
      %s116 = sadd.s32 %s115, 1
      %p119 = scmp.eq.s32.totalorder %s18, 1
      %p120 = scmp.ne.s32.totalorder %s115, %s117
      %p121 = scmp.eq.s32.totalorder %s18, 0
      %p122 = por %p120, %p121
      %p123 = scmp.ne.s32.totalorder %s115, %s117
      %p124 = scmp.eq.s32.totalorder %s23, 1
      %p125 = por %p123, %p124
      %p126 = scmp.ne.s32.totalorder %s117, %s118
      %p127 = scmp.eq.s32.totalorder %s23, 0
      %p128 = por %p126, %p127
      %p129 = scmp.ne.s32.totalorder %s117, %s118
      %p130 = scmp.eq.s32.totalorder %s24, 1
      %p131 = por %p129, %p130
      %p133 = scmp.ne.s32.totalorder %s118, %s132
      %p134 = scmp.eq.s32.totalorder %s24, 0
      %p135 = por %p133, %p134
      %s137 = sadd.s32 %s136, 1
      %p140 = scmp.eq.s32.totalorder %s18, 1
      %p141 = scmp.ne.s32.totalorder %s136, %s138
      %p142 = scmp.eq.s32.totalorder %s18, 0
      %p143 = por %p141, %p142
      %p144 = scmp.ne.s32.totalorder %s136, %s138
      %p145 = scmp.eq.s32.totalorder %s23, 1
      %p146 = por %p144, %p145
      %p147 = scmp.ne.s32.totalorder %s138, %s139
      %p148 = scmp.eq.s32.totalorder %s23, 0
      %p149 = por %p147, %p148
      %p150 = scmp.ne.s32.totalorder %s138, %s139
      %p151 = scmp.eq.s32.totalorder %s24, 1
      %p152 = por %p150, %p151
      %p154 = scmp.ne.s32.totalorder %s139, %s153
      %p155 = scmp.eq.s32.totalorder %s24, 0
      %p156 = por %p154, %p155
      %s158 = sadd.s32 %s157, 1
      %p161 = scmp.eq.s32.totalorder %s18, 1
      %p162 = scmp.ne.s32.totalorder %s157, %s159
      %p163 = scmp.eq.s32.totalorder %s18, 0
      %p164 = por %p162, %p163
      %p165 = scmp.ne.s32.totalorder %s157, %s159
      %p166 = scmp.eq.s32.totalorder %s23, 1
      %p167 = por %p165, %p166
      %p168 = scmp.ne.s32.totalorder %s159, %s160
      %p169 = scmp.eq.s32.totalorder %s23, 0
      %p170 = por %p168, %p169
      %p171 = scmp.ne.s32.totalorder %s159, %s160
      %p172 = scmp.eq.s32.totalorder %s24, 1
      %p173 = por %p171, %p172
      %p175 = scmp.ne.s32.totalorder %s160, %s174
      %p176 = scmp.eq.s32.totalorder %s24, 0
      %p177 = por %p175, %p176
      %s178 = ssub.s32 %s18, %s25
      %p179 = scmp.eq.s32.totalorder %s178, 0
      %s181 = sadd.s32 %s180, 1
      %s182 = scalar_select %p179, %s180, %s181
      %p185 = pneg %p179
      %p186 = scmp.eq.s32.totalorder %s18, 1
      %p187 = por %p185, %p186
      %p188 = scmp.ne.s32.totalorder %s180, %s183
      %p189 = scmp.eq.s32.totalorder %s18, 0
      %p190 = por %p188, %p189
      %p191 = scmp.ne.s32.totalorder %s180, %s183
      %p192 = scmp.eq.s32.totalorder %s23, 1
      %p193 = por %p191, %p192
      %p194 = scmp.ne.s32.totalorder %s183, %s184
      %p195 = scmp.eq.s32.totalorder %s23, 0
      %p196 = por %p194, %p195
      %p197 = scmp.ne.s32.totalorder %s183, %s184
      %p198 = scmp.eq.s32.totalorder %s24, 1
      %p199 = por %p197, %p198
      %p201 = scmp.ne.s32.totalorder %s184, %s200
      %p202 = scmp.eq.s32.totalorder %s24, 0
      %p203 = por %p201, %p202
      %p204 = scmp.le.s32.totalorder 1, %s18
      %p205 = scmp.lt.s32.totalorder %s18, 3
      %p206 = pnand %p204, %p205
      %p207 = pneg %p206
      // Predicated region
      $region9: #{discriminator_forward.1} parent=5 // pred_check
        _
      $region10: #{discriminator_forward.1} parent=5 // pred_check_branch
        %209 = sbr.rel (%p206) target = $region12
      $region11: #{discriminator_forward.1} parent=5 // pred_region
        %s210 = ssub.s32 %s18, 1
        // Predicated region
        $region13: #{discriminator_forward.1} parent=11 // pred_check
          %p211 = pneg %p65
        $region14: #{discriminator_forward.1} parent=11 // pred_check_branch
          %213 = sbr.rel (%p211) target = $region16
        $region15: #{discriminator_forward.1} parent=11 // pred_region
          _
        $region16: #{discriminator_forward.1} parent=11 // pred_fallthru
          _
        // Predicated region
        $region17: #{discriminator_forward.1} parent=11 // pred_check
          %p214 = pneg %p86
        $region18: #{discriminator_forward.1} parent=11 // pred_check_branch
          %216 = sbr.rel (%p214) target = $region20
        $region19: #{discriminator_forward.1} parent=11 // pred_region
          _
        $region20: #{discriminator_forward.1} parent=11 // pred_fallthru
          _
        // Predicated region
        $region21: #{discriminator_forward.1} parent=11 // pred_check
          %p217 = pneg %p107
        $region22: #{discriminator_forward.1} parent=11 // pred_check_branch
          %219 = sbr.rel (%p217) target = $region24
        $region23: #{discriminator_forward.1} parent=11 // pred_region
          _
        $region24: #{discriminator_forward.1} parent=11 // pred_fallthru
          _
        // Predicated region
        $region25: #{discriminator_forward.1} parent=11 // pred_check
          %p220 = pneg %p128
        $region26: #{discriminator_forward.1} parent=11 // pred_check_branch
          %222 = sbr.rel (%p220) target = $region28
        $region27: #{discriminator_forward.1} parent=11 // pred_region
          _
        $region28: #{discriminator_forward.1} parent=11 // pred_fallthru
          _
        // Predicated region
        $region29: #{discriminator_forward.1} parent=11 // pred_check
          %p223 = pneg %p149
        $region30: #{discriminator_forward.1} parent=11 // pred_check_branch
          %225 = sbr.rel (%p223) target = $region32
        $region31: #{discriminator_forward.1} parent=11 // pred_region
          _
        $region32: #{discriminator_forward.1} parent=11 // pred_fallthru
          _
        // Predicated region
        $region33: #{discriminator_forward.1} parent=11 // pred_check
          %p226 = pneg %p170
        $region34: #{discriminator_forward.1} parent=11 // pred_check_branch
          %228 = sbr.rel (%p226) target = $region36
        $region35: #{discriminator_forward.1} parent=11 // pred_region
          _
        $region36: #{discriminator_forward.1} parent=11 // pred_fallthru
          _
      $region12: #{discriminator_forward.1} parent=5 // pred_fallthru
        _
      %p229 = scmp.lt.s32.totalorder %s18, 2
      // Predicated region
      $region37: #{discriminator_forward.1} parent=5 // pred_check
        %p230 = pneg %p229
      $region38: #{discriminator_forward.1} parent=5 // pred_check_branch
        %232 = sbr.rel (%p230) target = $region40
      $region39: #{discriminator_forward.1} parent=5 // pred_region
        // Predicated region
        $region41: #{discriminator_forward.1} parent=39 // pred_check
          %p233 = pneg %p38
        $region42: #{discriminator_forward.1} parent=39 // pred_check_branch
          %235 = sbr.rel (%p233) target = $region44
        $region43: #{discriminator_forward.1} parent=39 // pred_region
          %p236 = scmp.lt.s32.totalorder %s18, 1
          %s237 = scalar_select %p236, %s18, 1
          %s238 = smul.addr %s237, 32
          %s239 = smul.addr %s238, 8
          %s240 = scalar_lea.vmem %s0, %s239
        $region44: #{discriminator_forward.1} parent=39 // pred_fallthru
          _
      $region40: #{discriminator_forward.1} parent=5 // pred_fallthru
        _
      %p241 = scmp.le.s32.totalorder 1, %s18
      %p242 = scmp.lt.s32.totalorder %s18, 3
      %p243 = pnand %p241, %p242
      %p244 = pneg %p243
      // Predicated region
      $region45: #{discriminator_forward.1} parent=5 // pred_check
        _
      $region46: #{discriminator_forward.1} parent=5 // pred_check_branch
        %246 = sbr.rel (%p243) target = $region48
      $region47: #{discriminator_forward.1} parent=5 // pred_region
        %s247 = ssub.s32 %s18, 1
        %p248 = scmp.lt.s32.totalorder %s23, 1
        %s249 = scalar_select %p248, %s23, 1
        %s250 = smul.addr %s249, 32
        %s251 = smul.addr %s250, 8
        %s252 = scalar_lea.vmem %s0, %s251
        %p253 = pneg %p44
        %p254 = pneg %p41
        %p255 = pneg %p65
        %p256 = pneg %p62
        %p257 = pneg %p86
        %p258 = pneg %p83
        %p259 = pneg %p107
        %p260 = pneg %p104
        %p261 = pneg %p128
        %p262 = pneg %p125
        %p263 = pneg %p149
        %p264 = pneg %p146
        %p265 = pneg %p170
        %p266 = pneg %p167
        %p267 = pneg %p196
        %p268 = pneg %p193
        %s269 = sand.u32 %s183, 1
        %s270 = scalar_lea.sflag [#allocation7], %s269
        %s271 = sand.u32 %s183, 1
        %s272 = smul.addr %s271, 16
        %s273 = scalar_lea.vmem [#allocation6], %s272
        %p274 = scmp.lt.s32.totalorder %s23, 1
        %s275 = scalar_select %p274, %s23, 1
        %s276 = smul.addr %s275, 32
        %s277 = smul.addr %s276, 8
        %s278 = scalar_lea.vmem %s0, %s277
        %vm280 = vcmask 31744
        %281 = vst.msk [vmem:[#allocation2] sm:$0xff] %vm280, 0.0
        %282 = vst.msk [vmem:[#allocation2 + $0x8] sm:$0xff] %vm280, 0.0
        %283 = vst.msk [vmem:[#allocation2 + $0x10] sm:$0xff] %vm280, 0.0
        %284 = vst.msk [vmem:[#allocation2 + $0x18] sm:$0xff] %vm280, 0.0
        %285 = vst.msk [vmem:[#allocation2 + $0x20] sm:$0xff] %vm280, 0.0
        %286 = vst.msk [vmem:[#allocation2 + $0x28] sm:$0xff] %vm280, 0.0
        %287 = vst.msk [vmem:[#allocation2 + $0x30] sm:$0xff] %vm280, 0.0
        %288 = vst.msk [vmem:[#allocation2 + $0x38] sm:$0xff] %vm280, 0.0
        %289 = vst.msk [vmem:[#allocation2 + $0x40] sm:$0xff] %vm280, 0.0
        %290 = vst.msk [vmem:[#allocation2 + $0x48] sm:$0xff] %vm280, 0.0
        %291 = vst.msk [vmem:[#allocation2 + $0x50] sm:$0xff] %vm280, 0.0
        %292 = vst.msk [vmem:[#allocation2 + $0x58] sm:$0xff] %vm280, 0.0
        %293 = vst.msk [vmem:[#allocation2 + $0x60] sm:$0xff] %vm280, 0.0
        %294 = vst.msk [vmem:[#allocation2 + $0x68] sm:$0xff] %vm280, 0.0
        %295 = vst.msk [vmem:[#allocation2 + $0x70] sm:$0xff] %vm280, 0.0
        %296 = vst.msk [vmem:[#allocation2 + $0x78] sm:$0xff] %vm280, 0.0
        %297 = vst.msk [vmem:[#allocation2 + $0x80] sm:$0xff] %vm280, 0.0
        %298 = vst.msk [vmem:[#allocation2 + $0x88] sm:$0xff] %vm280, 0.0
        %299 = vst.msk [vmem:[#allocation2 + $0x90] sm:$0xff] %vm280, 0.0
        %300 = vst.msk [vmem:[#allocation2 + $0x98] sm:$0xff] %vm280, 0.0
        %301 = vst.msk [vmem:[#allocation2 + $0xa0] sm:$0xff] %vm280, 0.0
        %302 = vst.msk [vmem:[#allocation2 + $0xa8] sm:$0xff] %vm280, 0.0
        %303 = vst.msk [vmem:[#allocation2 + $0xb0] sm:$0xff] %vm280, 0.0
        %304 = vst.msk [vmem:[#allocation2 + $0xb8] sm:$0xff] %vm280, 0.0
        %305 = vst.msk [vmem:[#allocation2 + $0xc0] sm:$0xff] %vm280, 0.0
        %306 = vst.msk [vmem:[#allocation2 + $0xc8] sm:$0xff] %vm280, 0.0
        %307 = vst.msk [vmem:[#allocation2 + $0xd0] sm:$0xff] %vm280, 0.0
        %308 = vst.msk [vmem:[#allocation2 + $0xd8] sm:$0xff] %vm280, 0.0
        %309 = vst.msk [vmem:[#allocation2 + $0xe0] sm:$0xff] %vm280, 0.0
        %310 = vst.msk [vmem:[#allocation2 + $0xe8] sm:$0xff] %vm280, 0.0
        %311 = vst.msk [vmem:[#allocation2 + $0xf0] sm:$0xff] %vm280, 0.0
        %312 = vst.msk [vmem:[#allocation2 + $0xf8] sm:$0xff] %vm280, 0.0
        %313 = vst.msk [vmem:[#allocation2 + $0x100] sm:$0xff] %vm280, 0.0
        %314 = vst.msk [vmem:[#allocation2 + $0x108] sm:$0xff] %vm280, 0.0
        %315 = vst.msk [vmem:[#allocation2 + $0x110] sm:$0xff] %vm280, 0.0
        %316 = vst.msk [vmem:[#allocation2 + $0x118] sm:$0xff] %vm280, 0.0
        %317 = vst.msk [vmem:[#allocation2 + $0x120] sm:$0xff] %vm280, 0.0
        %318 = vst.msk [vmem:[#allocation2 + $0x128] sm:$0xff] %vm280, 0.0
        %319 = vst.msk [vmem:[#allocation2 + $0x130] sm:$0xff] %vm280, 0.0
        %320 = vst.msk [vmem:[#allocation2 + $0x138] sm:$0xff] %vm280, 0.0
        %321 = vst.msk [vmem:[#allocation2 + $0x140] sm:$0xff] %vm280, 0.0
        %322 = vst.msk [vmem:[#allocation2 + $0x148] sm:$0xff] %vm280, 0.0
        %323 = vst.msk [vmem:[#allocation2 + $0x150] sm:$0xff] %vm280, 0.0
        %324 = vst.msk [vmem:[#allocation2 + $0x158] sm:$0xff] %vm280, 0.0
        %325 = vst.msk [vmem:[#allocation2 + $0x160] sm:$0xff] %vm280, 0.0
        %326 = vst.msk [vmem:[#allocation2 + $0x168] sm:$0xff] %vm280, 0.0
        %327 = vst.msk [vmem:[#allocation2 + $0x170] sm:$0xff] %vm280, 0.0
        %328 = vst.msk [vmem:[#allocation2 + $0x178] sm:$0xff] %vm280, 0.0
        %329 = vst.msk [vmem:[#allocation2 + $0x180] sm:$0xff] %vm280, 0.0
        %330 = vst.msk [vmem:[#allocation2 + $0x188] sm:$0xff] %vm280, 0.0
        %331 = vst.msk [vmem:[#allocation2 + $0x190] sm:$0xff] %vm280, 0.0
        %332 = vst.msk [vmem:[#allocation2 + $0x198] sm:$0xff] %vm280, 0.0
        %333 = vst.msk [vmem:[#allocation2 + $0x1a0] sm:$0xff] %vm280, 0.0
        %334 = vst.msk [vmem:[#allocation2 + $0x1a8] sm:$0xff] %vm280, 0.0
        %vm335 = vcmask 523264
        %336 = vst.msk [vmem:[#allocation3] sm:$0xff] %vm335, 0.0
        %337 = vst.msk [vmem:[#allocation3 + $0x8] sm:$0xff] %vm335, 0.0
        %338 = vst.msk [vmem:[#allocation3 + $0x10] sm:$0xff] %vm335, 0.0
        %339 = vst.msk [vmem:[#allocation3 + $0x18] sm:$0xff] %vm335, 0.0
        %340 = vst.msk [vmem:[#allocation3 + $0x20] sm:$0xff] %vm335, 0.0
        %341 = vst.msk [vmem:[#allocation3 + $0x28] sm:$0xff] %vm335, 0.0
        %342 = vst.msk [vmem:[#allocation3 + $0x30] sm:$0xff] %vm335, 0.0
        %343 = vst.msk [vmem:[#allocation3 + $0x38] sm:$0xff] %vm335, 0.0
        %344 = vst.msk [vmem:[#allocation3 + $0x40] sm:$0xff] %vm335, 0.0
        %345 = vst.msk [vmem:[#allocation3 + $0x48] sm:$0xff] %vm335, 0.0
        %346 = vst.msk [vmem:[#allocation3 + $0x50] sm:$0xff] %vm335, 0.0
        %347 = vst.msk [vmem:[#allocation3 + $0x58] sm:$0xff] %vm335, 0.0
        %348 = vst.msk [vmem:[#allocation3 + $0x60] sm:$0xff] %vm335, 0.0
        %349 = vst.msk [vmem:[#allocation3 + $0x68] sm:$0xff] %vm335, 0.0
        %350 = vst.msk [vmem:[#allocation3 + $0x70] sm:$0xff] %vm335, 0.0
        %351 = vst.msk [vmem:[#allocation3 + $0x78] sm:$0xff] %vm335, 0.0
        %352 = vst.msk [vmem:[#allocation3 + $0x80] sm:$0xff] %vm335, 0.0
        %353 = vst.msk [vmem:[#allocation3 + $0x88] sm:$0xff] %vm335, 0.0
        %354 = vst.msk [vmem:[#allocation3 + $0x90] sm:$0xff] %vm335, 0.0
        %355 = vst.msk [vmem:[#allocation3 + $0x98] sm:$0xff] %vm335, 0.0
        %356 = vst.msk [vmem:[#allocation3 + $0xa0] sm:$0xff] %vm335, 0.0
        %357 = vst.msk [vmem:[#allocation3 + $0xa8] sm:$0xff] %vm335, 0.0
        %358 = vst.msk [vmem:[#allocation3 + $0xb0] sm:$0xff] %vm335, 0.0
        %359 = vst.msk [vmem:[#allocation3 + $0xb8] sm:$0xff] %vm335, 0.0
        %360 = vst.msk [vmem:[#allocation3 + $0xc0] sm:$0xff] %vm335, 0.0
        %361 = vst.msk [vmem:[#allocation3 + $0xc8] sm:$0xff] %vm335, 0.0
        %362 = vst.msk [vmem:[#allocation3 + $0xd0] sm:$0xff] %vm335, 0.0
        %363 = vst.msk [vmem:[#allocation3 + $0xd8] sm:$0xff] %vm335, 0.0
        %364 = vst.msk [vmem:[#allocation3 + $0xe0] sm:$0xff] %vm335, 0.0
        %365 = vst.msk [vmem:[#allocation3 + $0xe8] sm:$0xff] %vm335, 0.0
        %366 = vst.msk [vmem:[#allocation3 + $0xf0] sm:$0xff] %vm335, 0.0
        %367 = vst.msk [vmem:[#allocation3 + $0xf8] sm:$0xff] %vm335, 0.0
        %368 = vst.msk [vmem:[#allocation3 + $0x100] sm:$0xff] %vm335, 0.0
        %369 = vst.msk [vmem:[#allocation3 + $0x108] sm:$0xff] %vm335, 0.0
        %370 = vst.msk [vmem:[#allocation3 + $0x110] sm:$0xff] %vm335, 0.0
        %371 = vst.msk [vmem:[#allocation3 + $0x118] sm:$0xff] %vm335, 0.0
        %372 = vst.msk [vmem:[#allocation3 + $0x120] sm:$0xff] %vm335, 0.0
        %373 = vst.msk [vmem:[#allocation3 + $0x128] sm:$0xff] %vm335, 0.0
        %374 = vst.msk [vmem:[#allocation3 + $0x130] sm:$0xff] %vm335, 0.0
        %375 = vst.msk [vmem:[#allocation3 + $0x138] sm:$0xff] %vm335, 0.0
        %376 = vst.msk [vmem:[#allocation3 + $0x140] sm:$0xff] %vm335, 0.0
        %377 = vst.msk [vmem:[#allocation3 + $0x148] sm:$0xff] %vm335, 0.0
        %378 = vst.msk [vmem:[#allocation3 + $0x150] sm:$0xff] %vm335, 0.0
        %379 = vst.msk [vmem:[#allocation3 + $0x158] sm:$0xff] %vm335, 0.0
        %380 = vst.msk [vmem:[#allocation3 + $0x160] sm:$0xff] %vm335, 0.0
        %381 = vst.msk [vmem:[#allocation3 + $0x168] sm:$0xff] %vm335, 0.0
        %382 = vst.msk [vmem:[#allocation3 + $0x170] sm:$0xff] %vm335, 0.0
        %383 = vst.msk [vmem:[#allocation3 + $0x178] sm:$0xff] %vm335, 0.0
        %384 = vst.msk [vmem:[#allocation3 + $0x180] sm:$0xff] %vm335, 0.0
        %385 = vst.msk [vmem:[#allocation3 + $0x188] sm:$0xff] %vm335, 0.0
        %386 = vst.msk [vmem:[#allocation3 + $0x190] sm:$0xff] %vm335, 0.0
        %387 = vst.msk [vmem:[#allocation3 + $0x198] sm:$0xff] %vm335, 0.0
        %388 = vst.msk [vmem:[#allocation3 + $0x1a0] sm:$0xff] %vm335, 0.0
        %389 = vst.msk [vmem:[#allocation3 + $0x1a8] sm:$0xff] %vm335, 0.0
        %390 = vst [vmem:[#allocation4] sm:$0xff] 0.0
        %391 = vst [vmem:[#allocation4 + $0x8] sm:$0xff] 0.0
        %392 = vst [vmem:[#allocation4 + $0x10] sm:$0xff] 0.0
        %393 = vst [vmem:[#allocation4 + $0x18] sm:$0xff] 0.0
        %394 = vst [vmem:[#allocation4 + $0x20] sm:$0xff] 0.0
        %395 = vst [vmem:[#allocation4 + $0x28] sm:$0xff] 0.0
        %396 = vst [vmem:[#allocation4 + $0x30] sm:$0xff] 0.0
        %397 = vst [vmem:[#allocation4 + $0x38] sm:$0xff] 0.0
        %398 = vst [vmem:[#allocation4 + $0x40] sm:$0xff] 0.0
        %399 = vst [vmem:[#allocation4 + $0x48] sm:$0xff] 0.0
        %400 = vst [vmem:[#allocation4 + $0x50] sm:$0xff] 0.0
        %401 = vst [vmem:[#allocation4 + $0x58] sm:$0xff] 0.0
        %402 = vst [vmem:[#allocation4 + $0x60] sm:$0xff] 0.0
        %403 = vst [vmem:[#allocation4 + $0x68] sm:$0xff] 0.0
        %404 = vst [vmem:[#allocation4 + $0x70] sm:$0xff] 0.0
        %405 = vst [vmem:[#allocation4 + $0x78] sm:$0xff] 0.0
        %406 = vst [vmem:[#allocation4 + $0x80] sm:$0xff] 0.0
        %407 = vst [vmem:[#allocation4 + $0x88] sm:$0xff] 0.0
        %408 = vst [vmem:[#allocation4 + $0x90] sm:$0xff] 0.0
        %409 = vst [vmem:[#allocation4 + $0x98] sm:$0xff] 0.0
        %410 = vst [vmem:[#allocation4 + $0xa0] sm:$0xff] 0.0
        %411 = vst [vmem:[#allocation4 + $0xa8] sm:$0xff] 0.0
        %412 = vst [vmem:[#allocation4 + $0xb0] sm:$0xff] 0.0
        %413 = vst [vmem:[#allocation4 + $0xb8] sm:$0xff] 0.0
        %414 = vst [vmem:[#allocation4 + $0xc0] sm:$0xff] 0.0
        %415 = vst [vmem:[#allocation4 + $0xc8] sm:$0xff] 0.0
        %416 = vst [vmem:[#allocation4 + $0xd0] sm:$0xff] 0.0
        %417 = vst [vmem:[#allocation4 + $0xd8] sm:$0xff] 0.0
        %418 = vst [vmem:[#allocation4 + $0xe0] sm:$0xff] 0.0
        %419 = vst [vmem:[#allocation4 + $0xe8] sm:$0xff] 0.0
        %420 = vst [vmem:[#allocation4 + $0xf0] sm:$0xff] 0.0
        %421 = vst [vmem:[#allocation4 + $0xf8] sm:$0xff] 0.0
        %422 = vst [vmem:[#allocation4 + $0x100] sm:$0xff] 0.0
        %423 = vst [vmem:[#allocation4 + $0x108] sm:$0xff] 0.0
        %424 = vst [vmem:[#allocation4 + $0x110] sm:$0xff] 0.0
        %425 = vst [vmem:[#allocation4 + $0x118] sm:$0xff] 0.0
        %426 = vst [vmem:[#allocation4 + $0x120] sm:$0xff] 0.0
        %427 = vst [vmem:[#allocation4 + $0x128] sm:$0xff] 0.0
        %428 = vst [vmem:[#allocation4 + $0x130] sm:$0xff] 0.0
        %429 = vst [vmem:[#allocation4 + $0x138] sm:$0xff] 0.0
        %430 = vst [vmem:[#allocation4 + $0x140] sm:$0xff] 0.0
        %431 = vst [vmem:[#allocation4 + $0x148] sm:$0xff] 0.0
        %432 = vst [vmem:[#allocation4 + $0x150] sm:$0xff] 0.0
        %433 = vst [vmem:[#allocation4 + $0x158] sm:$0xff] 0.0
        %434 = vst [vmem:[#allocation4 + $0x160] sm:$0xff] 0.0
        %435 = vst [vmem:[#allocation4 + $0x168] sm:$0xff] 0.0
        %436 = vst [vmem:[#allocation4 + $0x170] sm:$0xff] 0.0
        %437 = vst [vmem:[#allocation4 + $0x178] sm:$0xff] 0.0
        %438 = vst [vmem:[#allocation4 + $0x180] sm:$0xff] 0.0
        %439 = vst [vmem:[#allocation4 + $0x188] sm:$0xff] 0.0
        %440 = vst [vmem:[#allocation4 + $0x190] sm:$0xff] 0.0
        %441 = vst [vmem:[#allocation4 + $0x198] sm:$0xff] 0.0
        %442 = vst [vmem:[#allocation4 + $0x1a0] sm:$0xff] 0.0
        %443 = vst [vmem:[#allocation4 + $0x1a8] sm:$0xff] 0.0
        %v444 = vld [vmem:[%s278] sm:$0xff]
        %v445 = vld [vmem:[%s278 + $0x8] sm:$0xff]
        %v446 = vld [vmem:[%s278 + $0x10] sm:$0xff]
        %v447 = vld [vmem:[%s278 + $0x18] sm:$0xff]
        %v448 = vld [vmem:[%s278 + $0x20] sm:$0xff]
        %v449 = vld [vmem:[%s278 + $0x28] sm:$0xff]
        %v450 = vld [vmem:[%s278 + $0x30] sm:$0xff]
        %v451 = vld [vmem:[%s278 + $0x38] sm:$0xff]
        %v452 = vld [vmem:[%s278 + $0x40] sm:$0xff]
        %v453 = vld [vmem:[%s278 + $0x48] sm:$0xff]
        %v454 = vld [vmem:[%s278 + $0x50] sm:$0xff]
        %v455 = vld [vmem:[%s278 + $0x58] sm:$0xff]
        %v456 = vld [vmem:[%s278 + $0x60] sm:$0xff]
        %v457 = vld [vmem:[%s278 + $0x68] sm:$0xff]
        %v458 = vld [vmem:[%s278 + $0x70] sm:$0xff]
        %v459 = vld [vmem:[%s278 + $0x78] sm:$0xff]
        %v460 = vld [vmem:[%s278 + $0x80] sm:$0xff]
        %v461 = vld [vmem:[%s278 + $0x88] sm:$0xff]
        %v462 = vld [vmem:[%s278 + $0x90] sm:$0xff]
        %v463 = vld [vmem:[%s278 + $0x98] sm:$0xff]
        %v464 = vld [vmem:[%s278 + $0xa0] sm:$0xff]
        %v465 = vld [vmem:[%s278 + $0xa8] sm:$0xff]
        %v466 = vld [vmem:[%s278 + $0xb0] sm:$0xff]
        %v467 = vld [vmem:[%s278 + $0xb8] sm:$0xff]
        %v468 = vld [vmem:[%s278 + $0xc0] sm:$0xff]
        %v469 = vld [vmem:[%s278 + $0xc8] sm:$0xff]
        %v470 = vld [vmem:[%s278 + $0xd0] sm:$0xff]
        %v471 = vld [vmem:[%s278 + $0xd8] sm:$0xff]
        %v472 = vld [vmem:[%s278 + $0xe0] sm:$0xff]
        %v473 = vld [vmem:[%s278 + $0xe8] sm:$0xff]
        %v474 = vld [vmem:[%s278 + $0xf0] sm:$0xff]
        %v475 = vld [vmem:[%s278 + $0xf8] sm:$0xff]
        %s476 = scalar_lea.vmem [#allocation2], 24
        %477 = vst.msk [vmem:[%s476 + $0x1] sm:$0xff] %vm280, %v444
        %478 = vst.msk [vmem:[%s476 + $0x9] sm:$0xff] %vm280, %v445
        %479 = vst.msk [vmem:[%s476 + $0x19] sm:$0xff] %vm280, %v446
        %480 = vst.msk [vmem:[%s476 + $0x21] sm:$0xff] %vm280, %v447
        %481 = vst.msk [vmem:[%s476 + $0x31] sm:$0xff] %vm280, %v448
        %482 = vst.msk [vmem:[%s476 + $0x39] sm:$0xff] %vm280, %v449
        %483 = vst.msk [vmem:[%s476 + $0x49] sm:$0xff] %vm280, %v450
        %484 = vst.msk [vmem:[%s476 + $0x51] sm:$0xff] %vm280, %v451
        %485 = vst.msk [vmem:[%s476 + $0x61] sm:$0xff] %vm280, %v452
        %486 = vst.msk [vmem:[%s476 + $0x69] sm:$0xff] %vm280, %v453
        %487 = vst.msk [vmem:[%s476 + $0x79] sm:$0xff] %vm280, %v454
        %488 = vst.msk [vmem:[%s476 + $0x81] sm:$0xff] %vm280, %v455
        %489 = vst.msk [vmem:[%s476 + $0x91] sm:$0xff] %vm280, %v456
        %490 = vst.msk [vmem:[%s476 + $0x99] sm:$0xff] %vm280, %v457
        %491 = vst.msk [vmem:[%s476 + $0xa9] sm:$0xff] %vm280, %v458
        %492 = vst.msk [vmem:[%s476 + $0xb1] sm:$0xff] %vm280, %v459
        %493 = vst.msk [vmem:[%s476 + $0xc1] sm:$0xff] %vm280, %v460
        %494 = vst.msk [vmem:[%s476 + $0xc9] sm:$0xff] %vm280, %v461
        %495 = vst.msk [vmem:[%s476 + $0xd9] sm:$0xff] %vm280, %v462
        %496 = vst.msk [vmem:[%s476 + $0xe1] sm:$0xff] %vm280, %v463
        %497 = vst.msk [vmem:[%s476 + $0xf1] sm:$0xff] %vm280, %v464
        %498 = vst.msk [vmem:[%s476 + $0xf9] sm:$0xff] %vm280, %v465
        %499 = vst.msk [vmem:[%s476 + $0x109] sm:$0xff] %vm280, %v466
        %500 = vst.msk [vmem:[%s476 + $0x111] sm:$0xff] %vm280, %v467
        %501 = vst.msk [vmem:[%s476 + $0x121] sm:$0xff] %vm280, %v468
        %502 = vst.msk [vmem:[%s476 + $0x129] sm:$0xff] %vm280, %v469
        %503 = vst.msk [vmem:[%s476 + $0x139] sm:$0xff] %vm280, %v470
        %504 = vst.msk [vmem:[%s476 + $0x141] sm:$0xff] %vm280, %v471
        %505 = vst.msk [vmem:[%s476 + $0x151] sm:$0xff] %vm280, %v472
        %506 = vst.msk [vmem:[%s476 + $0x159] sm:$0xff] %vm280, %v473
        %507 = vst.msk [vmem:[%s476 + $0x169] sm:$0xff] %vm280, %v474
        %508 = vst.msk [vmem:[%s476 + $0x171] sm:$0xff] %vm280, %v475
        %v509 = vld [vmem:[#allocation2] sm:$0xff]
        %v510 = vld [vmem:[#allocation2 + $0x8] sm:$0xff]
        %v511 = vld [vmem:[#allocation2 + $0x18] sm:$0xff]
        %v512 = vld [vmem:[#allocation2 + $0x20] sm:$0xff]
        %v513 = vld [vmem:[#allocation2 + $0x30] sm:$0xff]
        %v514 = vld [vmem:[#allocation2 + $0x38] sm:$0xff]
        %v515 = vld [vmem:[#allocation2 + $0x48] sm:$0xff]
        %v516 = vld [vmem:[#allocation2 + $0x50] sm:$0xff]
        %v517 = vld [vmem:[#allocation2 + $0x60] sm:$0xff]
        %v518 = vld [vmem:[#allocation2 + $0x68] sm:$0xff]
        %v519 = vld [vmem:[#allocation2 + $0x78] sm:$0xff]
        %v520 = vld [vmem:[#allocation2 + $0x80] sm:$0xff]
        %v521 = vld [vmem:[#allocation2 + $0x90] sm:$0xff]
        %v522 = vld [vmem:[#allocation2 + $0x98] sm:$0xff]
        %v523 = vld [vmem:[#allocation2 + $0xa8] sm:$0xff]
        %v524 = vld [vmem:[#allocation2 + $0xb0] sm:$0xff]
        %v525 = vld [vmem:[#allocation2 + $0xc0] sm:$0xff]
        %v526 = vld [vmem:[#allocation2 + $0xc8] sm:$0xff]
        %v527 = vld [vmem:[#allocation2 + $0xd8] sm:$0xff]
        %v528 = vld [vmem:[#allocation2 + $0xe0] sm:$0xff]
        %v529 = vld [vmem:[#allocation2 + $0xf0] sm:$0xff]
        %v530 = vld [vmem:[#allocation2 + $0xf8] sm:$0xff]
        %v531 = vld [vmem:[#allocation2 + $0x108] sm:$0xff]
        %v532 = vld [vmem:[#allocation2 + $0x110] sm:$0xff]
        %v533 = vld [vmem:[#allocation2 + $0x120] sm:$0xff]
        %v534 = vld [vmem:[#allocation2 + $0x128] sm:$0xff]
        %v535 = vld [vmem:[#allocation2 + $0x138] sm:$0xff]
        %v536 = vld [vmem:[#allocation2 + $0x140] sm:$0xff]
        %v537 = vld [vmem:[#allocation2 + $0x150] sm:$0xff]
        %v538 = vld [vmem:[#allocation2 + $0x158] sm:$0xff]
        %v539 = vld [vmem:[#allocation2 + $0x168] sm:$0xff]
        %v540 = vld [vmem:[#allocation2 + $0x170] sm:$0xff]
        %v541 = vld [vmem:[#allocation2 + $0x1] sm:$0xff]
        %v542 = vld [vmem:[#allocation2 + $0x9] sm:$0xff]
        %v543 = vld [vmem:[#allocation2 + $0x19] sm:$0xff]
        %v544 = vld [vmem:[#allocation2 + $0x21] sm:$0xff]
        %v545 = vld [vmem:[#allocation2 + $0x31] sm:$0xff]
        %v546 = vld [vmem:[#allocation2 + $0x39] sm:$0xff]
        %v547 = vld [vmem:[#allocation2 + $0x49] sm:$0xff]
        %v548 = vld [vmem:[#allocation2 + $0x51] sm:$0xff]
        %v549 = vld [vmem:[#allocation2 + $0x61] sm:$0xff]
        %v550 = vld [vmem:[#allocation2 + $0x69] sm:$0xff]
        %v551 = vld [vmem:[#allocation2 + $0x79] sm:$0xff]
        %v552 = vld [vmem:[#allocation2 + $0x81] sm:$0xff]
        %v553 = vld [vmem:[#allocation2 + $0x91] sm:$0xff]
        %v554 = vld [vmem:[#allocation2 + $0x99] sm:$0xff]
        %v555 = vld [vmem:[#allocation2 + $0xa9] sm:$0xff]
        %v556 = vld [vmem:[#allocation2 + $0xb1] sm:$0xff]
        %v557 = vld [vmem:[#allocation2 + $0xc1] sm:$0xff]
        %v558 = vld [vmem:[#allocation2 + $0xc9] sm:$0xff]
        %v559 = vld [vmem:[#allocation2 + $0xd9] sm:$0xff]
        %v560 = vld [vmem:[#allocation2 + $0xe1] sm:$0xff]
        %v561 = vld [vmem:[#allocation2 + $0xf1] sm:$0xff]
        %v562 = vld [vmem:[#allocation2 + $0xf9] sm:$0xff]
        %v563 = vld [vmem:[#allocation2 + $0x109] sm:$0xff]
        %v564 = vld [vmem:[#allocation2 + $0x111] sm:$0xff]
        %v565 = vld [vmem:[#allocation2 + $0x121] sm:$0xff]
        %v566 = vld [vmem:[#allocation2 + $0x129] sm:$0xff]
        %v567 = vld [vmem:[#allocation2 + $0x139] sm:$0xff]
        %v568 = vld [vmem:[#allocation2 + $0x141] sm:$0xff]
        %v569 = vld [vmem:[#allocation2 + $0x151] sm:$0xff]
        %v570 = vld [vmem:[#allocation2 + $0x159] sm:$0xff]
        %v571 = vld [vmem:[#allocation2 + $0x169] sm:$0xff]
        %v572 = vld [vmem:[#allocation2 + $0x171] sm:$0xff]
        %v573 = vld [vmem:[#allocation2 + $0x2] sm:$0xff]
        %v574 = vld [vmem:[#allocation2 + $0xa] sm:$0xff]
        %v575 = vld [vmem:[#allocation2 + $0x1a] sm:$0xff]
        %v576 = vld [vmem:[#allocation2 + $0x22] sm:$0xff]
        %v577 = vld [vmem:[#allocation2 + $0x32] sm:$0xff]
        %v578 = vld [vmem:[#allocation2 + $0x3a] sm:$0xff]
        %v579 = vld [vmem:[#allocation2 + $0x4a] sm:$0xff]
        %v580 = vld [vmem:[#allocation2 + $0x52] sm:$0xff]
        %v581 = vld [vmem:[#allocation2 + $0x62] sm:$0xff]
        %v582 = vld [vmem:[#allocation2 + $0x6a] sm:$0xff]
        %v583 = vld [vmem:[#allocation2 + $0x7a] sm:$0xff]
        %v584 = vld [vmem:[#allocation2 + $0x82] sm:$0xff]
        %v585 = vld [vmem:[#allocation2 + $0x92] sm:$0xff]
        %v586 = vld [vmem:[#allocation2 + $0x9a] sm:$0xff]
        %v587 = vld [vmem:[#allocation2 + $0xaa] sm:$0xff]
        %v588 = vld [vmem:[#allocation2 + $0xb2] sm:$0xff]
        %v589 = vld [vmem:[#allocation2 + $0xc2] sm:$0xff]
        %v590 = vld [vmem:[#allocation2 + $0xca] sm:$0xff]
        %v591 = vld [vmem:[#allocation2 + $0xda] sm:$0xff]
        %v592 = vld [vmem:[#allocation2 + $0xe2] sm:$0xff]
        %v593 = vld [vmem:[#allocation2 + $0xf2] sm:$0xff]
        %v594 = vld [vmem:[#allocation2 + $0xfa] sm:$0xff]
        %v595 = vld [vmem:[#allocation2 + $0x10a] sm:$0xff]
        %v596 = vld [vmem:[#allocation2 + $0x112] sm:$0xff]
        %v597 = vld [vmem:[#allocation2 + $0x122] sm:$0xff]
        %v598 = vld [vmem:[#allocation2 + $0x12a] sm:$0xff]
        %v599 = vld [vmem:[#allocation2 + $0x13a] sm:$0xff]
        %v600 = vld [vmem:[#allocation2 + $0x142] sm:$0xff]
        %v601 = vld [vmem:[#allocation2 + $0x152] sm:$0xff]
        %v602 = vld [vmem:[#allocation2 + $0x15a] sm:$0xff]
        %v603 = vld [vmem:[#allocation2 + $0x16a] sm:$0xff]
        %v604 = vld [vmem:[#allocation2 + $0x172] sm:$0xff]
        %v605 = vld [vmem:[%s476] sm:$0xff]
        %v606 = vld [vmem:[%s476 + $0x8] sm:$0xff]
        %v607 = vld [vmem:[%s476 + $0x18] sm:$0xff]
        %v608 = vld [vmem:[%s476 + $0x20] sm:$0xff]
        %v609 = vld [vmem:[%s476 + $0x30] sm:$0xff]
        %v610 = vld [vmem:[%s476 + $0x38] sm:$0xff]
        %v611 = vld [vmem:[%s476 + $0x48] sm:$0xff]
        %v612 = vld [vmem:[%s476 + $0x50] sm:$0xff]
        %v613 = vld [vmem:[%s476 + $0x60] sm:$0xff]
        %v614 = vld [vmem:[%s476 + $0x68] sm:$0xff]
        %v615 = vld [vmem:[%s476 + $0x78] sm:$0xff]
        %v616 = vld [vmem:[%s476 + $0x80] sm:$0xff]
        %v617 = vld [vmem:[%s476 + $0x90] sm:$0xff]
        %v618 = vld [vmem:[%s476 + $0x98] sm:$0xff]
        %v619 = vld [vmem:[%s476 + $0xa8] sm:$0xff]
        %v620 = vld [vmem:[%s476 + $0xb0] sm:$0xff]
        %v621 = vld [vmem:[%s476 + $0xc0] sm:$0xff]
        %v622 = vld [vmem:[%s476 + $0xc8] sm:$0xff]
        %v623 = vld [vmem:[%s476 + $0xd8] sm:$0xff]
        %v624 = vld [vmem:[%s476 + $0xe0] sm:$0xff]
        %v625 = vld [vmem:[%s476 + $0xf0] sm:$0xff]
        %v626 = vld [vmem:[%s476 + $0xf8] sm:$0xff]
        %v627 = vld [vmem:[%s476 + $0x108] sm:$0xff]
        %v628 = vld [vmem:[%s476 + $0x110] sm:$0xff]
        %v629 = vld [vmem:[%s476 + $0x120] sm:$0xff]
        %v630 = vld [vmem:[%s476 + $0x128] sm:$0xff]
        %v631 = vld [vmem:[%s476 + $0x138] sm:$0xff]
        %v632 = vld [vmem:[%s476 + $0x140] sm:$0xff]
        %v633 = vld [vmem:[%s476 + $0x150] sm:$0xff]
        %v634 = vld [vmem:[%s476 + $0x158] sm:$0xff]
        %v635 = vld [vmem:[%s476 + $0x168] sm:$0xff]
        %v636 = vld [vmem:[%s476 + $0x170] sm:$0xff]
        %v637 = vld [vmem:[%s476 + $0x1] sm:$0xff]
        %v638 = vld [vmem:[%s476 + $0x9] sm:$0xff]
        %v639 = vld [vmem:[%s476 + $0x19] sm:$0xff]
        %v640 = vld [vmem:[%s476 + $0x21] sm:$0xff]
        %v641 = vld [vmem:[%s476 + $0x31] sm:$0xff]
        %v642 = vld [vmem:[%s476 + $0x39] sm:$0xff]
        %v643 = vld [vmem:[%s476 + $0x49] sm:$0xff]
        %v644 = vld [vmem:[%s476 + $0x51] sm:$0xff]
        %v645 = vld [vmem:[%s476 + $0x61] sm:$0xff]
        %v646 = vld [vmem:[%s476 + $0x69] sm:$0xff]
        %v647 = vld [vmem:[%s476 + $0x79] sm:$0xff]
        %v648 = vld [vmem:[%s476 + $0x81] sm:$0xff]
        %v649 = vld [vmem:[%s476 + $0x91] sm:$0xff]
        %v650 = vld [vmem:[%s476 + $0x99] sm:$0xff]
        %v651 = vld [vmem:[%s476 + $0xa9] sm:$0xff]
        %v652 = vld [vmem:[%s476 + $0xb1] sm:$0xff]
        %v653 = vld [vmem:[%s476 + $0xc1] sm:$0xff]
        %v654 = vld [vmem:[%s476 + $0xc9] sm:$0xff]
        %v655 = vld [vmem:[%s476 + $0xd9] sm:$0xff]
        %v656 = vld [vmem:[%s476 + $0xe1] sm:$0xff]
        %v657 = vld [vmem:[%s476 + $0xf1] sm:$0xff]
        %v658 = vld [vmem:[%s476 + $0xf9] sm:$0xff]
        %v659 = vld [vmem:[%s476 + $0x109] sm:$0xff]
        %v660 = vld [vmem:[%s476 + $0x111] sm:$0xff]
        %v661 = vld [vmem:[%s476 + $0x121] sm:$0xff]
        %v662 = vld [vmem:[%s476 + $0x129] sm:$0xff]
        %v663 = vld [vmem:[%s476 + $0x139] sm:$0xff]
        %v664 = vld [vmem:[%s476 + $0x141] sm:$0xff]
        %v665 = vld [vmem:[%s476 + $0x151] sm:$0xff]
        %v666 = vld [vmem:[%s476 + $0x159] sm:$0xff]
        %v667 = vld [vmem:[%s476 + $0x169] sm:$0xff]
        %v668 = vld [vmem:[%s476 + $0x171] sm:$0xff]
        %v669 = vld [vmem:[%s476 + $0x2] sm:$0xff]
        %v670 = vld [vmem:[%s476 + $0xa] sm:$0xff]
        %v671 = vld [vmem:[%s476 + $0x1a] sm:$0xff]
        %v672 = vld [vmem:[%s476 + $0x22] sm:$0xff]
        %v673 = vld [vmem:[%s476 + $0x32] sm:$0xff]
        %v674 = vld [vmem:[%s476 + $0x3a] sm:$0xff]
        %v675 = vld [vmem:[%s476 + $0x4a] sm:$0xff]
        %v676 = vld [vmem:[%s476 + $0x52] sm:$0xff]
        %v677 = vld [vmem:[%s476 + $0x62] sm:$0xff]
        %v678 = vld [vmem:[%s476 + $0x6a] sm:$0xff]
        %v679 = vld [vmem:[%s476 + $0x7a] sm:$0xff]
        %v680 = vld [vmem:[%s476 + $0x82] sm:$0xff]
        %v681 = vld [vmem:[%s476 + $0x92] sm:$0xff]
        %v682 = vld [vmem:[%s476 + $0x9a] sm:$0xff]
        %v683 = vld [vmem:[%s476 + $0xaa] sm:$0xff]
        %v684 = vld [vmem:[%s476 + $0xb2] sm:$0xff]
        %v685 = vld [vmem:[%s476 + $0xc2] sm:$0xff]
        %v686 = vld [vmem:[%s476 + $0xca] sm:$0xff]
        %v687 = vld [vmem:[%s476 + $0xda] sm:$0xff]
        %v688 = vld [vmem:[%s476 + $0xe2] sm:$0xff]
        %v689 = vld [vmem:[%s476 + $0xf2] sm:$0xff]
        %v690 = vld [vmem:[%s476 + $0xfa] sm:$0xff]
        %v691 = vld [vmem:[%s476 + $0x10a] sm:$0xff]
        %v692 = vld [vmem:[%s476 + $0x112] sm:$0xff]
        %v693 = vld [vmem:[%s476 + $0x122] sm:$0xff]
        %v694 = vld [vmem:[%s476 + $0x12a] sm:$0xff]
        %v695 = vld [vmem:[%s476 + $0x13a] sm:$0xff]
        %v696 = vld [vmem:[%s476 + $0x142] sm:$0xff]
        %v697 = vld [vmem:[%s476 + $0x152] sm:$0xff]
        %v698 = vld [vmem:[%s476 + $0x15a] sm:$0xff]
        %v699 = vld [vmem:[%s476 + $0x16a] sm:$0xff]
        %v700 = vld [vmem:[%s476 + $0x172] sm:$0xff]
        %s701 = scalar_lea.vmem [#allocation2], 48
        %v702 = vld [vmem:[%s701] sm:$0xff]
        %v703 = vld [vmem:[%s701 + $0x8] sm:$0xff]
        %v704 = vld [vmem:[%s701 + $0x18] sm:$0xff]
        %v705 = vld [vmem:[%s701 + $0x20] sm:$0xff]
        %v706 = vld [vmem:[%s701 + $0x30] sm:$0xff]
        %v707 = vld [vmem:[%s701 + $0x38] sm:$0xff]
        %v708 = vld [vmem:[%s701 + $0x48] sm:$0xff]
        %v709 = vld [vmem:[%s701 + $0x50] sm:$0xff]
        %v710 = vld [vmem:[%s701 + $0x60] sm:$0xff]
        %v711 = vld [vmem:[%s701 + $0x68] sm:$0xff]
        %v712 = vld [vmem:[%s701 + $0x78] sm:$0xff]
        %v713 = vld [vmem:[%s701 + $0x80] sm:$0xff]
        %v714 = vld [vmem:[%s701 + $0x90] sm:$0xff]
        %v715 = vld [vmem:[%s701 + $0x98] sm:$0xff]
        %v716 = vld [vmem:[%s701 + $0xa8] sm:$0xff]
        %v717 = vld [vmem:[%s701 + $0xb0] sm:$0xff]
        %v718 = vld [vmem:[%s701 + $0xc0] sm:$0xff]
        %v719 = vld [vmem:[%s701 + $0xc8] sm:$0xff]
        %v720 = vld [vmem:[%s701 + $0xd8] sm:$0xff]
        %v721 = vld [vmem:[%s701 + $0xe0] sm:$0xff]
        %v722 = vld [vmem:[%s701 + $0xf0] sm:$0xff]
        %v723 = vld [vmem:[%s701 + $0xf8] sm:$0xff]
        %v724 = vld [vmem:[%s701 + $0x108] sm:$0xff]
        %v725 = vld [vmem:[%s701 + $0x110] sm:$0xff]
        %v726 = vld [vmem:[%s701 + $0x120] sm:$0xff]
        %v727 = vld [vmem:[%s701 + $0x128] sm:$0xff]
        %v728 = vld [vmem:[%s701 + $0x138] sm:$0xff]
        %v729 = vld [vmem:[%s701 + $0x140] sm:$0xff]
        %v730 = vld [vmem:[%s701 + $0x150] sm:$0xff]
        %v731 = vld [vmem:[%s701 + $0x158] sm:$0xff]
        %v732 = vld [vmem:[%s701 + $0x168] sm:$0xff]
        %v733 = vld [vmem:[%s701 + $0x170] sm:$0xff]
        %v734 = vld [vmem:[%s701 + $0x1] sm:$0xff]
        %v735 = vld [vmem:[%s701 + $0x9] sm:$0xff]
        %v736 = vld [vmem:[%s701 + $0x19] sm:$0xff]
        %v737 = vld [vmem:[%s701 + $0x21] sm:$0xff]
        %v738 = vld [vmem:[%s701 + $0x31] sm:$0xff]
        %v739 = vld [vmem:[%s701 + $0x39] sm:$0xff]
        %v740 = vld [vmem:[%s701 + $0x49] sm:$0xff]
        %v741 = vld [vmem:[%s701 + $0x51] sm:$0xff]
        %v742 = vld [vmem:[%s701 + $0x61] sm:$0xff]
        %v743 = vld [vmem:[%s701 + $0x69] sm:$0xff]
        %v744 = vld [vmem:[%s701 + $0x79] sm:$0xff]
        %v745 = vld [vmem:[%s701 + $0x81] sm:$0xff]
        %v746 = vld [vmem:[%s701 + $0x91] sm:$0xff]
        %v747 = vld [vmem:[%s701 + $0x99] sm:$0xff]
        %v748 = vld [vmem:[%s701 + $0xa9] sm:$0xff]
        %v749 = vld [vmem:[%s701 + $0xb1] sm:$0xff]
        %v750 = vld [vmem:[%s701 + $0xc1] sm:$0xff]
        %v751 = vld [vmem:[%s701 + $0xc9] sm:$0xff]
        %v752 = vld [vmem:[%s701 + $0xd9] sm:$0xff]
        %v753 = vld [vmem:[%s701 + $0xe1] sm:$0xff]
        %v754 = vld [vmem:[%s701 + $0xf1] sm:$0xff]
        %v755 = vld [vmem:[%s701 + $0xf9] sm:$0xff]
        %v756 = vld [vmem:[%s701 + $0x109] sm:$0xff]
        %v757 = vld [vmem:[%s701 + $0x111] sm:$0xff]
        %v758 = vld [vmem:[%s701 + $0x121] sm:$0xff]
        %v759 = vld [vmem:[%s701 + $0x129] sm:$0xff]
        %v760 = vld [vmem:[%s701 + $0x139] sm:$0xff]
        %v761 = vld [vmem:[%s701 + $0x141] sm:$0xff]
        %v762 = vld [vmem:[%s701 + $0x151] sm:$0xff]
        %v763 = vld [vmem:[%s701 + $0x159] sm:$0xff]
        %v764 = vld [vmem:[%s701 + $0x169] sm:$0xff]
        %v765 = vld [vmem:[%s701 + $0x171] sm:$0xff]
        %v766 = vld [vmem:[%s701 + $0x2] sm:$0xff]
        %v767 = vld [vmem:[%s701 + $0xa] sm:$0xff]
        %v768 = vld [vmem:[%s701 + $0x1a] sm:$0xff]
        %v769 = vld [vmem:[%s701 + $0x22] sm:$0xff]
        %v770 = vld [vmem:[%s701 + $0x32] sm:$0xff]
        %v771 = vld [vmem:[%s701 + $0x3a] sm:$0xff]
        %v772 = vld [vmem:[%s701 + $0x4a] sm:$0xff]
        %v773 = vld [vmem:[%s701 + $0x52] sm:$0xff]
        %v774 = vld [vmem:[%s701 + $0x62] sm:$0xff]
        %v775 = vld [vmem:[%s701 + $0x6a] sm:$0xff]
        %v776 = vld [vmem:[%s701 + $0x7a] sm:$0xff]
        %v777 = vld [vmem:[%s701 + $0x82] sm:$0xff]
        %v778 = vld [vmem:[%s701 + $0x92] sm:$0xff]
        %v779 = vld [vmem:[%s701 + $0x9a] sm:$0xff]
        %v780 = vld [vmem:[%s701 + $0xaa] sm:$0xff]
        %v781 = vld [vmem:[%s701 + $0xb2] sm:$0xff]
        %v782 = vld [vmem:[%s701 + $0xc2] sm:$0xff]
        %v783 = vld [vmem:[%s701 + $0xca] sm:$0xff]
        %v784 = vld [vmem:[%s701 + $0xda] sm:$0xff]
        %v785 = vld [vmem:[%s701 + $0xe2] sm:$0xff]
        %v786 = vld [vmem:[%s701 + $0xf2] sm:$0xff]
        %v787 = vld [vmem:[%s701 + $0xfa] sm:$0xff]
        %v788 = vld [vmem:[%s701 + $0x10a] sm:$0xff]
        %v789 = vld [vmem:[%s701 + $0x112] sm:$0xff]
        %v790 = vld [vmem:[%s701 + $0x122] sm:$0xff]
        %v791 = vld [vmem:[%s701 + $0x12a] sm:$0xff]
        %v792 = vld [vmem:[%s701 + $0x13a] sm:$0xff]
        %v793 = vld [vmem:[%s701 + $0x142] sm:$0xff]
        %v794 = vld [vmem:[%s701 + $0x152] sm:$0xff]
        %v795 = vld [vmem:[%s701 + $0x15a] sm:$0xff]
        %v796 = vld [vmem:[%s701 + $0x16a] sm:$0xff]
        %v797 = vld [vmem:[%s701 + $0x172] sm:$0xff]
        %830 = vrot.lane.b32.xlu0 %v541, 4
        %v831 = vpop.permute.xlu0 %830
        %832 = vrot.lane.b32.xlu0 %v542, 4
        %v833 = vpop.permute.xlu0 %832
        %834 = vrot.lane.b32.xlu0 %v543, 4
        %v835 = vpop.permute.xlu0 %834
        %836 = vrot.lane.b32.xlu0 %v544, 4
        %v837 = vpop.permute.xlu0 %836
        %838 = vrot.lane.b32.xlu0 %v545, 4
        %v839 = vpop.permute.xlu0 %838
        %840 = vrot.lane.b32.xlu0 %v546, 4
        %v841 = vpop.permute.xlu0 %840
        %842 = vrot.lane.b32.xlu0 %v547, 4
        %v843 = vpop.permute.xlu0 %842
        %844 = vrot.lane.b32.xlu0 %v548, 4
        %v845 = vpop.permute.xlu0 %844
        %846 = vrot.lane.b32.xlu0 %v549, 4
        %v847 = vpop.permute.xlu0 %846
        %848 = vrot.lane.b32.xlu0 %v550, 4
        %v849 = vpop.permute.xlu0 %848
        %850 = vrot.lane.b32.xlu0 %v551, 4
        %v851 = vpop.permute.xlu0 %850
        %852 = vrot.lane.b32.xlu0 %v552, 4
        %v853 = vpop.permute.xlu0 %852
        %854 = vrot.lane.b32.xlu0 %v553, 4
        %v855 = vpop.permute.xlu0 %854
        %856 = vrot.lane.b32.xlu0 %v554, 4
        %v857 = vpop.permute.xlu0 %856
        %858 = vrot.lane.b32.xlu0 %v555, 4
        %v859 = vpop.permute.xlu0 %858
        %860 = vrot.lane.b32.xlu0 %v556, 4
        %v861 = vpop.permute.xlu0 %860
        %862 = vrot.lane.b32.xlu0 %v557, 4
        %v863 = vpop.permute.xlu0 %862
        %864 = vrot.lane.b32.xlu0 %v558, 4
        %v865 = vpop.permute.xlu0 %864
        %866 = vrot.lane.b32.xlu0 %v559, 4
        %v867 = vpop.permute.xlu0 %866
        %868 = vrot.lane.b32.xlu0 %v560, 4
        %v869 = vpop.permute.xlu0 %868
        %870 = vrot.lane.b32.xlu0 %v561, 4
        %v871 = vpop.permute.xlu0 %870
        %872 = vrot.lane.b32.xlu0 %v562, 4
        %v873 = vpop.permute.xlu0 %872
        %874 = vrot.lane.b32.xlu0 %v563, 4
        %v875 = vpop.permute.xlu0 %874
        %876 = vrot.lane.b32.xlu0 %v564, 4
        %v877 = vpop.permute.xlu0 %876
        %878 = vrot.lane.b32.xlu0 %v565, 4
        %v879 = vpop.permute.xlu0 %878
        %880 = vrot.lane.b32.xlu0 %v566, 4
        %v881 = vpop.permute.xlu0 %880
        %882 = vrot.lane.b32.xlu0 %v567, 4
        %v883 = vpop.permute.xlu0 %882
        %884 = vrot.lane.b32.xlu0 %v568, 4
        %v885 = vpop.permute.xlu0 %884
        %886 = vrot.lane.b32.xlu0 %v569, 4
        %v887 = vpop.permute.xlu0 %886
        %888 = vrot.lane.b32.xlu0 %v570, 4
        %v889 = vpop.permute.xlu0 %888
        %890 = vrot.lane.b32.xlu0 %v571, 4
        %v891 = vpop.permute.xlu0 %890
        %892 = vrot.lane.b32.xlu0 %v572, 4
        %v893 = vpop.permute.xlu0 %892
        %958 = vrot.lane.b32.xlu0 %v573, 8
        %v959 = vpop.permute.xlu0 %958
        %960 = vrot.lane.b32.xlu0 %v574, 8
        %v961 = vpop.permute.xlu0 %960
        %962 = vrot.lane.b32.xlu0 %v575, 8
        %v963 = vpop.permute.xlu0 %962
        %964 = vrot.lane.b32.xlu0 %v576, 8
        %v965 = vpop.permute.xlu0 %964
        %966 = vrot.lane.b32.xlu0 %v577, 8
        %v967 = vpop.permute.xlu0 %966
        %968 = vrot.lane.b32.xlu0 %v578, 8
        %v969 = vpop.permute.xlu0 %968
        %970 = vrot.lane.b32.xlu0 %v579, 8
        %v971 = vpop.permute.xlu0 %970
        %972 = vrot.lane.b32.xlu0 %v580, 8
        %v973 = vpop.permute.xlu0 %972
        %974 = vrot.lane.b32.xlu0 %v581, 8
        %v975 = vpop.permute.xlu0 %974
        %976 = vrot.lane.b32.xlu0 %v582, 8
        %v977 = vpop.permute.xlu0 %976
        %978 = vrot.lane.b32.xlu0 %v583, 8
        %v979 = vpop.permute.xlu0 %978
        %980 = vrot.lane.b32.xlu0 %v584, 8
        %v981 = vpop.permute.xlu0 %980
        %982 = vrot.lane.b32.xlu0 %v585, 8
        %v983 = vpop.permute.xlu0 %982
        %984 = vrot.lane.b32.xlu0 %v586, 8
        %v985 = vpop.permute.xlu0 %984
        %986 = vrot.lane.b32.xlu0 %v587, 8
        %v987 = vpop.permute.xlu0 %986
        %988 = vrot.lane.b32.xlu0 %v588, 8
        %v989 = vpop.permute.xlu0 %988
        %990 = vrot.lane.b32.xlu0 %v589, 8
        %v991 = vpop.permute.xlu0 %990
        %992 = vrot.lane.b32.xlu0 %v590, 8
        %v993 = vpop.permute.xlu0 %992
        %994 = vrot.lane.b32.xlu0 %v591, 8
        %v995 = vpop.permute.xlu0 %994
        %996 = vrot.lane.b32.xlu0 %v592, 8
        %v997 = vpop.permute.xlu0 %996
        %998 = vrot.lane.b32.xlu0 %v593, 8
        %v999 = vpop.permute.xlu0 %998
        %1000 = vrot.lane.b32.xlu0 %v594, 8
        %v1001 = vpop.permute.xlu0 %1000
        %1002 = vrot.lane.b32.xlu0 %v595, 8
        %v1003 = vpop.permute.xlu0 %1002
        %1004 = vrot.lane.b32.xlu0 %v596, 8
        %v1005 = vpop.permute.xlu0 %1004
        %1006 = vrot.lane.b32.xlu0 %v597, 8
        %v1007 = vpop.permute.xlu0 %1006
        %1008 = vrot.lane.b32.xlu0 %v598, 8
        %v1009 = vpop.permute.xlu0 %1008
        %1010 = vrot.lane.b32.xlu0 %v599, 8
        %v1011 = vpop.permute.xlu0 %1010
        %1012 = vrot.lane.b32.xlu0 %v600, 8
        %v1013 = vpop.permute.xlu0 %1012
        %1014 = vrot.lane.b32.xlu0 %v601, 8
        %v1015 = vpop.permute.xlu0 %1014
        %1016 = vrot.lane.b32.xlu0 %v602, 8
        %v1017 = vpop.permute.xlu0 %1016
        %1018 = vrot.lane.b32.xlu0 %v603, 8
        %v1019 = vpop.permute.xlu0 %1018
        %1020 = vrot.lane.b32.xlu0 %v604, 8
        %v1021 = vpop.permute.xlu0 %1020
        %1086 = vrot.lane.b32.xlu0 %v605, 12
        %v1087 = vpop.permute.xlu0 %1086
        %1088 = vrot.lane.b32.xlu0 %v606, 12
        %v1089 = vpop.permute.xlu0 %1088
        %1090 = vrot.lane.b32.xlu0 %v607, 12
        %v1091 = vpop.permute.xlu0 %1090
        %1092 = vrot.lane.b32.xlu0 %v608, 12
        %v1093 = vpop.permute.xlu0 %1092
        %1094 = vrot.lane.b32.xlu0 %v609, 12
        %v1095 = vpop.permute.xlu0 %1094
        %1096 = vrot.lane.b32.xlu0 %v610, 12
        %v1097 = vpop.permute.xlu0 %1096
        %1098 = vrot.lane.b32.xlu0 %v611, 12
        %v1099 = vpop.permute.xlu0 %1098
        %1100 = vrot.lane.b32.xlu0 %v612, 12
        %v1101 = vpop.permute.xlu0 %1100
        %1102 = vrot.lane.b32.xlu0 %v613, 12
        %v1103 = vpop.permute.xlu0 %1102
        %1104 = vrot.lane.b32.xlu0 %v614, 12
        %v1105 = vpop.permute.xlu0 %1104
        %1106 = vrot.lane.b32.xlu0 %v615, 12
        %v1107 = vpop.permute.xlu0 %1106
        %1108 = vrot.lane.b32.xlu0 %v616, 12
        %v1109 = vpop.permute.xlu0 %1108
        %1110 = vrot.lane.b32.xlu0 %v617, 12
        %v1111 = vpop.permute.xlu0 %1110
        %1112 = vrot.lane.b32.xlu0 %v618, 12
        %v1113 = vpop.permute.xlu0 %1112
        %1114 = vrot.lane.b32.xlu0 %v619, 12
        %v1115 = vpop.permute.xlu0 %1114
        %1116 = vrot.lane.b32.xlu0 %v620, 12
        %v1117 = vpop.permute.xlu0 %1116
        %1118 = vrot.lane.b32.xlu0 %v621, 12
        %v1119 = vpop.permute.xlu0 %1118
        %1120 = vrot.lane.b32.xlu0 %v622, 12
        %v1121 = vpop.permute.xlu0 %1120
        %1122 = vrot.lane.b32.xlu0 %v623, 12
        %v1123 = vpop.permute.xlu0 %1122
        %1124 = vrot.lane.b32.xlu0 %v624, 12
        %v1125 = vpop.permute.xlu0 %1124
        %1126 = vrot.lane.b32.xlu0 %v625, 12
        %v1127 = vpop.permute.xlu0 %1126
        %1128 = vrot.lane.b32.xlu0 %v626, 12
        %v1129 = vpop.permute.xlu0 %1128
        %1130 = vrot.lane.b32.xlu0 %v627, 12
        %v1131 = vpop.permute.xlu0 %1130
        %1132 = vrot.lane.b32.xlu0 %v628, 12
        %v1133 = vpop.permute.xlu0 %1132
        %1134 = vrot.lane.b32.xlu0 %v629, 12
        %v1135 = vpop.permute.xlu0 %1134
        %1136 = vrot.lane.b32.xlu0 %v630, 12
        %v1137 = vpop.permute.xlu0 %1136
        %1138 = vrot.lane.b32.xlu0 %v631, 12
        %v1139 = vpop.permute.xlu0 %1138
        %1140 = vrot.lane.b32.xlu0 %v632, 12
        %v1141 = vpop.permute.xlu0 %1140
        %1142 = vrot.lane.b32.xlu0 %v633, 12
        %v1143 = vpop.permute.xlu0 %1142
        %1144 = vrot.lane.b32.xlu0 %v634, 12
        %v1145 = vpop.permute.xlu0 %1144
        %1146 = vrot.lane.b32.xlu0 %v635, 12
        %v1147 = vpop.permute.xlu0 %1146
        %1148 = vrot.lane.b32.xlu0 %v636, 12
        %v1149 = vpop.permute.xlu0 %1148
        %1214 = vrot.lane.b32.xlu0 %v637, 16
        %v1215 = vpop.permute.xlu0 %1214
        %1216 = vrot.lane.b32.xlu0 %v638, 16
        %v1217 = vpop.permute.xlu0 %1216
        %1218 = vrot.lane.b32.xlu0 %v639, 16
        %v1219 = vpop.permute.xlu0 %1218
        %1220 = vrot.lane.b32.xlu0 %v640, 16
        %v1221 = vpop.permute.xlu0 %1220
        %1222 = vrot.lane.b32.xlu0 %v641, 16
        %v1223 = vpop.permute.xlu0 %1222
        %1224 = vrot.lane.b32.xlu0 %v642, 16
        %v1225 = vpop.permute.xlu0 %1224
        %1226 = vrot.lane.b32.xlu0 %v643, 16
        %v1227 = vpop.permute.xlu0 %1226
        %1228 = vrot.lane.b32.xlu0 %v644, 16
        %v1229 = vpop.permute.xlu0 %1228
        %1230 = vrot.lane.b32.xlu0 %v645, 16
        %v1231 = vpop.permute.xlu0 %1230
        %1232 = vrot.lane.b32.xlu0 %v646, 16
        %v1233 = vpop.permute.xlu0 %1232
        %1234 = vrot.lane.b32.xlu0 %v647, 16
        %v1235 = vpop.permute.xlu0 %1234
        %1236 = vrot.lane.b32.xlu0 %v648, 16
        %v1237 = vpop.permute.xlu0 %1236
        %1238 = vrot.lane.b32.xlu0 %v649, 16
        %v1239 = vpop.permute.xlu0 %1238
        %1240 = vrot.lane.b32.xlu0 %v650, 16
        %v1241 = vpop.permute.xlu0 %1240
        %1242 = vrot.lane.b32.xlu0 %v651, 16
        %v1243 = vpop.permute.xlu0 %1242
        %1244 = vrot.lane.b32.xlu0 %v652, 16
        %v1245 = vpop.permute.xlu0 %1244
        %1246 = vrot.lane.b32.xlu0 %v653, 16
        %v1247 = vpop.permute.xlu0 %1246
        %1248 = vrot.lane.b32.xlu0 %v654, 16
        %v1249 = vpop.permute.xlu0 %1248
        %1250 = vrot.lane.b32.xlu0 %v655, 16
        %v1251 = vpop.permute.xlu0 %1250
        %1252 = vrot.lane.b32.xlu0 %v656, 16
        %v1253 = vpop.permute.xlu0 %1252
        %1254 = vrot.lane.b32.xlu0 %v657, 16
        %v1255 = vpop.permute.xlu0 %1254
        %1256 = vrot.lane.b32.xlu0 %v658, 16
        %v1257 = vpop.permute.xlu0 %1256
        %1258 = vrot.lane.b32.xlu0 %v659, 16
        %v1259 = vpop.permute.xlu0 %1258
        %1260 = vrot.lane.b32.xlu0 %v660, 16
        %v1261 = vpop.permute.xlu0 %1260
        %1262 = vrot.lane.b32.xlu0 %v661, 16
        %v1263 = vpop.permute.xlu0 %1262
        %1264 = vrot.lane.b32.xlu0 %v662, 16
        %v1265 = vpop.permute.xlu0 %1264
        %1266 = vrot.lane.b32.xlu0 %v663, 16
        %v1267 = vpop.permute.xlu0 %1266
        %1268 = vrot.lane.b32.xlu0 %v664, 16
        %v1269 = vpop.permute.xlu0 %1268
        %1270 = vrot.lane.b32.xlu0 %v665, 16
        %v1271 = vpop.permute.xlu0 %1270
        %1272 = vrot.lane.b32.xlu0 %v666, 16
        %v1273 = vpop.permute.xlu0 %1272
        %1274 = vrot.lane.b32.xlu0 %v667, 16
        %v1275 = vpop.permute.xlu0 %1274
        %1276 = vrot.lane.b32.xlu0 %v668, 16
        %v1277 = vpop.permute.xlu0 %1276
        %1342 = vrot.lane.b32.xlu0 %v669, 20
        %v1343 = vpop.permute.xlu0 %1342
        %1344 = vrot.lane.b32.xlu0 %v670, 20
        %v1345 = vpop.permute.xlu0 %1344
        %1346 = vrot.lane.b32.xlu0 %v671, 20
        %v1347 = vpop.permute.xlu0 %1346
        %1348 = vrot.lane.b32.xlu0 %v672, 20
        %v1349 = vpop.permute.xlu0 %1348
        %1350 = vrot.lane.b32.xlu0 %v673, 20
        %v1351 = vpop.permute.xlu0 %1350
        %1352 = vrot.lane.b32.xlu0 %v674, 20
        %v1353 = vpop.permute.xlu0 %1352
        %1354 = vrot.lane.b32.xlu0 %v675, 20
        %v1355 = vpop.permute.xlu0 %1354
        %1356 = vrot.lane.b32.xlu0 %v676, 20
        %v1357 = vpop.permute.xlu0 %1356
        %1358 = vrot.lane.b32.xlu0 %v677, 20
        %v1359 = vpop.permute.xlu0 %1358
        %1360 = vrot.lane.b32.xlu0 %v678, 20
        %v1361 = vpop.permute.xlu0 %1360
        %1362 = vrot.lane.b32.xlu0 %v679, 20
        %v1363 = vpop.permute.xlu0 %1362
        %1364 = vrot.lane.b32.xlu0 %v680, 20
        %v1365 = vpop.permute.xlu0 %1364
        %1366 = vrot.lane.b32.xlu0 %v681, 20
        %v1367 = vpop.permute.xlu0 %1366
        %1368 = vrot.lane.b32.xlu0 %v682, 20
        %v1369 = vpop.permute.xlu0 %1368
        %1370 = vrot.lane.b32.xlu0 %v683, 20
        %v1371 = vpop.permute.xlu0 %1370
        %1372 = vrot.lane.b32.xlu0 %v684, 20
        %v1373 = vpop.permute.xlu0 %1372
        %1374 = vrot.lane.b32.xlu0 %v685, 20
        %v1375 = vpop.permute.xlu0 %1374
        %1376 = vrot.lane.b32.xlu0 %v686, 20
        %v1377 = vpop.permute.xlu0 %1376
        %1378 = vrot.lane.b32.xlu0 %v687, 20
        %v1379 = vpop.permute.xlu0 %1378
        %1380 = vrot.lane.b32.xlu0 %v688, 20
        %v1381 = vpop.permute.xlu0 %1380
        %1382 = vrot.lane.b32.xlu0 %v689, 20
        %v1383 = vpop.permute.xlu0 %1382
        %1384 = vrot.lane.b32.xlu0 %v690, 20
        %v1385 = vpop.permute.xlu0 %1384
        %1386 = vrot.lane.b32.xlu0 %v691, 20
        %v1387 = vpop.permute.xlu0 %1386
        %1388 = vrot.lane.b32.xlu0 %v692, 20
        %v1389 = vpop.permute.xlu0 %1388
        %1390 = vrot.lane.b32.xlu0 %v693, 20
        %v1391 = vpop.permute.xlu0 %1390
        %1392 = vrot.lane.b32.xlu0 %v694, 20
        %v1393 = vpop.permute.xlu0 %1392
        %1394 = vrot.lane.b32.xlu0 %v695, 20
        %v1395 = vpop.permute.xlu0 %1394
        %1396 = vrot.lane.b32.xlu0 %v696, 20
        %v1397 = vpop.permute.xlu0 %1396
        %1398 = vrot.lane.b32.xlu0 %v697, 20
        %v1399 = vpop.permute.xlu0 %1398
        %1400 = vrot.lane.b32.xlu0 %v698, 20
        %v1401 = vpop.permute.xlu0 %1400
        %1402 = vrot.lane.b32.xlu0 %v699, 20
        %v1403 = vpop.permute.xlu0 %1402
        %1404 = vrot.lane.b32.xlu0 %v700, 20
        %v1405 = vpop.permute.xlu0 %1404
        %1470 = vrot.lane.b32.xlu0 %v702, 24
        %v1471 = vpop.permute.xlu0 %1470
        %1472 = vrot.lane.b32.xlu0 %v703, 24
        %v1473 = vpop.permute.xlu0 %1472
        %1474 = vrot.lane.b32.xlu0 %v704, 24
        %v1475 = vpop.permute.xlu0 %1474
        %1476 = vrot.lane.b32.xlu0 %v705, 24
        %v1477 = vpop.permute.xlu0 %1476
        %1478 = vrot.lane.b32.xlu0 %v706, 24
        %v1479 = vpop.permute.xlu0 %1478
        %1480 = vrot.lane.b32.xlu0 %v707, 24
        %v1481 = vpop.permute.xlu0 %1480
        %1482 = vrot.lane.b32.xlu0 %v708, 24
        %v1483 = vpop.permute.xlu0 %1482
        %1484 = vrot.lane.b32.xlu0 %v709, 24
        %v1485 = vpop.permute.xlu0 %1484
        %1486 = vrot.lane.b32.xlu0 %v710, 24
        %v1487 = vpop.permute.xlu0 %1486
        %1488 = vrot.lane.b32.xlu0 %v711, 24
        %v1489 = vpop.permute.xlu0 %1488
        %1490 = vrot.lane.b32.xlu0 %v712, 24
        %v1491 = vpop.permute.xlu0 %1490
        %1492 = vrot.lane.b32.xlu0 %v713, 24
        %v1493 = vpop.permute.xlu0 %1492
        %1494 = vrot.lane.b32.xlu0 %v714, 24
        %v1495 = vpop.permute.xlu0 %1494
        %1496 = vrot.lane.b32.xlu0 %v715, 24
        %v1497 = vpop.permute.xlu0 %1496
        %1498 = vrot.lane.b32.xlu0 %v716, 24
        %v1499 = vpop.permute.xlu0 %1498
        %1500 = vrot.lane.b32.xlu0 %v717, 24
        %v1501 = vpop.permute.xlu0 %1500
        %1502 = vrot.lane.b32.xlu0 %v718, 24
        %v1503 = vpop.permute.xlu0 %1502
        %1504 = vrot.lane.b32.xlu0 %v719, 24
        %v1505 = vpop.permute.xlu0 %1504
        %1506 = vrot.lane.b32.xlu0 %v720, 24
        %v1507 = vpop.permute.xlu0 %1506
        %1508 = vrot.lane.b32.xlu0 %v721, 24
        %v1509 = vpop.permute.xlu0 %1508
        %1510 = vrot.lane.b32.xlu0 %v722, 24
        %v1511 = vpop.permute.xlu0 %1510
        %1512 = vrot.lane.b32.xlu0 %v723, 24
        %v1513 = vpop.permute.xlu0 %1512
        %1514 = vrot.lane.b32.xlu0 %v724, 24
        %v1515 = vpop.permute.xlu0 %1514
        %1516 = vrot.lane.b32.xlu0 %v725, 24
        %v1517 = vpop.permute.xlu0 %1516
        %1518 = vrot.lane.b32.xlu0 %v726, 24
        %v1519 = vpop.permute.xlu0 %1518
        %1520 = vrot.lane.b32.xlu0 %v727, 24
        %v1521 = vpop.permute.xlu0 %1520
        %1522 = vrot.lane.b32.xlu0 %v728, 24
        %v1523 = vpop.permute.xlu0 %1522
        %1524 = vrot.lane.b32.xlu0 %v729, 24
        %v1525 = vpop.permute.xlu0 %1524
        %1526 = vrot.lane.b32.xlu0 %v730, 24
        %v1527 = vpop.permute.xlu0 %1526
        %1528 = vrot.lane.b32.xlu0 %v731, 24
        %v1529 = vpop.permute.xlu0 %1528
        %1530 = vrot.lane.b32.xlu0 %v732, 24
        %v1531 = vpop.permute.xlu0 %1530
        %1532 = vrot.lane.b32.xlu0 %v733, 24
        %v1533 = vpop.permute.xlu0 %1532
        %1598 = vrot.lane.b32.xlu0 %v734, 28
        %v1599 = vpop.permute.xlu0 %1598
        %1600 = vrot.lane.b32.xlu0 %v735, 28
        %v1601 = vpop.permute.xlu0 %1600
        %1602 = vrot.lane.b32.xlu0 %v736, 28
        %v1603 = vpop.permute.xlu0 %1602
        %1604 = vrot.lane.b32.xlu0 %v737, 28
        %v1605 = vpop.permute.xlu0 %1604
        %1606 = vrot.lane.b32.xlu0 %v738, 28
        %v1607 = vpop.permute.xlu0 %1606
        %1608 = vrot.lane.b32.xlu0 %v739, 28
        %v1609 = vpop.permute.xlu0 %1608
        %1610 = vrot.lane.b32.xlu0 %v740, 28
        %v1611 = vpop.permute.xlu0 %1610
        %1612 = vrot.lane.b32.xlu0 %v741, 28
        %v1613 = vpop.permute.xlu0 %1612
        %1614 = vrot.lane.b32.xlu0 %v742, 28
        %v1615 = vpop.permute.xlu0 %1614
        %1616 = vrot.lane.b32.xlu0 %v743, 28
        %v1617 = vpop.permute.xlu0 %1616
        %1618 = vrot.lane.b32.xlu0 %v744, 28
        %v1619 = vpop.permute.xlu0 %1618
        %1620 = vrot.lane.b32.xlu0 %v745, 28
        %v1621 = vpop.permute.xlu0 %1620
        %1622 = vrot.lane.b32.xlu0 %v746, 28
        %v1623 = vpop.permute.xlu0 %1622
        %1624 = vrot.lane.b32.xlu0 %v747, 28
        %v1625 = vpop.permute.xlu0 %1624
        %1626 = vrot.lane.b32.xlu0 %v748, 28
        %v1627 = vpop.permute.xlu0 %1626
        %1628 = vrot.lane.b32.xlu0 %v749, 28
        %v1629 = vpop.permute.xlu0 %1628
        %1630 = vrot.lane.b32.xlu0 %v750, 28
        %v1631 = vpop.permute.xlu0 %1630
        %1632 = vrot.lane.b32.xlu0 %v751, 28
        %v1633 = vpop.permute.xlu0 %1632
        %1634 = vrot.lane.b32.xlu0 %v752, 28
        %v1635 = vpop.permute.xlu0 %1634
        %1636 = vrot.lane.b32.xlu0 %v753, 28
        %v1637 = vpop.permute.xlu0 %1636
        %1638 = vrot.lane.b32.xlu0 %v754, 28
        %v1639 = vpop.permute.xlu0 %1638
        %1640 = vrot.lane.b32.xlu0 %v755, 28
        %v1641 = vpop.permute.xlu0 %1640
        %1642 = vrot.lane.b32.xlu0 %v756, 28
        %v1643 = vpop.permute.xlu0 %1642
        %1644 = vrot.lane.b32.xlu0 %v757, 28
        %v1645 = vpop.permute.xlu0 %1644
        %1646 = vrot.lane.b32.xlu0 %v758, 28
        %v1647 = vpop.permute.xlu0 %1646
        %1648 = vrot.lane.b32.xlu0 %v759, 28
        %v1649 = vpop.permute.xlu0 %1648
        %1650 = vrot.lane.b32.xlu0 %v760, 28
        %v1651 = vpop.permute.xlu0 %1650
        %1652 = vrot.lane.b32.xlu0 %v761, 28
        %v1653 = vpop.permute.xlu0 %1652
        %1654 = vrot.lane.b32.xlu0 %v762, 28
        %v1655 = vpop.permute.xlu0 %1654
        %1656 = vrot.lane.b32.xlu0 %v763, 28
        %v1657 = vpop.permute.xlu0 %1656
        %1658 = vrot.lane.b32.xlu0 %v764, 28
        %v1659 = vpop.permute.xlu0 %1658
        %1660 = vrot.lane.b32.xlu0 %v765, 28
        %v1661 = vpop.permute.xlu0 %1660
        %1726 = vrot.lane.b32.xlu0 %v766, 32
        %v1727 = vpop.permute.xlu0 %1726
        %1728 = vrot.lane.b32.xlu0 %v767, 32
        %v1729 = vpop.permute.xlu0 %1728
        %1730 = vrot.lane.b32.xlu0 %v768, 32
        %v1731 = vpop.permute.xlu0 %1730
        %1732 = vrot.lane.b32.xlu0 %v769, 32
        %v1733 = vpop.permute.xlu0 %1732
        %1734 = vrot.lane.b32.xlu0 %v770, 32
        %v1735 = vpop.permute.xlu0 %1734
        %1736 = vrot.lane.b32.xlu0 %v771, 32
        %v1737 = vpop.permute.xlu0 %1736
        %1738 = vrot.lane.b32.xlu0 %v772, 32
        %v1739 = vpop.permute.xlu0 %1738
        %1740 = vrot.lane.b32.xlu0 %v773, 32
        %v1741 = vpop.permute.xlu0 %1740
        %1742 = vrot.lane.b32.xlu0 %v774, 32
        %v1743 = vpop.permute.xlu0 %1742
        %1744 = vrot.lane.b32.xlu0 %v775, 32
        %v1745 = vpop.permute.xlu0 %1744
        %1746 = vrot.lane.b32.xlu0 %v776, 32
        %v1747 = vpop.permute.xlu0 %1746
        %1748 = vrot.lane.b32.xlu0 %v777, 32
        %v1749 = vpop.permute.xlu0 %1748
        %1750 = vrot.lane.b32.xlu0 %v778, 32
        %v1751 = vpop.permute.xlu0 %1750
        %1752 = vrot.lane.b32.xlu0 %v779, 32
        %v1753 = vpop.permute.xlu0 %1752
        %1754 = vrot.lane.b32.xlu0 %v780, 32
        %v1755 = vpop.permute.xlu0 %1754
        %1756 = vrot.lane.b32.xlu0 %v781, 32
        %v1757 = vpop.permute.xlu0 %1756
        %1758 = vrot.lane.b32.xlu0 %v782, 32
        %v1759 = vpop.permute.xlu0 %1758
        %1760 = vrot.lane.b32.xlu0 %v783, 32
        %v1761 = vpop.permute.xlu0 %1760
        %1762 = vrot.lane.b32.xlu0 %v784, 32
        %v1763 = vpop.permute.xlu0 %1762
        %1764 = vrot.lane.b32.xlu0 %v785, 32
        %v1765 = vpop.permute.xlu0 %1764
        %1766 = vrot.lane.b32.xlu0 %v786, 32
        %v1767 = vpop.permute.xlu0 %1766
        %1768 = vrot.lane.b32.xlu0 %v787, 32
        %v1769 = vpop.permute.xlu0 %1768
        %1770 = vrot.lane.b32.xlu0 %v788, 32
        %v1771 = vpop.permute.xlu0 %1770
        %1772 = vrot.lane.b32.xlu0 %v789, 32
        %v1773 = vpop.permute.xlu0 %1772
        %1774 = vrot.lane.b32.xlu0 %v790, 32
        %v1775 = vpop.permute.xlu0 %1774
        %1776 = vrot.lane.b32.xlu0 %v791, 32
        %v1777 = vpop.permute.xlu0 %1776
        %1778 = vrot.lane.b32.xlu0 %v792, 32
        %v1779 = vpop.permute.xlu0 %1778
        %1780 = vrot.lane.b32.xlu0 %v793, 32
        %v1781 = vpop.permute.xlu0 %1780
        %1782 = vrot.lane.b32.xlu0 %v794, 32
        %v1783 = vpop.permute.xlu0 %1782
        %1784 = vrot.lane.b32.xlu0 %v795, 32
        %v1785 = vpop.permute.xlu0 %1784
        %1786 = vrot.lane.b32.xlu0 %v796, 32
        %v1787 = vpop.permute.xlu0 %1786
        %1788 = vrot.lane.b32.xlu0 %v797, 32
        %v1789 = vpop.permute.xlu0 %1788
        %v1822 = vsel %vm280, %v509, %v831
        %v1823 = vsel %vm280, %v510, %v833
        %v1824 = vsel %vm280, %v511, %v835
        %v1825 = vsel %vm280, %v512, %v837
        %v1826 = vsel %vm280, %v513, %v839
        %v1827 = vsel %vm280, %v514, %v841
        %v1828 = vsel %vm280, %v515, %v843
        %v1829 = vsel %vm280, %v516, %v845
        %v1830 = vsel %vm280, %v517, %v847
        %v1831 = vsel %vm280, %v518, %v849
        %v1832 = vsel %vm280, %v519, %v851
        %v1833 = vsel %vm280, %v520, %v853
        %v1834 = vsel %vm280, %v521, %v855
        %v1835 = vsel %vm280, %v522, %v857
        %v1836 = vsel %vm280, %v523, %v859
        %v1837 = vsel %vm280, %v524, %v861
        %v1838 = vsel %vm280, %v525, %v863
        %v1839 = vsel %vm280, %v526, %v865
        %v1840 = vsel %vm280, %v527, %v867
        %v1841 = vsel %vm280, %v528, %v869
        %v1842 = vsel %vm280, %v529, %v871
        %v1843 = vsel %vm280, %v530, %v873
        %v1844 = vsel %vm280, %v531, %v875
        %v1845 = vsel %vm280, %v532, %v877
        %v1846 = vsel %vm280, %v533, %v879
        %v1847 = vsel %vm280, %v534, %v881
        %v1848 = vsel %vm280, %v535, %v883
        %v1849 = vsel %vm280, %v536, %v885
        %v1850 = vsel %vm280, %v537, %v887
        %v1851 = vsel %vm280, %v538, %v889
        %v1852 = vsel %vm280, %v539, %v891
        %v1853 = vsel %vm280, %v540, %v893
        %vm1854 = vcmask 64512
        %v1855 = vsel %vm1854, %v1822, %v959
        %v1856 = vsel %vm1854, %v1823, %v961
        %v1857 = vsel %vm1854, %v1824, %v963
        %v1858 = vsel %vm1854, %v1825, %v965
        %v1859 = vsel %vm1854, %v1826, %v967
        %v1860 = vsel %vm1854, %v1827, %v969
        %v1861 = vsel %vm1854, %v1828, %v971
        %v1862 = vsel %vm1854, %v1829, %v973
        %v1863 = vsel %vm1854, %v1830, %v975
        %v1864 = vsel %vm1854, %v1831, %v977
        %v1865 = vsel %vm1854, %v1832, %v979
        %v1866 = vsel %vm1854, %v1833, %v981
        %v1867 = vsel %vm1854, %v1834, %v983
        %v1868 = vsel %vm1854, %v1835, %v985
        %v1869 = vsel %vm1854, %v1836, %v987
        %v1870 = vsel %vm1854, %v1837, %v989
        %v1871 = vsel %vm1854, %v1838, %v991
        %v1872 = vsel %vm1854, %v1839, %v993
        %v1873 = vsel %vm1854, %v1840, %v995
        %v1874 = vsel %vm1854, %v1841, %v997
        %v1875 = vsel %vm1854, %v1842, %v999
        %v1876 = vsel %vm1854, %v1843, %v1001
        %v1877 = vsel %vm1854, %v1844, %v1003
        %v1878 = vsel %vm1854, %v1845, %v1005
        %v1879 = vsel %vm1854, %v1846, %v1007
        %v1880 = vsel %vm1854, %v1847, %v1009
        %v1881 = vsel %vm1854, %v1848, %v1011
        %v1882 = vsel %vm1854, %v1849, %v1013
        %v1883 = vsel %vm1854, %v1850, %v1015
        %v1884 = vsel %vm1854, %v1851, %v1017
        %v1885 = vsel %vm1854, %v1852, %v1019
        %v1886 = vsel %vm1854, %v1853, %v1021
        %vm1887 = vcmask 97280
        %v1888 = vsel %vm1887, %v1855, %v1087
        %v1889 = vsel %vm1887, %v1856, %v1089
        %v1890 = vsel %vm1887, %v1857, %v1091
        %v1891 = vsel %vm1887, %v1858, %v1093
        %v1892 = vsel %vm1887, %v1859, %v1095
        %v1893 = vsel %vm1887, %v1860, %v1097
        %v1894 = vsel %vm1887, %v1861, %v1099
        %v1895 = vsel %vm1887, %v1862, %v1101
        %v1896 = vsel %vm1887, %v1863, %v1103
        %v1897 = vsel %vm1887, %v1864, %v1105
        %v1898 = vsel %vm1887, %v1865, %v1107
        %v1899 = vsel %vm1887, %v1866, %v1109
        %v1900 = vsel %vm1887, %v1867, %v1111
        %v1901 = vsel %vm1887, %v1868, %v1113
        %v1902 = vsel %vm1887, %v1869, %v1115
        %v1903 = vsel %vm1887, %v1870, %v1117
        %v1904 = vsel %vm1887, %v1871, %v1119
        %v1905 = vsel %vm1887, %v1872, %v1121
        %v1906 = vsel %vm1887, %v1873, %v1123
        %v1907 = vsel %vm1887, %v1874, %v1125
        %v1908 = vsel %vm1887, %v1875, %v1127
        %v1909 = vsel %vm1887, %v1876, %v1129
        %v1910 = vsel %vm1887, %v1877, %v1131
        %v1911 = vsel %vm1887, %v1878, %v1133
        %v1912 = vsel %vm1887, %v1879, %v1135
        %v1913 = vsel %vm1887, %v1880, %v1137
        %v1914 = vsel %vm1887, %v1881, %v1139
        %v1915 = vsel %vm1887, %v1882, %v1141
        %v1916 = vsel %vm1887, %v1883, %v1143
        %v1917 = vsel %vm1887, %v1884, %v1145
        %v1918 = vsel %vm1887, %v1885, %v1147
        %v1919 = vsel %vm1887, %v1886, %v1149
        %vm1920 = vcmask 130048
        %v1921 = vsel %vm1920, %v1888, %v1215
        %v1922 = vsel %vm1920, %v1889, %v1217
        %v1923 = vsel %vm1920, %v1890, %v1219
        %v1924 = vsel %vm1920, %v1891, %v1221
        %v1925 = vsel %vm1920, %v1892, %v1223
        %v1926 = vsel %vm1920, %v1893, %v1225
        %v1927 = vsel %vm1920, %v1894, %v1227
        %v1928 = vsel %vm1920, %v1895, %v1229
        %v1929 = vsel %vm1920, %v1896, %v1231
        %v1930 = vsel %vm1920, %v1897, %v1233
        %v1931 = vsel %vm1920, %v1898, %v1235
        %v1932 = vsel %vm1920, %v1899, %v1237
        %v1933 = vsel %vm1920, %v1900, %v1239
        %v1934 = vsel %vm1920, %v1901, %v1241
        %v1935 = vsel %vm1920, %v1902, %v1243
        %v1936 = vsel %vm1920, %v1903, %v1245
        %v1937 = vsel %vm1920, %v1904, %v1247
        %v1938 = vsel %vm1920, %v1905, %v1249
        %v1939 = vsel %vm1920, %v1906, %v1251
        %v1940 = vsel %vm1920, %v1907, %v1253
        %v1941 = vsel %vm1920, %v1908, %v1255
        %v1942 = vsel %vm1920, %v1909, %v1257
        %v1943 = vsel %vm1920, %v1910, %v1259
        %v1944 = vsel %vm1920, %v1911, %v1261
        %v1945 = vsel %vm1920, %v1912, %v1263
        %v1946 = vsel %vm1920, %v1913, %v1265
        %v1947 = vsel %vm1920, %v1914, %v1267
        %v1948 = vsel %vm1920, %v1915, %v1269
        %v1949 = vsel %vm1920, %v1916, %v1271
        %v1950 = vsel %vm1920, %v1917, %v1273
        %v1951 = vsel %vm1920, %v1918, %v1275
        %v1952 = vsel %vm1920, %v1919, %v1277
        %vm1953 = vcmask 162816
        %v1954 = vsel %vm1953, %v1921, %v1343
        %v1955 = vsel %vm1953, %v1922, %v1345
        %v1956 = vsel %vm1953, %v1923, %v1347
        %v1957 = vsel %vm1953, %v1924, %v1349
        %v1958 = vsel %vm1953, %v1925, %v1351
        %v1959 = vsel %vm1953, %v1926, %v1353
        %v1960 = vsel %vm1953, %v1927, %v1355
        %v1961 = vsel %vm1953, %v1928, %v1357
        %v1962 = vsel %vm1953, %v1929, %v1359
        %v1963 = vsel %vm1953, %v1930, %v1361
        %v1964 = vsel %vm1953, %v1931, %v1363
        %v1965 = vsel %vm1953, %v1932, %v1365
        %v1966 = vsel %vm1953, %v1933, %v1367
        %v1967 = vsel %vm1953, %v1934, %v1369
        %v1968 = vsel %vm1953, %v1935, %v1371
        %v1969 = vsel %vm1953, %v1936, %v1373
        %v1970 = vsel %vm1953, %v1937, %v1375
        %v1971 = vsel %vm1953, %v1938, %v1377
        %v1972 = vsel %vm1953, %v1939, %v1379
        %v1973 = vsel %vm1953, %v1940, %v1381
        %v1974 = vsel %vm1953, %v1941, %v1383
        %v1975 = vsel %vm1953, %v1942, %v1385
        %v1976 = vsel %vm1953, %v1943, %v1387
        %v1977 = vsel %vm1953, %v1944, %v1389
        %v1978 = vsel %vm1953, %v1945, %v1391
        %v1979 = vsel %vm1953, %v1946, %v1393
        %v1980 = vsel %vm1953, %v1947, %v1395
        %v1981 = vsel %vm1953, %v1948, %v1397
        %v1982 = vsel %vm1953, %v1949, %v1399
        %v1983 = vsel %vm1953, %v1950, %v1401
        %v1984 = vsel %vm1953, %v1951, %v1403
        %v1985 = vsel %vm1953, %v1952, %v1405
        %vm1986 = vcmask 195584
        %v1987 = vsel %vm1986, %v1954, %v1471
        %v1988 = vsel %vm1986, %v1955, %v1473
        %v1989 = vsel %vm1986, %v1956, %v1475
        %v1990 = vsel %vm1986, %v1957, %v1477
        %v1991 = vsel %vm1986, %v1958, %v1479
        %v1992 = vsel %vm1986, %v1959, %v1481
        %v1993 = vsel %vm1986, %v1960, %v1483
        %v1994 = vsel %vm1986, %v1961, %v1485
        %v1995 = vsel %vm1986, %v1962, %v1487
        %v1996 = vsel %vm1986, %v1963, %v1489
        %v1997 = vsel %vm1986, %v1964, %v1491
        %v1998 = vsel %vm1986, %v1965, %v1493
        %v1999 = vsel %vm1986, %v1966, %v1495
        %v2000 = vsel %vm1986, %v1967, %v1497
        %v2001 = vsel %vm1986, %v1968, %v1499
        %v2002 = vsel %vm1986, %v1969, %v1501
        %v2003 = vsel %vm1986, %v1970, %v1503
        %v2004 = vsel %vm1986, %v1971, %v1505
        %v2005 = vsel %vm1986, %v1972, %v1507
        %v2006 = vsel %vm1986, %v1973, %v1509
        %v2007 = vsel %vm1986, %v1974, %v1511
        %v2008 = vsel %vm1986, %v1975, %v1513
        %v2009 = vsel %vm1986, %v1976, %v1515
        %v2010 = vsel %vm1986, %v1977, %v1517
        %v2011 = vsel %vm1986, %v1978, %v1519
        %v2012 = vsel %vm1986, %v1979, %v1521
        %v2013 = vsel %vm1986, %v1980, %v1523
        %v2014 = vsel %vm1986, %v1981, %v1525
        %v2015 = vsel %vm1986, %v1982, %v1527
        %v2016 = vsel %vm1986, %v1983, %v1529
        %v2017 = vsel %vm1986, %v1984, %v1531
        %v2018 = vsel %vm1986, %v1985, %v1533
        %vm2019 = vcmask 228352
        %v2020 = vsel %vm2019, %v1987, %v1599
        %v2021 = vsel %vm2019, %v1988, %v1601
        %v2022 = vsel %vm2019, %v1989, %v1603
        %v2023 = vsel %vm2019, %v1990, %v1605
        %v2024 = vsel %vm2019, %v1991, %v1607
        %v2025 = vsel %vm2019, %v1992, %v1609
        %v2026 = vsel %vm2019, %v1993, %v1611
        %v2027 = vsel %vm2019, %v1994, %v1613
        %v2028 = vsel %vm2019, %v1995, %v1615
        %v2029 = vsel %vm2019, %v1996, %v1617
        %v2030 = vsel %vm2019, %v1997, %v1619
        %v2031 = vsel %vm2019, %v1998, %v1621
        %v2032 = vsel %vm2019, %v1999, %v1623
        %v2033 = vsel %vm2019, %v2000, %v1625
        %v2034 = vsel %vm2019, %v2001, %v1627
        %v2035 = vsel %vm2019, %v2002, %v1629
        %v2036 = vsel %vm2019, %v2003, %v1631
        %v2037 = vsel %vm2019, %v2004, %v1633
        %v2038 = vsel %vm2019, %v2005, %v1635
        %v2039 = vsel %vm2019, %v2006, %v1637
        %v2040 = vsel %vm2019, %v2007, %v1639
        %v2041 = vsel %vm2019, %v2008, %v1641
        %v2042 = vsel %vm2019, %v2009, %v1643
        %v2043 = vsel %vm2019, %v2010, %v1645
        %v2044 = vsel %vm2019, %v2011, %v1647
        %v2045 = vsel %vm2019, %v2012, %v1649
        %v2046 = vsel %vm2019, %v2013, %v1651
        %v2047 = vsel %vm2019, %v2014, %v1653
        %v2048 = vsel %vm2019, %v2015, %v1655
        %v2049 = vsel %vm2019, %v2016, %v1657
        %v2050 = vsel %vm2019, %v2017, %v1659
        %v2051 = vsel %vm2019, %v2018, %v1661
        %vm2052 = vcmask 261120
        %v2053 = vsel %vm2052, %v2020, %v1727
        %v2054 = vsel %vm2052, %v2021, %v1729
        %v2055 = vsel %vm2052, %v2022, %v1731
        %v2056 = vsel %vm2052, %v2023, %v1733
        %v2057 = vsel %vm2052, %v2024, %v1735
        %v2058 = vsel %vm2052, %v2025, %v1737
        %v2059 = vsel %vm2052, %v2026, %v1739
        %v2060 = vsel %vm2052, %v2027, %v1741
        %v2061 = vsel %vm2052, %v2028, %v1743
        %v2062 = vsel %vm2052, %v2029, %v1745
        %v2063 = vsel %vm2052, %v2030, %v1747
        %v2064 = vsel %vm2052, %v2031, %v1749
        %v2065 = vsel %vm2052, %v2032, %v1751
        %v2066 = vsel %vm2052, %v2033, %v1753
        %v2067 = vsel %vm2052, %v2034, %v1755
        %v2068 = vsel %vm2052, %v2035, %v1757
        %v2069 = vsel %vm2052, %v2036, %v1759
        %v2070 = vsel %vm2052, %v2037, %v1761
        %v2071 = vsel %vm2052, %v2038, %v1763
        %v2072 = vsel %vm2052, %v2039, %v1765
        %v2073 = vsel %vm2052, %v2040, %v1767
        %v2074 = vsel %vm2052, %v2041, %v1769
        %v2075 = vsel %vm2052, %v2042, %v1771
        %v2076 = vsel %vm2052, %v2043, %v1773
        %v2077 = vsel %vm2052, %v2044, %v1775
        %v2078 = vsel %vm2052, %v2045, %v1777
        %v2079 = vsel %vm2052, %v2046, %v1779
        %v2080 = vsel %vm2052, %v2047, %v1781
        %v2081 = vsel %vm2052, %v2048, %v1783
        %v2082 = vsel %vm2052, %v2049, %v1785
        %v2083 = vsel %vm2052, %v2050, %v1787
        %v2084 = vsel %vm2052, %v2051, %v1789
        %v2085 = vpack.c.bf16 %v2054, %v2053
        %v2086 = vpack.c.bf16 %v2056, %v2055
        %v2087 = vpack.c.bf16 %v2058, %v2057
        %v2088 = vpack.c.bf16 %v2060, %v2059
        %v2089 = vpack.c.bf16 %v2062, %v2061
        %v2090 = vpack.c.bf16 %v2064, %v2063
        %v2091 = vpack.c.bf16 %v2066, %v2065
        %v2092 = vpack.c.bf16 %v2068, %v2067
        %v2093 = vpack.c.bf16 %v2070, %v2069
        %v2094 = vpack.c.bf16 %v2072, %v2071
        %v2095 = vpack.c.bf16 %v2074, %v2073
        %v2096 = vpack.c.bf16 %v2076, %v2075
        %v2097 = vpack.c.bf16 %v2078, %v2077
        %v2098 = vpack.c.bf16 %v2080, %v2079
        %v2099 = vpack.c.bf16 %v2082, %v2081
        %v2100 = vpack.c.bf16 %v2084, %v2083
        %v2101 = vld [vmem:[%s1] sm:$0xf]
        %v2102 = vld [vmem:[%s1 + $0x4] sm:$0xf]
        %v2103 = vld [vmem:[%s1 + $0x8] sm:$0xf]
        %v2104 = vld [vmem:[%s1 + $0xc] sm:$0xf]
        %v2105 = vld [vmem:[%s1 + $0x10] sm:$0x3]
        %v2106 = vld [vmem:[%s2] sm:$0x1]
        %v2108 = vlaneseq
        %v2109 = vshrl.u32 %v2108, 7
        %v2110 = vsub.s32 0, %v2109
        %v2111 = vrot.slane %v2106, %v2110
        %v2118 = vunpack.c.l.b16 %v2101
        %v2119 = vunpack.c.l.b16 %v2102
        %v2120 = vunpack.c.l.b16 %v2103
        %v2121 = vunpack.c.l.b16 %v2104
        %v2122 = vunpack.c.l.b16 %v2105
        %v2123 = vpack.c.b16 %v2119, %v2118
        %v2124 = vpack.c.b16 %v2121, %v2120
        %v2125 = vpack.c.b16 %v2122, %v2122
        %vm2128 = vcmask 293888
        %v2130 = vsel %vm2128, %v2085, 0
        %v2133 = vsel %vm2128, %v2086, 0
        %v2136 = vsel %vm2128, %v2087, 0
        %v2139 = vsel %vm2128, %v2088, 0
        %v2142 = vsel %vm2128, %v2089, 0
        %v2145 = vsel %vm2128, %v2090, 0
        %v2148 = vsel %vm2128, %v2091, 0
        %v2151 = vsel %vm2128, %v2092, 0
        %v2154 = vsel %vm2128, %v2093, 0
        %v2157 = vsel %vm2128, %v2094, 0
        %v2160 = vsel %vm2128, %v2095, 0
        %v2163 = vsel %vm2128, %v2096, 0
        %v2166 = vsel %vm2128, %v2097, 0
        %v2169 = vsel %vm2128, %v2098, 0
        %v2172 = vsel %vm2128, %v2099, 0
        %v2175 = vsel %vm2128, %v2100, 0
        %vm2177 = vcmask 1041408
        %v2179 = vsel %vm2177, %v2125, 0
        %2181 = vmatprep.subr.bf16.mxu0 0
        %2182 = vmatpush1.bf16.msra.mxu0 %v2123
        %2183 = vmatprep.subr.bf16.mxu0 0
        %2184 = vmatpush1.bf16.msra.mxu0 %v2124
        %2185 = vmatprep.subr.bf16.mxu0 0
        %2186 = vmatpush1.bf16.msra.mxu0 %v2179
        %2187 = vmatprep.subr.bf16.mxu0 0
        %2188 = vmatpush1.bf16.msra.mxu0 0
        %2189 = vmatprep.subr.bf16.mxu0 0
        %2190 = vmatpush1.bf16.msra.mxu0 0
        %2191 = vmatprep.subr.bf16.mxu0 0
        %2192 = vmatpush1.bf16.msra.mxu0 0
        %2193 = vmatprep.subr.bf16.mxu0 0
        %2194 = vmatpush1.bf16.msra.mxu0 0
        %2195 = vmatprep.subr.bf16.mxu0 0
        %2196 = vmatpush1.bf16.msra.mxu0 0
        %2197 = vmatprep.subr.bf16.mxu0 0
        %2198 = vmatpush1.bf16.msra.mxu0 0
        %2199 = vmatprep.subr.bf16.mxu0 0
        %2200 = vmatpush1.bf16.msra.mxu0 0
        %2201 = vmatprep.subr.bf16.mxu0 0
        %2202 = vmatpush1.bf16.msra.mxu0 0
        %2203 = vmatprep.subr.bf16.mxu0 0
        %2204 = vmatpush1.bf16.msra.mxu0 0
        %2205 = vmatprep.subr.bf16.mxu0 0
        %2206 = vmatpush1.bf16.msra.mxu0 0
        %2207 = vmatprep.subr.bf16.mxu0 0
        %2208 = vmatpush1.bf16.msra.mxu0 0
        %2209 = vmatprep.subr.bf16.mxu0 0
        %2210 = vmatpush1.bf16.msra.mxu0 0
        %2211 = vmatprep.subr.bf16.mxu0 0
        %2212 = vmatpush1.bf16.msra.mxu0 0
        %2213 = vmatprep.mubr.bf16.mxu0 0
        %2214 = vmatmul.mubr.bf16.gmra.mrb[0].mxu0 %v2130
        %v2215 = vpop.f32.mrb[0].mxu0
        %v2216 = vadd.f32 %v2111, %v2215
        %v2217 = vpop.f32.mrb[0].mxu0
        %v2218 = vpop.f32.mrb[0].mxu0
        %v2219 = vadd.f32 %v2111, %v2218
        %v2220 = vpop.f32.mrb[0].mxu0
        %2221 = vmatprep.mubr.bf16.mxu0 0
        %2222 = vmatmul.mubr.bf16.gmra.mrb[0].mxu0 %v2133
        %v2223 = vpop.f32.mrb[0].mxu0
        %v2224 = vadd.f32 %v2111, %v2223
        %v2225 = vpop.f32.mrb[0].mxu0
        %v2226 = vpop.f32.mrb[0].mxu0
        %v2227 = vadd.f32 %v2111, %v2226
        %v2228 = vpop.f32.mrb[0].mxu0
        %2229 = vmatprep.mubr.bf16.mxu0 0
        %2230 = vmatmul.mubr.bf16.gmra.mrb[0].mxu0 %v2136
        %v2231 = vpop.f32.mrb[0].mxu0
        %v2232 = vadd.f32 %v2111, %v2231
        %v2233 = vpop.f32.mrb[0].mxu0
        %v2234 = vpop.f32.mrb[0].mxu0
        %v2235 = vadd.f32 %v2111, %v2234
        %v2236 = vpop.f32.mrb[0].mxu0
        %2237 = vmatprep.mubr.bf16.mxu0 0
        %2238 = vmatmul.mubr.bf16.gmra.mrb[0].mxu0 %v2139
        %v2239 = vpop.f32.mrb[0].mxu0
        %v2240 = vadd.f32 %v2111, %v2239
        %v2241 = vpop.f32.mrb[0].mxu0
        %v2242 = vpop.f32.mrb[0].mxu0
        %v2243 = vadd.f32 %v2111, %v2242
        %v2244 = vpop.f32.mrb[0].mxu0
        %2245 = vmatprep.mubr.bf16.mxu0 0
        %2246 = vmatmul.mubr.bf16.gmra.mrb[0].mxu0 %v2142
        %v2247 = vpop.f32.mrb[0].mxu0
        %v2248 = vadd.f32 %v2111, %v2247
        %v2249 = vpop.f32.mrb[0].mxu0
        %v2250 = vpop.f32.mrb[0].mxu0
        %v2251 = vadd.f32 %v2111, %v2250
        %v2252 = vpop.f32.mrb[0].mxu0
        %2253 = vmatprep.mubr.bf16.mxu0 0
        %2254 = vmatmul.mubr.bf16.gmra.mrb[0].mxu0 %v2145
        %v2255 = vpop.f32.mrb[0].mxu0
        %v2256 = vadd.f32 %v2111, %v2255
        %v2257 = vpop.f32.mrb[0].mxu0
        %v2258 = vpop.f32.mrb[0].mxu0
        %v2259 = vadd.f32 %v2111, %v2258
        %v2260 = vpop.f32.mrb[0].mxu0
        %2261 = vmatprep.mubr.bf16.mxu0 0
        %2262 = vmatmul.mubr.bf16.gmra.mrb[0].mxu0 %v2148
        %v2263 = vpop.f32.mrb[0].mxu0
        %v2264 = vadd.f32 %v2111, %v2263
        %v2265 = vpop.f32.mrb[0].mxu0
        %v2266 = vpop.f32.mrb[0].mxu0
        %v2267 = vadd.f32 %v2111, %v2266
        %v2268 = vpop.f32.mrb[0].mxu0
        %2269 = vmatprep.mubr.bf16.mxu0 0
        %2270 = vmatmul.mubr.bf16.gmra.mrb[0].mxu0 %v2151
        %v2271 = vpop.f32.mrb[0].mxu0
        %v2272 = vadd.f32 %v2111, %v2271
        %v2273 = vpop.f32.mrb[0].mxu0
        %v2274 = vpop.f32.mrb[0].mxu0
        %v2275 = vadd.f32 %v2111, %v2274
        %v2276 = vpop.f32.mrb[0].mxu0
        %2277 = vmatprep.mubr.bf16.mxu0 0
        %2278 = vmatmul.mubr.bf16.gmra.mrb[0].mxu0 %v2154
        %v2279 = vpop.f32.mrb[0].mxu0
        %v2280 = vadd.f32 %v2111, %v2279
        %v2281 = vpop.f32.mrb[0].mxu0
        %v2282 = vpop.f32.mrb[0].mxu0
        %v2283 = vadd.f32 %v2111, %v2282
        %v2284 = vpop.f32.mrb[0].mxu0
        %2285 = vmatprep.mubr.bf16.mxu0 0
        %2286 = vmatmul.mubr.bf16.gmra.mrb[0].mxu0 %v2157
        %v2287 = vpop.f32.mrb[0].mxu0
        %v2288 = vadd.f32 %v2111, %v2287
        %v2289 = vpop.f32.mrb[0].mxu0
        %v2290 = vpop.f32.mrb[0].mxu0
        %v2291 = vadd.f32 %v2111, %v2290
        %v2292 = vpop.f32.mrb[0].mxu0
        %2293 = vmatprep.mubr.bf16.mxu0 0
        %2294 = vmatmul.mubr.bf16.gmra.mrb[0].mxu0 %v2160
        %v2295 = vpop.f32.mrb[0].mxu0
        %v2296 = vadd.f32 %v2111, %v2295
        %v2297 = vpop.f32.mrb[0].mxu0
        %v2298 = vpop.f32.mrb[0].mxu0
        %v2299 = vadd.f32 %v2111, %v2298
        %v2300 = vpop.f32.mrb[0].mxu0
        %2301 = vmatprep.mubr.bf16.mxu0 0
        %2302 = vmatmul.mubr.bf16.gmra.mrb[0].mxu0 %v2163
        %v2303 = vpop.f32.mrb[0].mxu0
        %v2304 = vadd.f32 %v2111, %v2303
        %v2305 = vpop.f32.mrb[0].mxu0
        %v2306 = vpop.f32.mrb[0].mxu0
        %v2307 = vadd.f32 %v2111, %v2306
        %v2308 = vpop.f32.mrb[0].mxu0
        %2309 = vmatprep.mubr.bf16.mxu0 0
        %2310 = vmatmul.mubr.bf16.gmra.mrb[0].mxu0 %v2166
        %v2311 = vpop.f32.mrb[0].mxu0
        %v2312 = vadd.f32 %v2111, %v2311
        %v2313 = vpop.f32.mrb[0].mxu0
        %v2314 = vpop.f32.mrb[0].mxu0
        %v2315 = vadd.f32 %v2111, %v2314
        %v2316 = vpop.f32.mrb[0].mxu0
        %2317 = vmatprep.mubr.bf16.mxu0 0
        %2318 = vmatmul.mubr.bf16.gmra.mrb[0].mxu0 %v2169
        %v2319 = vpop.f32.mrb[0].mxu0
        %v2320 = vadd.f32 %v2111, %v2319
        %v2321 = vpop.f32.mrb[0].mxu0
        %v2322 = vpop.f32.mrb[0].mxu0
        %v2323 = vadd.f32 %v2111, %v2322
        %v2324 = vpop.f32.mrb[0].mxu0
        %2325 = vmatprep.mubr.bf16.mxu0 0
        %2326 = vmatmul.mubr.bf16.gmra.mrb[0].mxu0 %v2172
        %v2327 = vpop.f32.mrb[0].mxu0
        %v2328 = vadd.f32 %v2111, %v2327
        %v2329 = vpop.f32.mrb[0].mxu0
        %v2330 = vpop.f32.mrb[0].mxu0
        %v2331 = vadd.f32 %v2111, %v2330
        %v2332 = vpop.f32.mrb[0].mxu0
        %2333 = vmatprep.mubr.bf16.mxu0 0
        %2334 = vmatmul.mubr.bf16.gmra.mrb[0].mxu0 %v2175
        %v2335 = vpop.f32.mrb[0].mxu0
        %v2336 = vadd.f32 %v2111, %v2335
        %v2337 = vpop.f32.mrb[0].mxu0
        %v2338 = vpop.f32.mrb[0].mxu0
        %v2339 = vadd.f32 %v2111, %v2338
        %v2340 = vpop.f32.mrb[0].mxu0
        %2341 = vdwg.mxu0
        %v2342 = vmul.f32 %v2216, 0.2
        %v2343 = vmul.f32 %v2219, 0.2
        %v2344 = vmul.f32 %v2224, 0.2
        %v2345 = vmul.f32 %v2227, 0.2
        %v2346 = vmul.f32 %v2232, 0.2
        %v2347 = vmul.f32 %v2235, 0.2
        %v2348 = vmul.f32 %v2240, 0.2
        %v2349 = vmul.f32 %v2243, 0.2
        %v2350 = vmul.f32 %v2248, 0.2
        %v2351 = vmul.f32 %v2251, 0.2
        %v2352 = vmul.f32 %v2256, 0.2
        %v2353 = vmul.f32 %v2259, 0.2
        %v2354 = vmul.f32 %v2264, 0.2
        %v2355 = vmul.f32 %v2267, 0.2
        %v2356 = vmul.f32 %v2272, 0.2
        %v2357 = vmul.f32 %v2275, 0.2
        %v2358 = vmul.f32 %v2280, 0.2
        %v2359 = vmul.f32 %v2283, 0.2
        %v2360 = vmul.f32 %v2288, 0.2
        %v2361 = vmul.f32 %v2291, 0.2
        %v2362 = vmul.f32 %v2296, 0.2
        %v2363 = vmul.f32 %v2299, 0.2
        %v2364 = vmul.f32 %v2304, 0.2
        %v2365 = vmul.f32 %v2307, 0.2
        %v2366 = vmul.f32 %v2312, 0.2
        %v2367 = vmul.f32 %v2315, 0.2
        %v2368 = vmul.f32 %v2320, 0.2
        %v2369 = vmul.f32 %v2323, 0.2
        %v2370 = vmul.f32 %v2328, 0.2
        %v2371 = vmul.f32 %v2331, 0.2
        %v2372 = vmul.f32 %v2336, 0.2
        %v2373 = vmul.f32 %v2339, 0.2
        %v2374 = vmax.f32 %v2216, %v2342
        %v2375 = vmax.f32 %v2219, %v2343
        %v2376 = vmax.f32 %v2224, %v2344
        %v2377 = vmax.f32 %v2227, %v2345
        %v2378 = vmax.f32 %v2232, %v2346
        %v2379 = vmax.f32 %v2235, %v2347
        %v2380 = vmax.f32 %v2240, %v2348
        %v2381 = vmax.f32 %v2243, %v2349
        %v2382 = vmax.f32 %v2248, %v2350
        %v2383 = vmax.f32 %v2251, %v2351
        %v2384 = vmax.f32 %v2256, %v2352
        %v2385 = vmax.f32 %v2259, %v2353
        %v2386 = vmax.f32 %v2264, %v2354
        %v2387 = vmax.f32 %v2267, %v2355
        %v2388 = vmax.f32 %v2272, %v2356
        %v2389 = vmax.f32 %v2275, %v2357
        %v2390 = vmax.f32 %v2280, %v2358
        %v2391 = vmax.f32 %v2283, %v2359
        %v2392 = vmax.f32 %v2288, %v2360
        %v2393 = vmax.f32 %v2291, %v2361
        %v2394 = vmax.f32 %v2296, %v2362
        %v2395 = vmax.f32 %v2299, %v2363
        %v2396 = vmax.f32 %v2304, %v2364
        %v2397 = vmax.f32 %v2307, %v2365
        %v2398 = vmax.f32 %v2312, %v2366
        %v2399 = vmax.f32 %v2315, %v2367
        %v2400 = vmax.f32 %v2320, %v2368
        %v2401 = vmax.f32 %v2323, %v2369
        %v2402 = vmax.f32 %v2328, %v2370
        %v2403 = vmax.f32 %v2331, %v2371
        %v2404 = vmax.f32 %v2336, %v2372
        %v2405 = vmax.f32 %v2339, %v2373
        %s2406 = scalar_lea.vmem [#allocation3], 24
        %2407 = vst.msk [vmem:[%s2406 + $0x1] sm:$0xff] %vm335, %v2374
        %2408 = vst.msk [vmem:[%s2406 + $0x9] sm:$0xff] %vm335, %v2375
        %2409 = vst.msk [vmem:[%s2406 + $0x19] sm:$0xff] %vm335, %v2376
        %2410 = vst.msk [vmem:[%s2406 + $0x21] sm:$0xff] %vm335, %v2377
        %2411 = vst.msk [vmem:[%s2406 + $0x31] sm:$0xff] %vm335, %v2378
        %2412 = vst.msk [vmem:[%s2406 + $0x39] sm:$0xff] %vm335, %v2379
        %2413 = vst.msk [vmem:[%s2406 + $0x49] sm:$0xff] %vm335, %v2380
        %2414 = vst.msk [vmem:[%s2406 + $0x51] sm:$0xff] %vm335, %v2381
        %2415 = vst.msk [vmem:[%s2406 + $0x61] sm:$0xff] %vm335, %v2382
        %2416 = vst.msk [vmem:[%s2406 + $0x69] sm:$0xff] %vm335, %v2383
        %2417 = vst.msk [vmem:[%s2406 + $0x79] sm:$0xff] %vm335, %v2384
        %2418 = vst.msk [vmem:[%s2406 + $0x81] sm:$0xff] %vm335, %v2385
        %2419 = vst.msk [vmem:[%s2406 + $0x91] sm:$0xff] %vm335, %v2386
        %2420 = vst.msk [vmem:[%s2406 + $0x99] sm:$0xff] %vm335, %v2387
        %2421 = vst.msk [vmem:[%s2406 + $0xa9] sm:$0xff] %vm335, %v2388
        %2422 = vst.msk [vmem:[%s2406 + $0xb1] sm:$0xff] %vm335, %v2389
        %2423 = vst.msk [vmem:[%s2406 + $0xc1] sm:$0xff] %vm335, %v2390
        %2424 = vst.msk [vmem:[%s2406 + $0xc9] sm:$0xff] %vm335, %v2391
        %2425 = vst.msk [vmem:[%s2406 + $0xd9] sm:$0xff] %vm335, %v2392
        %2426 = vst.msk [vmem:[%s2406 + $0xe1] sm:$0xff] %vm335, %v2393
        %2427 = vst.msk [vmem:[%s2406 + $0xf1] sm:$0xff] %vm335, %v2394
        %2428 = vst.msk [vmem:[%s2406 + $0xf9] sm:$0xff] %vm335, %v2395
        %2429 = vst.msk [vmem:[%s2406 + $0x109] sm:$0xff] %vm335, %v2396
        %2430 = vst.msk [vmem:[%s2406 + $0x111] sm:$0xff] %vm335, %v2397
        %2431 = vst.msk [vmem:[%s2406 + $0x121] sm:$0xff] %vm335, %v2398
        %2432 = vst.msk [vmem:[%s2406 + $0x129] sm:$0xff] %vm335, %v2399
        %2433 = vst.msk [vmem:[%s2406 + $0x139] sm:$0xff] %vm335, %v2400
        %2434 = vst.msk [vmem:[%s2406 + $0x141] sm:$0xff] %vm335, %v2401
        %2435 = vst.msk [vmem:[%s2406 + $0x151] sm:$0xff] %vm335, %v2402
        %2436 = vst.msk [vmem:[%s2406 + $0x159] sm:$0xff] %vm335, %v2403
        %2437 = vst.msk [vmem:[%s2406 + $0x169] sm:$0xff] %vm335, %v2404
        %2438 = vst.msk [vmem:[%s2406 + $0x171] sm:$0xff] %vm335, %v2405
        %v2439 = vld [vmem:[#allocation3] sm:$0xff]
        %v2440 = vld [vmem:[#allocation3 + $0x8] sm:$0xff]
        %v2441 = vld [vmem:[#allocation3 + $0x18] sm:$0xff]
        %v2442 = vld [vmem:[#allocation3 + $0x20] sm:$0xff]
        %v2443 = vld [vmem:[#allocation3 + $0x30] sm:$0xff]
        %v2444 = vld [vmem:[#allocation3 + $0x38] sm:$0xff]
        %v2445 = vld [vmem:[#allocation3 + $0x48] sm:$0xff]
        %v2446 = vld [vmem:[#allocation3 + $0x50] sm:$0xff]
        %v2447 = vld [vmem:[#allocation3 + $0x60] sm:$0xff]
        %v2448 = vld [vmem:[#allocation3 + $0x68] sm:$0xff]
        %v2449 = vld [vmem:[#allocation3 + $0x78] sm:$0xff]
        %v2450 = vld [vmem:[#allocation3 + $0x80] sm:$0xff]
        %v2451 = vld [vmem:[#allocation3 + $0x90] sm:$0xff]
        %v2452 = vld [vmem:[#allocation3 + $0x98] sm:$0xff]
        %v2453 = vld [vmem:[#allocation3 + $0xa8] sm:$0xff]
        %v2454 = vld [vmem:[#allocation3 + $0xb0] sm:$0xff]
        %v2455 = vld [vmem:[#allocation3 + $0xc0] sm:$0xff]
        %v2456 = vld [vmem:[#allocation3 + $0xc8] sm:$0xff]
        %v2457 = vld [vmem:[#allocation3 + $0xd8] sm:$0xff]
        %v2458 = vld [vmem:[#allocation3 + $0xe0] sm:$0xff]
        %v2459 = vld [vmem:[#allocation3 + $0xf0] sm:$0xff]
        %v2460 = vld [vmem:[#allocation3 + $0xf8] sm:$0xff]
        %v2461 = vld [vmem:[#allocation3 + $0x108] sm:$0xff]
        %v2462 = vld [vmem:[#allocation3 + $0x110] sm:$0xff]
        %v2463 = vld [vmem:[#allocation3 + $0x120] sm:$0xff]
        %v2464 = vld [vmem:[#allocation3 + $0x128] sm:$0xff]
        %v2465 = vld [vmem:[#allocation3 + $0x138] sm:$0xff]
        %v2466 = vld [vmem:[#allocation3 + $0x140] sm:$0xff]
        %v2467 = vld [vmem:[#allocation3 + $0x150] sm:$0xff]
        %v2468 = vld [vmem:[#allocation3 + $0x158] sm:$0xff]
        %v2469 = vld [vmem:[#allocation3 + $0x168] sm:$0xff]
        %v2470 = vld [vmem:[#allocation3 + $0x170] sm:$0xff]
        %v2471 = vld [vmem:[#allocation3 + $0x1] sm:$0xff]
        %v2472 = vld [vmem:[#allocation3 + $0x9] sm:$0xff]
        %v2473 = vld [vmem:[#allocation3 + $0x19] sm:$0xff]
        %v2474 = vld [vmem:[#allocation3 + $0x21] sm:$0xff]
        %v2475 = vld [vmem:[#allocation3 + $0x31] sm:$0xff]
        %v2476 = vld [vmem:[#allocation3 + $0x39] sm:$0xff]
        %v2477 = vld [vmem:[#allocation3 + $0x49] sm:$0xff]
        %v2478 = vld [vmem:[#allocation3 + $0x51] sm:$0xff]
        %v2479 = vld [vmem:[#allocation3 + $0x61] sm:$0xff]
        %v2480 = vld [vmem:[#allocation3 + $0x69] sm:$0xff]
        %v2481 = vld [vmem:[#allocation3 + $0x79] sm:$0xff]
        %v2482 = vld [vmem:[#allocation3 + $0x81] sm:$0xff]
        %v2483 = vld [vmem:[#allocation3 + $0x91] sm:$0xff]
        %v2484 = vld [vmem:[#allocation3 + $0x99] sm:$0xff]
        %v2485 = vld [vmem:[#allocation3 + $0xa9] sm:$0xff]
        %v2486 = vld [vmem:[#allocation3 + $0xb1] sm:$0xff]
        %v2487 = vld [vmem:[#allocation3 + $0xc1] sm:$0xff]
        %v2488 = vld [vmem:[#allocation3 + $0xc9] sm:$0xff]
        %v2489 = vld [vmem:[#allocation3 + $0xd9] sm:$0xff]
        %v2490 = vld [vmem:[#allocation3 + $0xe1] sm:$0xff]
        %v2491 = vld [vmem:[#allocation3 + $0xf1] sm:$0xff]
        %v2492 = vld [vmem:[#allocation3 + $0xf9] sm:$0xff]
        %v2493 = vld [vmem:[#allocation3 + $0x109] sm:$0xff]
        %v2494 = vld [vmem:[#allocation3 + $0x111] sm:$0xff]
        %v2495 = vld [vmem:[#allocation3 + $0x121] sm:$0xff]
        %v2496 = vld [vmem:[#allocation3 + $0x129] sm:$0xff]
        %v2497 = vld [vmem:[#allocation3 + $0x139] sm:$0xff]
        %v2498 = vld [vmem:[#allocation3 + $0x141] sm:$0xff]
        %v2499 = vld [vmem:[#allocation3 + $0x151] sm:$0xff]
        %v2500 = vld [vmem:[#allocation3 + $0x159] sm:$0xff]
        %v2501 = vld [vmem:[#allocation3 + $0x169] sm:$0xff]
        %v2502 = vld [vmem:[#allocation3 + $0x171] sm:$0xff]
        %v2503 = vld [vmem:[#allocation3 + $0x2] sm:$0xff]
        %v2504 = vld [vmem:[#allocation3 + $0xa] sm:$0xff]
        %v2505 = vld [vmem:[#allocation3 + $0x1a] sm:$0xff]
        %v2506 = vld [vmem:[#allocation3 + $0x22] sm:$0xff]
        %v2507 = vld [vmem:[#allocation3 + $0x32] sm:$0xff]
        %v2508 = vld [vmem:[#allocation3 + $0x3a] sm:$0xff]
        %v2509 = vld [vmem:[#allocation3 + $0x4a] sm:$0xff]
        %v2510 = vld [vmem:[#allocation3 + $0x52] sm:$0xff]
        %v2511 = vld [vmem:[#allocation3 + $0x62] sm:$0xff]
        %v2512 = vld [vmem:[#allocation3 + $0x6a] sm:$0xff]
        %v2513 = vld [vmem:[#allocation3 + $0x7a] sm:$0xff]
        %v2514 = vld [vmem:[#allocation3 + $0x82] sm:$0xff]
        %v2515 = vld [vmem:[#allocation3 + $0x92] sm:$0xff]
        %v2516 = vld [vmem:[#allocation3 + $0x9a] sm:$0xff]
        %v2517 = vld [vmem:[#allocation3 + $0xaa] sm:$0xff]
        %v2518 = vld [vmem:[#allocation3 + $0xb2] sm:$0xff]
        %v2519 = vld [vmem:[#allocation3 + $0xc2] sm:$0xff]
        %v2520 = vld [vmem:[#allocation3 + $0xca] sm:$0xff]
        %v2521 = vld [vmem:[#allocation3 + $0xda] sm:$0xff]
        %v2522 = vld [vmem:[#allocation3 + $0xe2] sm:$0xff]
        %v2523 = vld [vmem:[#allocation3 + $0xf2] sm:$0xff]
        %v2524 = vld [vmem:[#allocation3 + $0xfa] sm:$0xff]
        %v2525 = vld [vmem:[#allocation3 + $0x10a] sm:$0xff]
        %v2526 = vld [vmem:[#allocation3 + $0x112] sm:$0xff]
        %v2527 = vld [vmem:[#allocation3 + $0x122] sm:$0xff]
        %v2528 = vld [vmem:[#allocation3 + $0x12a] sm:$0xff]
        %v2529 = vld [vmem:[#allocation3 + $0x13a] sm:$0xff]
        %v2530 = vld [vmem:[#allocation3 + $0x142] sm:$0xff]
        %v2531 = vld [vmem:[#allocation3 + $0x152] sm:$0xff]
        %v2532 = vld [vmem:[#allocation3 + $0x15a] sm:$0xff]
        %v2533 = vld [vmem:[#allocation3 + $0x16a] sm:$0xff]
        %v2534 = vld [vmem:[#allocation3 + $0x172] sm:$0xff]
        %v2535 = vld [vmem:[%s2406] sm:$0xff]
        %v2536 = vld [vmem:[%s2406 + $0x8] sm:$0xff]
        %v2537 = vld [vmem:[%s2406 + $0x18] sm:$0xff]
        %v2538 = vld [vmem:[%s2406 + $0x20] sm:$0xff]
        %v2539 = vld [vmem:[%s2406 + $0x30] sm:$0xff]
        %v2540 = vld [vmem:[%s2406 + $0x38] sm:$0xff]
        %v2541 = vld [vmem:[%s2406 + $0x48] sm:$0xff]
        %v2542 = vld [vmem:[%s2406 + $0x50] sm:$0xff]
        %v2543 = vld [vmem:[%s2406 + $0x60] sm:$0xff]
        %v2544 = vld [vmem:[%s2406 + $0x68] sm:$0xff]
        %v2545 = vld [vmem:[%s2406 + $0x78] sm:$0xff]
        %v2546 = vld [vmem:[%s2406 + $0x80] sm:$0xff]
        %v2547 = vld [vmem:[%s2406 + $0x90] sm:$0xff]
        %v2548 = vld [vmem:[%s2406 + $0x98] sm:$0xff]
        %v2549 = vld [vmem:[%s2406 + $0xa8] sm:$0xff]
        %v2550 = vld [vmem:[%s2406 + $0xb0] sm:$0xff]
        %v2551 = vld [vmem:[%s2406 + $0xc0] sm:$0xff]
        %v2552 = vld [vmem:[%s2406 + $0xc8] sm:$0xff]
        %v2553 = vld [vmem:[%s2406 + $0xd8] sm:$0xff]
        %v2554 = vld [vmem:[%s2406 + $0xe0] sm:$0xff]
        %v2555 = vld [vmem:[%s2406 + $0xf0] sm:$0xff]
        %v2556 = vld [vmem:[%s2406 + $0xf8] sm:$0xff]
        %v2557 = vld [vmem:[%s2406 + $0x108] sm:$0xff]
        %v2558 = vld [vmem:[%s2406 + $0x110] sm:$0xff]
        %v2559 = vld [vmem:[%s2406 + $0x120] sm:$0xff]
        %v2560 = vld [vmem:[%s2406 + $0x128] sm:$0xff]
        %v2561 = vld [vmem:[%s2406 + $0x138] sm:$0xff]
        %v2562 = vld [vmem:[%s2406 + $0x140] sm:$0xff]
        %v2563 = vld [vmem:[%s2406 + $0x150] sm:$0xff]
        %v2564 = vld [vmem:[%s2406 + $0x158] sm:$0xff]
        %v2565 = vld [vmem:[%s2406 + $0x168] sm:$0xff]
        %v2566 = vld [vmem:[%s2406 + $0x170] sm:$0xff]
        %v2567 = vld [vmem:[%s2406 + $0x1] sm:$0xff]
        %v2568 = vld [vmem:[%s2406 + $0x9] sm:$0xff]
        %v2569 = vld [vmem:[%s2406 + $0x19] sm:$0xff]
        %v2570 = vld [vmem:[%s2406 + $0x21] sm:$0xff]
        %v2571 = vld [vmem:[%s2406 + $0x31] sm:$0xff]
        %v2572 = vld [vmem:[%s2406 + $0x39] sm:$0xff]
        %v2573 = vld [vmem:[%s2406 + $0x49] sm:$0xff]
        %v2574 = vld [vmem:[%s2406 + $0x51] sm:$0xff]
        %v2575 = vld [vmem:[%s2406 + $0x61] sm:$0xff]
        %v2576 = vld [vmem:[%s2406 + $0x69] sm:$0xff]
        %v2577 = vld [vmem:[%s2406 + $0x79] sm:$0xff]
        %v2578 = vld [vmem:[%s2406 + $0x81] sm:$0xff]
        %v2579 = vld [vmem:[%s2406 + $0x91] sm:$0xff]
        %v2580 = vld [vmem:[%s2406 + $0x99] sm:$0xff]
        %v2581 = vld [vmem:[%s2406 + $0xa9] sm:$0xff]
        %v2582 = vld [vmem:[%s2406 + $0xb1] sm:$0xff]
        %v2583 = vld [vmem:[%s2406 + $0xc1] sm:$0xff]
        %v2584 = vld [vmem:[%s2406 + $0xc9] sm:$0xff]
        %v2585 = vld [vmem:[%s2406 + $0xd9] sm:$0xff]
        %v2586 = vld [vmem:[%s2406 + $0xe1] sm:$0xff]
        %v2587 = vld [vmem:[%s2406 + $0xf1] sm:$0xff]
        %v2588 = vld [vmem:[%s2406 + $0xf9] sm:$0xff]
        %v2589 = vld [vmem:[%s2406 + $0x109] sm:$0xff]
        %v2590 = vld [vmem:[%s2406 + $0x111] sm:$0xff]
        %v2591 = vld [vmem:[%s2406 + $0x121] sm:$0xff]
        %v2592 = vld [vmem:[%s2406 + $0x129] sm:$0xff]
        %v2593 = vld [vmem:[%s2406 + $0x139] sm:$0xff]
        %v2594 = vld [vmem:[%s2406 + $0x141] sm:$0xff]
        %v2595 = vld [vmem:[%s2406 + $0x151] sm:$0xff]
        %v2596 = vld [vmem:[%s2406 + $0x159] sm:$0xff]
        %v2597 = vld [vmem:[%s2406 + $0x169] sm:$0xff]
        %v2598 = vld [vmem:[%s2406 + $0x171] sm:$0xff]
        %v2599 = vld [vmem:[%s2406 + $0x2] sm:$0xff]
        %v2600 = vld [vmem:[%s2406 + $0xa] sm:$0xff]
        %v2601 = vld [vmem:[%s2406 + $0x1a] sm:$0xff]
        %v2602 = vld [vmem:[%s2406 + $0x22] sm:$0xff]
        %v2603 = vld [vmem:[%s2406 + $0x32] sm:$0xff]
        %v2604 = vld [vmem:[%s2406 + $0x3a] sm:$0xff]
        %v2605 = vld [vmem:[%s2406 + $0x4a] sm:$0xff]
        %v2606 = vld [vmem:[%s2406 + $0x52] sm:$0xff]
        %v2607 = vld [vmem:[%s2406 + $0x62] sm:$0xff]
        %v2608 = vld [vmem:[%s2406 + $0x6a] sm:$0xff]
        %v2609 = vld [vmem:[%s2406 + $0x7a] sm:$0xff]
        %v2610 = vld [vmem:[%s2406 + $0x82] sm:$0xff]
        %v2611 = vld [vmem:[%s2406 + $0x92] sm:$0xff]
        %v2612 = vld [vmem:[%s2406 + $0x9a] sm:$0xff]
        %v2613 = vld [vmem:[%s2406 + $0xaa] sm:$0xff]
        %v2614 = vld [vmem:[%s2406 + $0xb2] sm:$0xff]
        %v2615 = vld [vmem:[%s2406 + $0xc2] sm:$0xff]
        %v2616 = vld [vmem:[%s2406 + $0xca] sm:$0xff]
        %v2617 = vld [vmem:[%s2406 + $0xda] sm:$0xff]
        %v2618 = vld [vmem:[%s2406 + $0xe2] sm:$0xff]
        %v2619 = vld [vmem:[%s2406 + $0xf2] sm:$0xff]
        %v2620 = vld [vmem:[%s2406 + $0xfa] sm:$0xff]
        %v2621 = vld [vmem:[%s2406 + $0x10a] sm:$0xff]
        %v2622 = vld [vmem:[%s2406 + $0x112] sm:$0xff]
        %v2623 = vld [vmem:[%s2406 + $0x122] sm:$0xff]
        %v2624 = vld [vmem:[%s2406 + $0x12a] sm:$0xff]
        %v2625 = vld [vmem:[%s2406 + $0x13a] sm:$0xff]
        %v2626 = vld [vmem:[%s2406 + $0x142] sm:$0xff]
        %v2627 = vld [vmem:[%s2406 + $0x152] sm:$0xff]
        %v2628 = vld [vmem:[%s2406 + $0x15a] sm:$0xff]
        %v2629 = vld [vmem:[%s2406 + $0x16a] sm:$0xff]
        %v2630 = vld [vmem:[%s2406 + $0x172] sm:$0xff]
        %s2631 = scalar_lea.vmem [#allocation3], 48
        %v2632 = vld [vmem:[%s2631] sm:$0xff]
        %v2633 = vld [vmem:[%s2631 + $0x8] sm:$0xff]
        %v2634 = vld [vmem:[%s2631 + $0x18] sm:$0xff]
        %v2635 = vld [vmem:[%s2631 + $0x20] sm:$0xff]
        %v2636 = vld [vmem:[%s2631 + $0x30] sm:$0xff]
        %v2637 = vld [vmem:[%s2631 + $0x38] sm:$0xff]
        %v2638 = vld [vmem:[%s2631 + $0x48] sm:$0xff]
        %v2639 = vld [vmem:[%s2631 + $0x50] sm:$0xff]
        %v2640 = vld [vmem:[%s2631 + $0x60] sm:$0xff]
        %v2641 = vld [vmem:[%s2631 + $0x68] sm:$0xff]
        %v2642 = vld [vmem:[%s2631 + $0x78] sm:$0xff]
        %v2643 = vld [vmem:[%s2631 + $0x80] sm:$0xff]
        %v2644 = vld [vmem:[%s2631 + $0x90] sm:$0xff]
        %v2645 = vld [vmem:[%s2631 + $0x98] sm:$0xff]
        %v2646 = vld [vmem:[%s2631 + $0xa8] sm:$0xff]
        %v2647 = vld [vmem:[%s2631 + $0xb0] sm:$0xff]
        %v2648 = vld [vmem:[%s2631 + $0xc0] sm:$0xff]
        %v2649 = vld [vmem:[%s2631 + $0xc8] sm:$0xff]
        %v2650 = vld [vmem:[%s2631 + $0xd8] sm:$0xff]
        %v2651 = vld [vmem:[%s2631 + $0xe0] sm:$0xff]
        %v2652 = vld [vmem:[%s2631 + $0xf0] sm:$0xff]
        %v2653 = vld [vmem:[%s2631 + $0xf8] sm:$0xff]
        %v2654 = vld [vmem:[%s2631 + $0x108] sm:$0xff]
        %v2655 = vld [vmem:[%s2631 + $0x110] sm:$0xff]
        %v2656 = vld [vmem:[%s2631 + $0x120] sm:$0xff]
        %v2657 = vld [vmem:[%s2631 + $0x128] sm:$0xff]
        %v2658 = vld [vmem:[%s2631 + $0x138] sm:$0xff]
        %v2659 = vld [vmem:[%s2631 + $0x140] sm:$0xff]
        %v2660 = vld [vmem:[%s2631 + $0x150] sm:$0xff]
        %v2661 = vld [vmem:[%s2631 + $0x158] sm:$0xff]
        %v2662 = vld [vmem:[%s2631 + $0x168] sm:$0xff]
        %v2663 = vld [vmem:[%s2631 + $0x170] sm:$0xff]
        %v2664 = vld [vmem:[%s2631 + $0x1] sm:$0xff]
        %v2665 = vld [vmem:[%s2631 + $0x9] sm:$0xff]
        %v2666 = vld [vmem:[%s2631 + $0x19] sm:$0xff]
        %v2667 = vld [vmem:[%s2631 + $0x21] sm:$0xff]
        %v2668 = vld [vmem:[%s2631 + $0x31] sm:$0xff]
        %v2669 = vld [vmem:[%s2631 + $0x39] sm:$0xff]
        %v2670 = vld [vmem:[%s2631 + $0x49] sm:$0xff]
        %v2671 = vld [vmem:[%s2631 + $0x51] sm:$0xff]
        %v2672 = vld [vmem:[%s2631 + $0x61] sm:$0xff]
        %v2673 = vld [vmem:[%s2631 + $0x69] sm:$0xff]
        %v2674 = vld [vmem:[%s2631 + $0x79] sm:$0xff]
        %v2675 = vld [vmem:[%s2631 + $0x81] sm:$0xff]
        %v2676 = vld [vmem:[%s2631 + $0x91] sm:$0xff]
        %v2677 = vld [vmem:[%s2631 + $0x99] sm:$0xff]
        %v2678 = vld [vmem:[%s2631 + $0xa9] sm:$0xff]
        %v2679 = vld [vmem:[%s2631 + $0xb1] sm:$0xff]
        %v2680 = vld [vmem:[%s2631 + $0xc1] sm:$0xff]
        %v2681 = vld [vmem:[%s2631 + $0xc9] sm:$0xff]
        %v2682 = vld [vmem:[%s2631 + $0xd9] sm:$0xff]
        %v2683 = vld [vmem:[%s2631 + $0xe1] sm:$0xff]
        %v2684 = vld [vmem:[%s2631 + $0xf1] sm:$0xff]
        %v2685 = vld [vmem:[%s2631 + $0xf9] sm:$0xff]
        %v2686 = vld [vmem:[%s2631 + $0x109] sm:$0xff]
        %v2687 = vld [vmem:[%s2631 + $0x111] sm:$0xff]
        %v2688 = vld [vmem:[%s2631 + $0x121] sm:$0xff]
        %v2689 = vld [vmem:[%s2631 + $0x129] sm:$0xff]
        %v2690 = vld [vmem:[%s2631 + $0x139] sm:$0xff]
        %v2691 = vld [vmem:[%s2631 + $0x141] sm:$0xff]
        %v2692 = vld [vmem:[%s2631 + $0x151] sm:$0xff]
        %v2693 = vld [vmem:[%s2631 + $0x159] sm:$0xff]
        %v2694 = vld [vmem:[%s2631 + $0x169] sm:$0xff]
        %v2695 = vld [vmem:[%s2631 + $0x171] sm:$0xff]
        %v2696 = vld [vmem:[%s2631 + $0x2] sm:$0xff]
        %v2697 = vld [vmem:[%s2631 + $0xa] sm:$0xff]
        %v2698 = vld [vmem:[%s2631 + $0x1a] sm:$0xff]
        %v2699 = vld [vmem:[%s2631 + $0x22] sm:$0xff]
        %v2700 = vld [vmem:[%s2631 + $0x32] sm:$0xff]
        %v2701 = vld [vmem:[%s2631 + $0x3a] sm:$0xff]
        %v2702 = vld [vmem:[%s2631 + $0x4a] sm:$0xff]
        %v2703 = vld [vmem:[%s2631 + $0x52] sm:$0xff]
        %v2704 = vld [vmem:[%s2631 + $0x62] sm:$0xff]
        %v2705 = vld [vmem:[%s2631 + $0x6a] sm:$0xff]
        %v2706 = vld [vmem:[%s2631 + $0x7a] sm:$0xff]
        %v2707 = vld [vmem:[%s2631 + $0x82] sm:$0xff]
        %v2708 = vld [vmem:[%s2631 + $0x92] sm:$0xff]
        %v2709 = vld [vmem:[%s2631 + $0x9a] sm:$0xff]
        %v2710 = vld [vmem:[%s2631 + $0xaa] sm:$0xff]
        %v2711 = vld [vmem:[%s2631 + $0xb2] sm:$0xff]
        %v2712 = vld [vmem:[%s2631 + $0xc2] sm:$0xff]
        %v2713 = vld [vmem:[%s2631 + $0xca] sm:$0xff]
        %v2714 = vld [vmem:[%s2631 + $0xda] sm:$0xff]
        %v2715 = vld [vmem:[%s2631 + $0xe2] sm:$0xff]
        %v2716 = vld [vmem:[%s2631 + $0xf2] sm:$0xff]
        %v2717 = vld [vmem:[%s2631 + $0xfa] sm:$0xff]
        %v2718 = vld [vmem:[%s2631 + $0x10a] sm:$0xff]
        %v2719 = vld [vmem:[%s2631 + $0x112] sm:$0xff]
        %v2720 = vld [vmem:[%s2631 + $0x122] sm:$0xff]
        %v2721 = vld [vmem:[%s2631 + $0x12a] sm:$0xff]
        %v2722 = vld [vmem:[%s2631 + $0x13a] sm:$0xff]
        %v2723 = vld [vmem:[%s2631 + $0x142] sm:$0xff]
        %v2724 = vld [vmem:[%s2631 + $0x152] sm:$0xff]
        %v2725 = vld [vmem:[%s2631 + $0x15a] sm:$0xff]
        %v2726 = vld [vmem:[%s2631 + $0x16a] sm:$0xff]
        %v2727 = vld [vmem:[%s2631 + $0x172] sm:$0xff]
        %2760 = vrot.lane.b32.xlu0 %v2471, 64
        %v2761 = vpop.permute.xlu0 %2760
        %2762 = vrot.lane.b32.xlu0 %v2472, 64
        %v2763 = vpop.permute.xlu0 %2762
        %2764 = vrot.lane.b32.xlu0 %v2473, 64
        %v2765 = vpop.permute.xlu0 %2764
        %2766 = vrot.lane.b32.xlu0 %v2474, 64
        %v2767 = vpop.permute.xlu0 %2766
        %2768 = vrot.lane.b32.xlu0 %v2475, 64
        %v2769 = vpop.permute.xlu0 %2768
        %2770 = vrot.lane.b32.xlu0 %v2476, 64
        %v2771 = vpop.permute.xlu0 %2770
        %2772 = vrot.lane.b32.xlu0 %v2477, 64
        %v2773 = vpop.permute.xlu0 %2772
        %2774 = vrot.lane.b32.xlu0 %v2478, 64
        %v2775 = vpop.permute.xlu0 %2774
        %2776 = vrot.lane.b32.xlu0 %v2479, 64
        %v2777 = vpop.permute.xlu0 %2776
        %2778 = vrot.lane.b32.xlu0 %v2480, 64
        %v2779 = vpop.permute.xlu0 %2778
        %2780 = vrot.lane.b32.xlu0 %v2481, 64
        %v2781 = vpop.permute.xlu0 %2780
        %2782 = vrot.lane.b32.xlu0 %v2482, 64
        %v2783 = vpop.permute.xlu0 %2782
        %2784 = vrot.lane.b32.xlu0 %v2483, 64
        %v2785 = vpop.permute.xlu0 %2784
        %2786 = vrot.lane.b32.xlu0 %v2484, 64
        %v2787 = vpop.permute.xlu0 %2786
        %2788 = vrot.lane.b32.xlu0 %v2485, 64
        %v2789 = vpop.permute.xlu0 %2788
        %2790 = vrot.lane.b32.xlu0 %v2486, 64
        %v2791 = vpop.permute.xlu0 %2790
        %2792 = vrot.lane.b32.xlu0 %v2487, 64
        %v2793 = vpop.permute.xlu0 %2792
        %2794 = vrot.lane.b32.xlu0 %v2488, 64
        %v2795 = vpop.permute.xlu0 %2794
        %2796 = vrot.lane.b32.xlu0 %v2489, 64
        %v2797 = vpop.permute.xlu0 %2796
        %2798 = vrot.lane.b32.xlu0 %v2490, 64
        %v2799 = vpop.permute.xlu0 %2798
        %2800 = vrot.lane.b32.xlu0 %v2491, 64
        %v2801 = vpop.permute.xlu0 %2800
        %2802 = vrot.lane.b32.xlu0 %v2492, 64
        %v2803 = vpop.permute.xlu0 %2802
        %2804 = vrot.lane.b32.xlu0 %v2493, 64
        %v2805 = vpop.permute.xlu0 %2804
        %2806 = vrot.lane.b32.xlu0 %v2494, 64
        %v2807 = vpop.permute.xlu0 %2806
        %2808 = vrot.lane.b32.xlu0 %v2495, 64
        %v2809 = vpop.permute.xlu0 %2808
        %2810 = vrot.lane.b32.xlu0 %v2496, 64
        %v2811 = vpop.permute.xlu0 %2810
        %2812 = vrot.lane.b32.xlu0 %v2497, 64
        %v2813 = vpop.permute.xlu0 %2812
        %2814 = vrot.lane.b32.xlu0 %v2498, 64
        %v2815 = vpop.permute.xlu0 %2814
        %2816 = vrot.lane.b32.xlu0 %v2499, 64
        %v2817 = vpop.permute.xlu0 %2816
        %2818 = vrot.lane.b32.xlu0 %v2500, 64
        %v2819 = vpop.permute.xlu0 %2818
        %2820 = vrot.lane.b32.xlu0 %v2501, 64
        %v2821 = vpop.permute.xlu0 %2820
        %2822 = vrot.lane.b32.xlu0 %v2502, 64
        %v2823 = vpop.permute.xlu0 %2822
        %2888 = vrot.lane.b32.xlu0 %v2535, 64
        %v2889 = vpop.permute.xlu0 %2888
        %2890 = vrot.lane.b32.xlu0 %v2536, 64
        %v2891 = vpop.permute.xlu0 %2890
        %2892 = vrot.lane.b32.xlu0 %v2537, 64
        %v2893 = vpop.permute.xlu0 %2892
        %2894 = vrot.lane.b32.xlu0 %v2538, 64
        %v2895 = vpop.permute.xlu0 %2894
        %2896 = vrot.lane.b32.xlu0 %v2539, 64
        %v2897 = vpop.permute.xlu0 %2896
        %2898 = vrot.lane.b32.xlu0 %v2540, 64
        %v2899 = vpop.permute.xlu0 %2898
        %2900 = vrot.lane.b32.xlu0 %v2541, 64
        %v2901 = vpop.permute.xlu0 %2900
        %2902 = vrot.lane.b32.xlu0 %v2542, 64
        %v2903 = vpop.permute.xlu0 %2902
        %2904 = vrot.lane.b32.xlu0 %v2543, 64
        %v2905 = vpop.permute.xlu0 %2904
        %2906 = vrot.lane.b32.xlu0 %v2544, 64
        %v2907 = vpop.permute.xlu0 %2906
        %2908 = vrot.lane.b32.xlu0 %v2545, 64
        %v2909 = vpop.permute.xlu0 %2908
        %2910 = vrot.lane.b32.xlu0 %v2546, 64
        %v2911 = vpop.permute.xlu0 %2910
        %2912 = vrot.lane.b32.xlu0 %v2547, 64
        %v2913 = vpop.permute.xlu0 %2912
        %2914 = vrot.lane.b32.xlu0 %v2548, 64
        %v2915 = vpop.permute.xlu0 %2914
        %2916 = vrot.lane.b32.xlu0 %v2549, 64
        %v2917 = vpop.permute.xlu0 %2916
        %2918 = vrot.lane.b32.xlu0 %v2550, 64
        %v2919 = vpop.permute.xlu0 %2918
        %2920 = vrot.lane.b32.xlu0 %v2551, 64
        %v2921 = vpop.permute.xlu0 %2920
        %2922 = vrot.lane.b32.xlu0 %v2552, 64
        %v2923 = vpop.permute.xlu0 %2922
        %2924 = vrot.lane.b32.xlu0 %v2553, 64
        %v2925 = vpop.permute.xlu0 %2924
        %2926 = vrot.lane.b32.xlu0 %v2554, 64
        %v2927 = vpop.permute.xlu0 %2926
        %2928 = vrot.lane.b32.xlu0 %v2555, 64
        %v2929 = vpop.permute.xlu0 %2928
        %2930 = vrot.lane.b32.xlu0 %v2556, 64
        %v2931 = vpop.permute.xlu0 %2930
        %2932 = vrot.lane.b32.xlu0 %v2557, 64
        %v2933 = vpop.permute.xlu0 %2932
        %2934 = vrot.lane.b32.xlu0 %v2558, 64
        %v2935 = vpop.permute.xlu0 %2934
        %2936 = vrot.lane.b32.xlu0 %v2559, 64
        %v2937 = vpop.permute.xlu0 %2936
        %2938 = vrot.lane.b32.xlu0 %v2560, 64
        %v2939 = vpop.permute.xlu0 %2938
        %2940 = vrot.lane.b32.xlu0 %v2561, 64
        %v2941 = vpop.permute.xlu0 %2940
        %2942 = vrot.lane.b32.xlu0 %v2562, 64
        %v2943 = vpop.permute.xlu0 %2942
        %2944 = vrot.lane.b32.xlu0 %v2563, 64
        %v2945 = vpop.permute.xlu0 %2944
        %2946 = vrot.lane.b32.xlu0 %v2564, 64
        %v2947 = vpop.permute.xlu0 %2946
        %2948 = vrot.lane.b32.xlu0 %v2565, 64
        %v2949 = vpop.permute.xlu0 %2948
        %2950 = vrot.lane.b32.xlu0 %v2566, 64
        %v2951 = vpop.permute.xlu0 %2950
        %3016 = vrot.lane.b32.xlu0 %v2599, 64
        %v3017 = vpop.permute.xlu0 %3016
        %3018 = vrot.lane.b32.xlu0 %v2600, 64
        %v3019 = vpop.permute.xlu0 %3018
        %3020 = vrot.lane.b32.xlu0 %v2601, 64
        %v3021 = vpop.permute.xlu0 %3020
        %3022 = vrot.lane.b32.xlu0 %v2602, 64
        %v3023 = vpop.permute.xlu0 %3022
        %3024 = vrot.lane.b32.xlu0 %v2603, 64
        %v3025 = vpop.permute.xlu0 %3024
        %3026 = vrot.lane.b32.xlu0 %v2604, 64
        %v3027 = vpop.permute.xlu0 %3026
        %3028 = vrot.lane.b32.xlu0 %v2605, 64
        %v3029 = vpop.permute.xlu0 %3028
        %3030 = vrot.lane.b32.xlu0 %v2606, 64
        %v3031 = vpop.permute.xlu0 %3030
        %3032 = vrot.lane.b32.xlu0 %v2607, 64
        %v3033 = vpop.permute.xlu0 %3032
        %3034 = vrot.lane.b32.xlu0 %v2608, 64
        %v3035 = vpop.permute.xlu0 %3034
        %3036 = vrot.lane.b32.xlu0 %v2609, 64
        %v3037 = vpop.permute.xlu0 %3036
        %3038 = vrot.lane.b32.xlu0 %v2610, 64
        %v3039 = vpop.permute.xlu0 %3038
        %3040 = vrot.lane.b32.xlu0 %v2611, 64
        %v3041 = vpop.permute.xlu0 %3040
        %3042 = vrot.lane.b32.xlu0 %v2612, 64
        %v3043 = vpop.permute.xlu0 %3042
        %3044 = vrot.lane.b32.xlu0 %v2613, 64
        %v3045 = vpop.permute.xlu0 %3044
        %3046 = vrot.lane.b32.xlu0 %v2614, 64
        %v3047 = vpop.permute.xlu0 %3046
        %3048 = vrot.lane.b32.xlu0 %v2615, 64
        %v3049 = vpop.permute.xlu0 %3048
        %3050 = vrot.lane.b32.xlu0 %v2616, 64
        %v3051 = vpop.permute.xlu0 %3050
        %3052 = vrot.lane.b32.xlu0 %v2617, 64
        %v3053 = vpop.permute.xlu0 %3052
        %3054 = vrot.lane.b32.xlu0 %v2618, 64
        %v3055 = vpop.permute.xlu0 %3054
        %3056 = vrot.lane.b32.xlu0 %v2619, 64
        %v3057 = vpop.permute.xlu0 %3056
        %3058 = vrot.lane.b32.xlu0 %v2620, 64
        %v3059 = vpop.permute.xlu0 %3058
        %3060 = vrot.lane.b32.xlu0 %v2621, 64
        %v3061 = vpop.permute.xlu0 %3060
        %3062 = vrot.lane.b32.xlu0 %v2622, 64
        %v3063 = vpop.permute.xlu0 %3062
        %3064 = vrot.lane.b32.xlu0 %v2623, 64
        %v3065 = vpop.permute.xlu0 %3064
        %3066 = vrot.lane.b32.xlu0 %v2624, 64
        %v3067 = vpop.permute.xlu0 %3066
        %3068 = vrot.lane.b32.xlu0 %v2625, 64
        %v3069 = vpop.permute.xlu0 %3068
        %3070 = vrot.lane.b32.xlu0 %v2626, 64
        %v3071 = vpop.permute.xlu0 %3070
        %3072 = vrot.lane.b32.xlu0 %v2627, 64
        %v3073 = vpop.permute.xlu0 %3072
        %3074 = vrot.lane.b32.xlu0 %v2628, 64
        %v3075 = vpop.permute.xlu0 %3074
        %3076 = vrot.lane.b32.xlu0 %v2629, 64
        %v3077 = vpop.permute.xlu0 %3076
        %3078 = vrot.lane.b32.xlu0 %v2630, 64
        %v3079 = vpop.permute.xlu0 %3078
        %3144 = vrot.lane.b32.xlu0 %v2664, 64
        %v3145 = vpop.permute.xlu0 %3144
        %3146 = vrot.lane.b32.xlu0 %v2665, 64
        %v3147 = vpop.permute.xlu0 %3146
        %3148 = vrot.lane.b32.xlu0 %v2666, 64
        %v3149 = vpop.permute.xlu0 %3148
        %3150 = vrot.lane.b32.xlu0 %v2667, 64
        %v3151 = vpop.permute.xlu0 %3150
        %3152 = vrot.lane.b32.xlu0 %v2668, 64
        %v3153 = vpop.permute.xlu0 %3152
        %3154 = vrot.lane.b32.xlu0 %v2669, 64
        %v3155 = vpop.permute.xlu0 %3154
        %3156 = vrot.lane.b32.xlu0 %v2670, 64
        %v3157 = vpop.permute.xlu0 %3156
        %3158 = vrot.lane.b32.xlu0 %v2671, 64
        %v3159 = vpop.permute.xlu0 %3158
        %3160 = vrot.lane.b32.xlu0 %v2672, 64
        %v3161 = vpop.permute.xlu0 %3160
        %3162 = vrot.lane.b32.xlu0 %v2673, 64
        %v3163 = vpop.permute.xlu0 %3162
        %3164 = vrot.lane.b32.xlu0 %v2674, 64
        %v3165 = vpop.permute.xlu0 %3164
        %3166 = vrot.lane.b32.xlu0 %v2675, 64
        %v3167 = vpop.permute.xlu0 %3166
        %3168 = vrot.lane.b32.xlu0 %v2676, 64
        %v3169 = vpop.permute.xlu0 %3168
        %3170 = vrot.lane.b32.xlu0 %v2677, 64
        %v3171 = vpop.permute.xlu0 %3170
        %3172 = vrot.lane.b32.xlu0 %v2678, 64
        %v3173 = vpop.permute.xlu0 %3172
        %3174 = vrot.lane.b32.xlu0 %v2679, 64
        %v3175 = vpop.permute.xlu0 %3174
        %3176 = vrot.lane.b32.xlu0 %v2680, 64
        %v3177 = vpop.permute.xlu0 %3176
        %3178 = vrot.lane.b32.xlu0 %v2681, 64
        %v3179 = vpop.permute.xlu0 %3178
        %3180 = vrot.lane.b32.xlu0 %v2682, 64
        %v3181 = vpop.permute.xlu0 %3180
        %3182 = vrot.lane.b32.xlu0 %v2683, 64
        %v3183 = vpop.permute.xlu0 %3182
        %3184 = vrot.lane.b32.xlu0 %v2684, 64
        %v3185 = vpop.permute.xlu0 %3184
        %3186 = vrot.lane.b32.xlu0 %v2685, 64
        %v3187 = vpop.permute.xlu0 %3186
        %3188 = vrot.lane.b32.xlu0 %v2686, 64
        %v3189 = vpop.permute.xlu0 %3188
        %3190 = vrot.lane.b32.xlu0 %v2687, 64
        %v3191 = vpop.permute.xlu0 %3190
        %3192 = vrot.lane.b32.xlu0 %v2688, 64
        %v3193 = vpop.permute.xlu0 %3192
        %3194 = vrot.lane.b32.xlu0 %v2689, 64
        %v3195 = vpop.permute.xlu0 %3194
        %3196 = vrot.lane.b32.xlu0 %v2690, 64
        %v3197 = vpop.permute.xlu0 %3196
        %3198 = vrot.lane.b32.xlu0 %v2691, 64
        %v3199 = vpop.permute.xlu0 %3198
        %3200 = vrot.lane.b32.xlu0 %v2692, 64
        %v3201 = vpop.permute.xlu0 %3200
        %3202 = vrot.lane.b32.xlu0 %v2693, 64
        %v3203 = vpop.permute.xlu0 %3202
        %3204 = vrot.lane.b32.xlu0 %v2694, 64
        %v3205 = vpop.permute.xlu0 %3204
        %3206 = vrot.lane.b32.xlu0 %v2695, 64
        %v3207 = vpop.permute.xlu0 %3206
        %v3240 = vsel %vm335, %v2439, %v2761
        %v3241 = vsel %vm335, %v2440, %v2763
        %v3242 = vsel %vm335, %v2441, %v2765
        %v3243 = vsel %vm335, %v2442, %v2767
        %v3244 = vsel %vm335, %v2443, %v2769
        %v3245 = vsel %vm335, %v2444, %v2771
        %v3246 = vsel %vm335, %v2445, %v2773
        %v3247 = vsel %vm335, %v2446, %v2775
        %v3248 = vsel %vm335, %v2447, %v2777
        %v3249 = vsel %vm335, %v2448, %v2779
        %v3250 = vsel %vm335, %v2449, %v2781
        %v3251 = vsel %vm335, %v2450, %v2783
        %v3252 = vsel %vm335, %v2451, %v2785
        %v3253 = vsel %vm335, %v2452, %v2787
        %v3254 = vsel %vm335, %v2453, %v2789
        %v3255 = vsel %vm335, %v2454, %v2791
        %v3256 = vsel %vm335, %v2455, %v2793
        %v3257 = vsel %vm335, %v2456, %v2795
        %v3258 = vsel %vm335, %v2457, %v2797
        %v3259 = vsel %vm335, %v2458, %v2799
        %v3260 = vsel %vm335, %v2459, %v2801
        %v3261 = vsel %vm335, %v2460, %v2803
        %v3262 = vsel %vm335, %v2461, %v2805
        %v3263 = vsel %vm335, %v2462, %v2807
        %v3264 = vsel %vm335, %v2463, %v2809
        %v3265 = vsel %vm335, %v2464, %v2811
        %v3266 = vsel %vm335, %v2465, %v2813
        %v3267 = vsel %vm335, %v2466, %v2815
        %v3268 = vsel %vm335, %v2467, %v2817
        %v3269 = vsel %vm335, %v2468, %v2819
        %v3270 = vsel %vm335, %v2469, %v2821
        %v3271 = vsel %vm335, %v2470, %v2823
        %v3272 = vsel %vm335, %v2503, %v2889
        %v3273 = vsel %vm335, %v2504, %v2891
        %v3274 = vsel %vm335, %v2505, %v2893
        %v3275 = vsel %vm335, %v2506, %v2895
        %v3276 = vsel %vm335, %v2507, %v2897
        %v3277 = vsel %vm335, %v2508, %v2899
        %v3278 = vsel %vm335, %v2509, %v2901
        %v3279 = vsel %vm335, %v2510, %v2903
        %v3280 = vsel %vm335, %v2511, %v2905
        %v3281 = vsel %vm335, %v2512, %v2907
        %v3282 = vsel %vm335, %v2513, %v2909
        %v3283 = vsel %vm335, %v2514, %v2911
        %v3284 = vsel %vm335, %v2515, %v2913
        %v3285 = vsel %vm335, %v2516, %v2915
        %v3286 = vsel %vm335, %v2517, %v2917
        %v3287 = vsel %vm335, %v2518, %v2919
        %v3288 = vsel %vm335, %v2519, %v2921
        %v3289 = vsel %vm335, %v2520, %v2923
        %v3290 = vsel %vm335, %v2521, %v2925
        %v3291 = vsel %vm335, %v2522, %v2927
        %v3292 = vsel %vm335, %v2523, %v2929
        %v3293 = vsel %vm335, %v2524, %v2931
        %v3294 = vsel %vm335, %v2525, %v2933
        %v3295 = vsel %vm335, %v2526, %v2935
        %v3296 = vsel %vm335, %v2527, %v2937
        %v3297 = vsel %vm335, %v2528, %v2939
        %v3298 = vsel %vm335, %v2529, %v2941
        %v3299 = vsel %vm335, %v2530, %v2943
        %v3300 = vsel %vm335, %v2531, %v2945
        %v3301 = vsel %vm335, %v2532, %v2947
        %v3302 = vsel %vm335, %v2533, %v2949
        %v3303 = vsel %vm335, %v2534, %v2951
        %v3304 = vsel %vm335, %v2567, %v3017
        %v3305 = vsel %vm335, %v2568, %v3019
        %v3306 = vsel %vm335, %v2569, %v3021
        %v3307 = vsel %vm335, %v2570, %v3023
        %v3308 = vsel %vm335, %v2571, %v3025
        %v3309 = vsel %vm335, %v2572, %v3027
        %v3310 = vsel %vm335, %v2573, %v3029
        %v3311 = vsel %vm335, %v2574, %v3031
        %v3312 = vsel %vm335, %v2575, %v3033
        %v3313 = vsel %vm335, %v2576, %v3035
        %v3314 = vsel %vm335, %v2577, %v3037
        %v3315 = vsel %vm335, %v2578, %v3039
        %v3316 = vsel %vm335, %v2579, %v3041
        %v3317 = vsel %vm335, %v2580, %v3043
        %v3318 = vsel %vm335, %v2581, %v3045
        %v3319 = vsel %vm335, %v2582, %v3047
        %v3320 = vsel %vm335, %v2583, %v3049
        %v3321 = vsel %vm335, %v2584, %v3051
        %v3322 = vsel %vm335, %v2585, %v3053
        %v3323 = vsel %vm335, %v2586, %v3055
        %v3324 = vsel %vm335, %v2587, %v3057
        %v3325 = vsel %vm335, %v2588, %v3059
        %v3326 = vsel %vm335, %v2589, %v3061
        %v3327 = vsel %vm335, %v2590, %v3063
        %v3328 = vsel %vm335, %v2591, %v3065
        %v3329 = vsel %vm335, %v2592, %v3067
        %v3330 = vsel %vm335, %v2593, %v3069
        %v3331 = vsel %vm335, %v2594, %v3071
        %v3332 = vsel %vm335, %v2595, %v3073
        %v3333 = vsel %vm335, %v2596, %v3075
        %v3334 = vsel %vm335, %v2597, %v3077
        %v3335 = vsel %vm335, %v2598, %v3079
        %v3336 = vsel %vm335, %v2632, %v3145
        %v3337 = vsel %vm335, %v2633, %v3147
        %v3338 = vsel %vm335, %v2634, %v3149
        %v3339 = vsel %vm335, %v2635, %v3151
        %v3340 = vsel %vm335, %v2636, %v3153
        %v3341 = vsel %vm335, %v2637, %v3155
        %v3342 = vsel %vm335, %v2638, %v3157
        %v3343 = vsel %vm335, %v2639, %v3159
        %v3344 = vsel %vm335, %v2640, %v3161
        %v3345 = vsel %vm335, %v2641, %v3163
        %v3346 = vsel %vm335, %v2642, %v3165
        %v3347 = vsel %vm335, %v2643, %v3167
        %v3348 = vsel %vm335, %v2644, %v3169
        %v3349 = vsel %vm335, %v2645, %v3171
        %v3350 = vsel %vm335, %v2646, %v3173
        %v3351 = vsel %vm335, %v2647, %v3175
        %v3352 = vsel %vm335, %v2648, %v3177
        %v3353 = vsel %vm335, %v2649, %v3179
        %v3354 = vsel %vm335, %v2650, %v3181
        %v3355 = vsel %vm335, %v2651, %v3183
        %v3356 = vsel %vm335, %v2652, %v3185
        %v3357 = vsel %vm335, %v2653, %v3187
        %v3358 = vsel %vm335, %v2654, %v3189
        %v3359 = vsel %vm335, %v2655, %v3191
        %v3360 = vsel %vm335, %v2656, %v3193
        %v3361 = vsel %vm335, %v2657, %v3195
        %v3362 = vsel %vm335, %v2658, %v3197
        %v3363 = vsel %vm335, %v2659, %v3199
        %v3364 = vsel %vm335, %v2660, %v3201
        %v3365 = vsel %vm335, %v2661, %v3203
        %v3366 = vsel %vm335, %v2662, %v3205
        %v3367 = vsel %vm335, %v2663, %v3207
        %v3368 = vpack.c.bf16 %v3241, %v3240
        %v3369 = vpack.c.bf16 %v3273, %v3272
        %v3370 = vpack.c.bf16 %v3305, %v3304
        %v3371 = vpack.c.bf16 %v3337, %v3336
        %v3372 = vpack.c.bf16 %v2697, %v2696
        %v3373 = vpack.c.bf16 %v3243, %v3242
        %v3374 = vpack.c.bf16 %v3275, %v3274
        %v3375 = vpack.c.bf16 %v3307, %v3306
        %v3376 = vpack.c.bf16 %v3339, %v3338
        %v3377 = vpack.c.bf16 %v2699, %v2698
        %v3378 = vpack.c.bf16 %v3245, %v3244
        %v3379 = vpack.c.bf16 %v3277, %v3276
        %v3380 = vpack.c.bf16 %v3309, %v3308
        %v3381 = vpack.c.bf16 %v3341, %v3340
        %v3382 = vpack.c.bf16 %v2701, %v2700
        %v3383 = vpack.c.bf16 %v3247, %v3246
        %v3384 = vpack.c.bf16 %v3279, %v3278
        %v3385 = vpack.c.bf16 %v3311, %v3310
        %v3386 = vpack.c.bf16 %v3343, %v3342
        %v3387 = vpack.c.bf16 %v2703, %v2702
        %v3388 = vpack.c.bf16 %v3249, %v3248
        %v3389 = vpack.c.bf16 %v3281, %v3280
        %v3390 = vpack.c.bf16 %v3313, %v3312
        %v3391 = vpack.c.bf16 %v3345, %v3344
        %v3392 = vpack.c.bf16 %v2705, %v2704
        %v3393 = vpack.c.bf16 %v3251, %v3250
        %v3394 = vpack.c.bf16 %v3283, %v3282
        %v3395 = vpack.c.bf16 %v3315, %v3314
        %v3396 = vpack.c.bf16 %v3347, %v3346
        %v3397 = vpack.c.bf16 %v2707, %v2706
        %v3398 = vpack.c.bf16 %v3253, %v3252
        %v3399 = vpack.c.bf16 %v3285, %v3284
        %v3400 = vpack.c.bf16 %v3317, %v3316
        %v3401 = vpack.c.bf16 %v3349, %v3348
        %v3402 = vpack.c.bf16 %v2709, %v2708
        %v3403 = vpack.c.bf16 %v3255, %v3254
        %v3404 = vpack.c.bf16 %v3287, %v3286
        %v3405 = vpack.c.bf16 %v3319, %v3318
        %v3406 = vpack.c.bf16 %v3351, %v3350
        %v3407 = vpack.c.bf16 %v2711, %v2710
        %v3408 = vpack.c.bf16 %v3257, %v3256
        %v3409 = vpack.c.bf16 %v3289, %v3288
        %v3410 = vpack.c.bf16 %v3321, %v3320
        %v3411 = vpack.c.bf16 %v3353, %v3352
        %v3412 = vpack.c.bf16 %v2713, %v2712
        %v3413 = vpack.c.bf16 %v3259, %v3258
        %v3414 = vpack.c.bf16 %v3291, %v3290
        %v3415 = vpack.c.bf16 %v3323, %v3322
        %v3416 = vpack.c.bf16 %v3355, %v3354
        %v3417 = vpack.c.bf16 %v2715, %v2714
        %v3418 = vpack.c.bf16 %v3261, %v3260
        %v3419 = vpack.c.bf16 %v3293, %v3292
        %v3420 = vpack.c.bf16 %v3325, %v3324
        %v3421 = vpack.c.bf16 %v3357, %v3356
        %v3422 = vpack.c.bf16 %v2717, %v2716
        %v3423 = vpack.c.bf16 %v3263, %v3262
        %v3424 = vpack.c.bf16 %v3295, %v3294
        %v3425 = vpack.c.bf16 %v3327, %v3326
        %v3426 = vpack.c.bf16 %v3359, %v3358
        %v3427 = vpack.c.bf16 %v2719, %v2718
        %v3428 = vpack.c.bf16 %v3265, %v3264
        %v3429 = vpack.c.bf16 %v3297, %v3296
        %v3430 = vpack.c.bf16 %v3329, %v3328
        %v3431 = vpack.c.bf16 %v3361, %v3360
        %v3432 = vpack.c.bf16 %v2721, %v2720
        %v3433 = vpack.c.bf16 %v3267, %v3266
        %v3434 = vpack.c.bf16 %v3299, %v3298
        %v3435 = vpack.c.bf16 %v3331, %v3330
        %v3436 = vpack.c.bf16 %v3363, %v3362
        %v3437 = vpack.c.bf16 %v2723, %v2722
        %v3438 = vpack.c.bf16 %v3269, %v3268
        %v3439 = vpack.c.bf16 %v3301, %v3300
        %v3440 = vpack.c.bf16 %v3333, %v3332
        %v3441 = vpack.c.bf16 %v3365, %v3364
        %v3442 = vpack.c.bf16 %v2725, %v2724
        %v3443 = vpack.c.bf16 %v3271, %v3270
        %v3444 = vpack.c.bf16 %v3303, %v3302
        %v3445 = vpack.c.bf16 %v3335, %v3334
        %v3446 = vpack.c.bf16 %v3367, %v3366
        %v3447 = vpack.c.bf16 %v2727, %v2726
        %v3448 = vld [vmem:[%s3] sm:$0xf]
        %v3449 = vld [vmem:[%s3 + $0x4] sm:$0xf]
        %v3450 = vld [vmem:[%s3 + $0x8] sm:$0xf]
        %v3451 = vld [vmem:[%s3 + $0xc] sm:$0xf]
        %v3452 = vld [vmem:[%s3 + $0x10] sm:$0xf]
        %v3453 = vld [vmem:[%s3 + $0x14] sm:$0xf]
        %v3454 = vld [vmem:[%s3 + $0x18] sm:$0xf]
        %v3455 = vld [vmem:[%s3 + $0x1c] sm:$0xf]
        %v3456 = vld [vmem:[%s3 + $0x20] sm:$0xf]
        %v3457 = vld [vmem:[%s3 + $0x24] sm:$0xf]
        %v3458 = vld [vmem:[%s3 + $0x28] sm:$0xf]
        %v3459 = vld [vmem:[%s3 + $0x2c] sm:$0xf]
        %v3460 = vld [vmem:[%s3 + $0x30] sm:$0xf]
        %v3461 = vld [vmem:[%s3 + $0x34] sm:$0xf]
        %v3462 = vld [vmem:[%s3 + $0x38] sm:$0xf]
        %v3463 = vld [vmem:[%s3 + $0x3c] sm:$0xf]
        %v3464 = vld [vmem:[%s3 + $0x40] sm:$0xf]
        %v3465 = vld [vmem:[%s3 + $0x44] sm:$0xf]
        %v3466 = vld [vmem:[%s3 + $0x48] sm:$0xf]
        %v3467 = vld [vmem:[%s3 + $0x4c] sm:$0xf]
        %v3468 = vld [vmem:[%s3 + $0x50] sm:$0xf]
        %v3469 = vld [vmem:[%s3 + $0x54] sm:$0xf]
        %v3470 = vld [vmem:[%s3 + $0x58] sm:$0xf]
        %v3471 = vld [vmem:[%s3 + $0x5c] sm:$0xf]
        %v3472 = vld [vmem:[%s3 + $0x60] sm:$0xf]
        %v3473 = vld [vmem:[%s3 + $0x64] sm:$0xf]
        %v3474 = vld [vmem:[%s3 + $0x68] sm:$0xf]
        %v3475 = vld [vmem:[%s3 + $0x6c] sm:$0xf]
        %v3476 = vld [vmem:[%s3 + $0x70] sm:$0xf]
        %v3477 = vld [vmem:[%s3 + $0x74] sm:$0xf]
        %v3478 = vld [vmem:[%s3 + $0x78] sm:$0xf]
        %v3479 = vld [vmem:[%s3 + $0x7c] sm:$0xf]
        %v3480 = vld [vmem:[%s3 + $0x80] sm:$0xf]
        %v3481 = vld [vmem:[%s3 + $0x84] sm:$0xf]
        %v3482 = vld [vmem:[%s3 + $0x88] sm:$0xf]
        %v3483 = vld [vmem:[%s3 + $0x8c] sm:$0xf]
        %v3484 = vld [vmem:[%s3 + $0x90] sm:$0xf]
        %v3485 = vld [vmem:[%s3 + $0x94] sm:$0xf]
        %v3486 = vld [vmem:[%s3 + $0x98] sm:$0xf]
        %v3487 = vld [vmem:[%s3 + $0x9c] sm:$0xf]
        %v3488 = vld [vmem:[%s3 + $0xa0] sm:$0xf]
        %v3489 = vld [vmem:[%s3 + $0xa4] sm:$0xf]
        %v3490 = vld [vmem:[%s3 + $0xa8] sm:$0xf]
        %v3491 = vld [vmem:[%s3 + $0xac] sm:$0xf]
        %v3492 = vld [vmem:[%s3 + $0xb0] sm:$0xf]
        %v3493 = vld [vmem:[%s3 + $0xb4] sm:$0xf]
        %v3494 = vld [vmem:[%s3 + $0xb8] sm:$0xf]
        %v3495 = vld [vmem:[%s3 + $0xbc] sm:$0xf]
        %v3496 = vld [vmem:[%s3 + $0xc0] sm:$0xf]
        %v3497 = vld [vmem:[%s3 + $0xc4] sm:$0xf]
        %v3498 = vld [vmem:[%s3 + $0xc8] sm:$0xf]
        %v3499 = vld [vmem:[%s3 + $0xcc] sm:$0xf]
        %v3500 = vld [vmem:[%s3 + $0xd0] sm:$0xf]
        %v3501 = vld [vmem:[%s3 + $0xd4] sm:$0xf]
        %v3502 = vld [vmem:[%s3 + $0xd8] sm:$0xf]
        %v3503 = vld [vmem:[%s3 + $0xdc] sm:$0xf]
        %v3504 = vld [vmem:[%s3 + $0xe0] sm:$0xf]
        %v3505 = vld [vmem:[%s3 + $0xe4] sm:$0xf]
        %v3506 = vld [vmem:[%s3 + $0xe8] sm:$0xf]
        %v3507 = vld [vmem:[%s3 + $0xec] sm:$0xf]
        %v3508 = vld [vmem:[%s3 + $0xf0] sm:$0xf]
        %v3509 = vld [vmem:[%s3 + $0xf4] sm:$0xf]
        %v3510 = vld [vmem:[%s3 + $0xf8] sm:$0xf]
        %v3511 = vld [vmem:[%s3 + $0xfc] sm:$0xf]
        %v3512 = vld [vmem:[%s3 + $0x100] sm:$0xf]
        %v3513 = vld [vmem:[%s3 + $0x104] sm:$0xf]
        %v3514 = vld [vmem:[%s3 + $0x108] sm:$0xf]
        %v3515 = vld [vmem:[%s3 + $0x10c] sm:$0xf]
        %v3516 = vld [vmem:[%s3 + $0x110] sm:$0xf]
        %v3517 = vld [vmem:[%s3 + $0x114] sm:$0xf]
        %v3518 = vld [vmem:[%s3 + $0x118] sm:$0xf]
        %v3519 = vld [vmem:[%s3 + $0x11c] sm:$0xf]
        %v3520 = vld [vmem:[%s4] sm:$0x1]
        %v3522 = vlaneseq
        %v3523 = vshrl.u32 %v3522, 7
        %v3524 = vsub.s32 0, %v3523
        %v3525 = vrot.slane %v3520, %v3524
        %v3599 = vunpack.c.l.b16 %v3448
        %v3600 = vunpack.c.l.b16 %v3449
        %v3601 = vunpack.c.l.b16 %v3450
        %v3602 = vunpack.c.l.b16 %v3451
        %v3603 = vunpack.c.l.b16 %v3452
        %v3604 = vunpack.c.l.b16 %v3453
        %v3605 = vunpack.c.l.b16 %v3454
        %v3606 = vunpack.c.l.b16 %v3455
        %v3607 = vunpack.c.l.b16 %v3456
        %v3608 = vunpack.c.l.b16 %v3457
        %v3609 = vunpack.c.l.b16 %v3458
        %v3610 = vunpack.c.l.b16 %v3459
        %v3611 = vunpack.c.l.b16 %v3460
        %v3612 = vunpack.c.l.b16 %v3461
        %v3613 = vunpack.c.l.b16 %v3462
        %v3614 = vunpack.c.l.b16 %v3463
        %v3615 = vunpack.c.l.b16 %v3464
        %v3616 = vunpack.c.l.b16 %v3465
        %v3617 = vunpack.c.l.b16 %v3466
        %v3618 = vunpack.c.l.b16 %v3467
        %v3619 = vunpack.c.l.b16 %v3468
        %v3620 = vunpack.c.l.b16 %v3469
        %v3621 = vunpack.c.l.b16 %v3470
        %v3622 = vunpack.c.l.b16 %v3471
        %v3623 = vunpack.c.l.b16 %v3472
        %v3624 = vunpack.c.l.b16 %v3473
        %v3625 = vunpack.c.l.b16 %v3474
        %v3626 = vunpack.c.l.b16 %v3475
        %v3627 = vunpack.c.l.b16 %v3476
        %v3628 = vunpack.c.l.b16 %v3477
        %v3629 = vunpack.c.l.b16 %v3478
        %v3630 = vunpack.c.l.b16 %v3479
        %v3631 = vunpack.c.l.b16 %v3480
        %v3632 = vunpack.c.l.b16 %v3481
        %v3633 = vunpack.c.l.b16 %v3482
        %v3634 = vunpack.c.l.b16 %v3483
        %v3635 = vunpack.c.l.b16 %v3484
        %v3636 = vunpack.c.l.b16 %v3485
        %v3637 = vunpack.c.l.b16 %v3486
        %v3638 = vunpack.c.l.b16 %v3487
        %v3639 = vunpack.c.l.b16 %v3488
        %v3640 = vunpack.c.l.b16 %v3489
        %v3641 = vunpack.c.l.b16 %v3490
        %v3642 = vunpack.c.l.b16 %v3491
        %v3643 = vunpack.c.l.b16 %v3492
        %v3644 = vunpack.c.l.b16 %v3493
        %v3645 = vunpack.c.l.b16 %v3494
        %v3646 = vunpack.c.l.b16 %v3495
        %v3647 = vunpack.c.l.b16 %v3496
        %v3648 = vunpack.c.l.b16 %v3497
        %v3649 = vunpack.c.l.b16 %v3498
        %v3650 = vunpack.c.l.b16 %v3499
        %v3651 = vunpack.c.l.b16 %v3500
        %v3652 = vunpack.c.l.b16 %v3501
        %v3653 = vunpack.c.l.b16 %v3502
        %v3654 = vunpack.c.l.b16 %v3503
        %v3655 = vunpack.c.l.b16 %v3504
        %v3656 = vunpack.c.l.b16 %v3505
        %v3657 = vunpack.c.l.b16 %v3506
        %v3658 = vunpack.c.l.b16 %v3507
        %v3659 = vunpack.c.l.b16 %v3508
        %v3660 = vunpack.c.l.b16 %v3509
        %v3661 = vunpack.c.l.b16 %v3510
        %v3662 = vunpack.c.l.b16 %v3511
        %v3663 = vunpack.c.l.b16 %v3512
        %v3664 = vunpack.c.l.b16 %v3513
        %v3665 = vunpack.c.l.b16 %v3514
        %v3666 = vunpack.c.l.b16 %v3515
        %v3667 = vunpack.c.l.b16 %v3516
        %v3668 = vunpack.c.l.b16 %v3517
        %v3669 = vunpack.c.l.b16 %v3518
        %v3670 = vunpack.c.l.b16 %v3519
        %v3671 = vpack.c.b16 %v3600, %v3599
        %v3672 = vpack.c.b16 %v3602, %v3601
        %v3673 = vpack.c.b16 %v3604, %v3603
        %v3674 = vpack.c.b16 %v3606, %v3605
        %v3675 = vpack.c.b16 %v3608, %v3607
        %v3676 = vpack.c.b16 %v3610, %v3609
        %v3677 = vpack.c.b16 %v3612, %v3611
        %v3678 = vpack.c.b16 %v3614, %v3613
        %v3679 = vpack.c.b16 %v3616, %v3615
        %v3680 = vpack.c.b16 %v3618, %v3617
        %v3681 = vpack.c.b16 %v3620, %v3619
        %v3682 = vpack.c.b16 %v3622, %v3621
        %v3683 = vpack.c.b16 %v3624, %v3623
        %v3684 = vpack.c.b16 %v3626, %v3625
        %v3685 = vpack.c.b16 %v3628, %v3627
        %v3686 = vpack.c.b16 %v3630, %v3629
        %v3687 = vpack.c.b16 %v3632, %v3631
        %v3688 = vpack.c.b16 %v3634, %v3633
        %v3689 = vpack.c.b16 %v3636, %v3635
        %v3690 = vpack.c.b16 %v3638, %v3637
        %v3691 = vpack.c.b16 %v3640, %v3639
        %v3692 = vpack.c.b16 %v3642, %v3641
        %v3693 = vpack.c.b16 %v3644, %v3643
        %v3694 = vpack.c.b16 %v3646, %v3645
        %v3695 = vpack.c.b16 %v3648, %v3647
        %v3696 = vpack.c.b16 %v3650, %v3649
        %v3697 = vpack.c.b16 %v3652, %v3651
        %v3698 = vpack.c.b16 %v3654, %v3653
        %v3699 = vpack.c.b16 %v3656, %v3655
        %v3700 = vpack.c.b16 %v3658, %v3657
        %v3701 = vpack.c.b16 %v3660, %v3659
        %v3702 = vpack.c.b16 %v3662, %v3661
        %v3703 = vpack.c.b16 %v3664, %v3663
        %v3704 = vpack.c.b16 %v3666, %v3665
        %v3705 = vpack.c.b16 %v3668, %v3667
        %v3706 = vpack.c.b16 %v3670, %v3669
        %v3744 = vsel %vm335, %v3372, 0
        %v3747 = vsel %vm335, %v3377, 0
        %v3750 = vsel %vm335, %v3382, 0
        %v3753 = vsel %vm335, %v3387, 0
        %v3756 = vsel %vm335, %v3392, 0
        %v3759 = vsel %vm335, %v3397, 0
        %v3762 = vsel %vm335, %v3402, 0
        %v3765 = vsel %vm335, %v3407, 0
        %v3768 = vsel %vm335, %v3412, 0
        %v3771 = vsel %vm335, %v3417, 0
        %v3774 = vsel %vm335, %v3422, 0
        %v3777 = vsel %vm335, %v3427, 0
        %v3780 = vsel %vm335, %v3432, 0
        %v3783 = vsel %vm335, %v3437, 0
        %v3786 = vsel %vm335, %v3442, 0
        %v3789 = vsel %vm335, %v3447, 0
        %3791 = vmatprep.subr.bf16.mxu0 0
        %3792 = vmatpush1.bf16.msra.mxu0 %v3671
        %3793 = vmatprep.subr.bf16.mxu0 0
        %3794 = vmatpush1.bf16.msra.mxu0 %v3672
        %3795 = vmatprep.subr.bf16.mxu0 0
        %3796 = vmatpush1.bf16.msra.mxu0 %v3673
        %3797 = vmatprep.subr.bf16.mxu0 0
        %3798 = vmatpush1.bf16.msra.mxu0 %v3674
        %3799 = vmatprep.subr.bf16.mxu0 0
        %3800 = vmatpush1.bf16.msra.mxu0 %v3675
        %3801 = vmatprep.subr.bf16.mxu0 0
        %3802 = vmatpush1.bf16.msra.mxu0 %v3676
        %3803 = vmatprep.subr.bf16.mxu0 0
        %3804 = vmatpush1.bf16.msra.mxu0 %v3677
        %3805 = vmatprep.subr.bf16.mxu0 0
        %3806 = vmatpush1.bf16.msra.mxu0 %v3678
        %3807 = vmatprep.subr.bf16.mxu0 0
        %3808 = vmatpush1.bf16.msra.mxu0 %v3679
        %3809 = vmatprep.subr.bf16.mxu0 0
        %3810 = vmatpush1.bf16.msra.mxu0 %v3680
        %3811 = vmatprep.subr.bf16.mxu0 0
        %3812 = vmatpush1.bf16.msra.mxu0 %v3681
        %3813 = vmatprep.subr.bf16.mxu0 0
        %3814 = vmatpush1.bf16.msra.mxu0 %v3682
        %3815 = vmatprep.subr.bf16.mxu0 0
        %3816 = vmatpush1.bf16.msra.mxu0 %v3683
        %3817 = vmatprep.subr.bf16.mxu0 0
        %3818 = vmatpush1.bf16.msra.mxu0 %v3684
        %3819 = vmatprep.subr.bf16.mxu0 0
        %3820 = vmatpush1.bf16.msra.mxu0 %v3685
        %3821 = vmatprep.subr.bf16.mxu0 0
        %3822 = vmatpush1.bf16.msra.mxu0 %v3686
        %3823 = vmatprep.mubr.bf16.mxu0 %v3369
        %3824 = vmatmul.mubr.bf16.gmra.mrb[0].mxu0 %v3368
        %v3825 = vpop.f32.mrb[0].mxu0
        %v3826 = vadd.f32 %v3525, %v3825
        %v3827 = vpop.f32.mrb[0].mxu0
        %v3828 = vpop.f32.mrb[0].mxu0
        %v3829 = vadd.f32 %v3525, %v3828
        %v3830 = vpop.f32.mrb[0].mxu0
        %3831 = vmatprep.mubr.bf16.mxu0 %v3374
        %3832 = vmatmul.mubr.bf16.gmra.mrb[0].mxu0 %v3373
        %v3833 = vpop.f32.mrb[0].mxu0
        %v3834 = vadd.f32 %v3525, %v3833
        %v3835 = vpop.f32.mrb[0].mxu0
        %v3836 = vpop.f32.mrb[0].mxu0
        %v3837 = vadd.f32 %v3525, %v3836
        %v3838 = vpop.f32.mrb[0].mxu0
        %3839 = vmatprep.mubr.bf16.mxu0 %v3379
        %3840 = vmatmul.mubr.bf16.gmra.mrb[0].mxu0 %v3378
        %v3841 = vpop.f32.mrb[0].mxu0
        %v3842 = vadd.f32 %v3525, %v3841
        %v3843 = vpop.f32.mrb[0].mxu0
        %v3844 = vpop.f32.mrb[0].mxu0
        %v3845 = vadd.f32 %v3525, %v3844
        %v3846 = vpop.f32.mrb[0].mxu0
        %3847 = vmatprep.mubr.bf16.mxu0 %v3384
        %3848 = vmatmul.mubr.bf16.gmra.mrb[0].mxu0 %v3383
        %v3849 = vpop.f32.mrb[0].mxu0
        %v3850 = vadd.f32 %v3525, %v3849
        %v3851 = vpop.f32.mrb[0].mxu0
        %v3852 = vpop.f32.mrb[0].mxu0
        %v3853 = vadd.f32 %v3525, %v3852
        %v3854 = vpop.f32.mrb[0].mxu0
        %3855 = vmatprep.mubr.bf16.mxu0 %v3389
        %3856 = vmatmul.mubr.bf16.gmra.mrb[0].mxu0 %v3388
        %v3857 = vpop.f32.mrb[0].mxu0
        %v3858 = vadd.f32 %v3525, %v3857
        %v3859 = vpop.f32.mrb[0].mxu0
        %v3860 = vpop.f32.mrb[0].mxu0
        %v3861 = vadd.f32 %v3525, %v3860
        %v3862 = vpop.f32.mrb[0].mxu0
        %3863 = vmatprep.mubr.bf16.mxu0 %v3394
        %3864 = vmatmul.mubr.bf16.gmra.mrb[0].mxu0 %v3393
        %v3865 = vpop.f32.mrb[0].mxu0
        %v3866 = vadd.f32 %v3525, %v3865
        %v3867 = vpop.f32.mrb[0].mxu0
        %v3868 = vpop.f32.mrb[0].mxu0
        %v3869 = vadd.f32 %v3525, %v3868
        %v3870 = vpop.f32.mrb[0].mxu0
        %3871 = vmatprep.mubr.bf16.mxu0 %v3399
        %3872 = vmatmul.mubr.bf16.gmra.mrb[0].mxu0 %v3398
        %v3873 = vpop.f32.mrb[0].mxu0
        %v3874 = vadd.f32 %v3525, %v3873
        %v3875 = vpop.f32.mrb[0].mxu0
        %v3876 = vpop.f32.mrb[0].mxu0
        %v3877 = vadd.f32 %v3525, %v3876
        %v3878 = vpop.f32.mrb[0].mxu0
        %3879 = vmatprep.mubr.bf16.mxu0 %v3404
        %3880 = vmatmul.mubr.bf16.gmra.mrb[0].mxu0 %v3403
        %v3881 = vpop.f32.mrb[0].mxu0
        %v3882 = vadd.f32 %v3525, %v3881
        %v3883 = vpop.f32.mrb[0].mxu0
        %v3884 = vpop.f32.mrb[0].mxu0
        %v3885 = vadd.f32 %v3525, %v3884
        %v3886 = vpop.f32.mrb[0].mxu0
        %3887 = vmatprep.mubr.bf16.mxu0 %v3409
        %3888 = vmatmul.mubr.bf16.gmra.mrb[0].mxu0 %v3408
        %v3889 = vpop.f32.mrb[0].mxu0
        %v3890 = vadd.f32 %v3525, %v3889
        %v3891 = vpop.f32.mrb[0].mxu0
        %v3892 = vpop.f32.mrb[0].mxu0
        %v3893 = vadd.f32 %v3525, %v3892
        %v3894 = vpop.f32.mrb[0].mxu0
        %3895 = vmatprep.mubr.bf16.mxu0 %v3414
        %3896 = vmatmul.mubr.bf16.gmra.mrb[0].mxu0 %v3413
        %v3897 = vpop.f32.mrb[0].mxu0
        %v3898 = vadd.f32 %v3525, %v3897
        %v3899 = vpop.f32.mrb[0].mxu0
        %v3900 = vpop.f32.mrb[0].mxu0
        %v3901 = vadd.f32 %v3525, %v3900
        %v3902 = vpop.f32.mrb[0].mxu0
        %3903 = vmatprep.mubr.bf16.mxu0 %v3419
        %3904 = vmatmul.mubr.bf16.gmra.mrb[0].mxu0 %v3418
        %v3905 = vpop.f32.mrb[0].mxu0
        %v3906 = vadd.f32 %v3525, %v3905
        %v3907 = vpop.f32.mrb[0].mxu0
        %v3908 = vpop.f32.mrb[0].mxu0
        %v3909 = vadd.f32 %v3525, %v3908
        %v3910 = vpop.f32.mrb[0].mxu0
        %3911 = vmatprep.mubr.bf16.mxu0 %v3424
        %3912 = vmatmul.mubr.bf16.gmra.mrb[0].mxu0 %v3423
        %v3913 = vpop.f32.mrb[0].mxu0
        %v3914 = vadd.f32 %v3525, %v3913
        %v3915 = vpop.f32.mrb[0].mxu0
        %v3916 = vpop.f32.mrb[0].mxu0
        %v3917 = vadd.f32 %v3525, %v3916
        %v3918 = vpop.f32.mrb[0].mxu0
        %3919 = vmatprep.mubr.bf16.mxu0 %v3429
        %3920 = vmatmul.mubr.bf16.gmra.mrb[0].mxu0 %v3428
        %v3921 = vpop.f32.mrb[0].mxu0
        %v3922 = vadd.f32 %v3525, %v3921
        %v3923 = vpop.f32.mrb[0].mxu0
        %v3924 = vpop.f32.mrb[0].mxu0
        %v3925 = vadd.f32 %v3525, %v3924
        %v3926 = vpop.f32.mrb[0].mxu0
        %3927 = vmatprep.mubr.bf16.mxu0 %v3434
        %3928 = vmatmul.mubr.bf16.gmra.mrb[0].mxu0 %v3433
        %v3929 = vpop.f32.mrb[0].mxu0
        %v3930 = vadd.f32 %v3525, %v3929
        %v3931 = vpop.f32.mrb[0].mxu0
        %v3932 = vpop.f32.mrb[0].mxu0
        %v3933 = vadd.f32 %v3525, %v3932
        %v3934 = vpop.f32.mrb[0].mxu0
        %3935 = vmatprep.mubr.bf16.mxu0 %v3439
        %3936 = vmatmul.mubr.bf16.gmra.mrb[0].mxu0 %v3438
        %v3937 = vpop.f32.mrb[0].mxu0
        %v3938 = vadd.f32 %v3525, %v3937
        %v3939 = vpop.f32.mrb[0].mxu0
        %v3940 = vpop.f32.mrb[0].mxu0
        %v3941 = vadd.f32 %v3525, %v3940
        %v3942 = vpop.f32.mrb[0].mxu0
        %3943 = vmatprep.mubr.bf16.mxu0 %v3444
        %3944 = vmatmul.mubr.bf16.gmra.mrb[0].mxu0 %v3443
        %v3945 = vpop.f32.mrb[0].mxu0
        %v3946 = vadd.f32 %v3525, %v3945
        %v3947 = vpop.f32.mrb[0].mxu0
        %v3948 = vpop.f32.mrb[0].mxu0
        %v3949 = vadd.f32 %v3525, %v3948
        %v3950 = vpop.f32.mrb[0].mxu0
        %3951 = vdwg.mxu0
        %3952 = vmatprep.subr.bf16.mxu0 0
        %3953 = vmatpush1.bf16.msra.mxu0 %v3687
        %3954 = vmatprep.subr.bf16.mxu0 0
        %3955 = vmatpush1.bf16.msra.mxu0 %v3688
        %3956 = vmatprep.subr.bf16.mxu0 0
        %3957 = vmatpush1.bf16.msra.mxu0 %v3689
        %3958 = vmatprep.subr.bf16.mxu0 0
        %3959 = vmatpush1.bf16.msra.mxu0 %v3690
        %3960 = vmatprep.subr.bf16.mxu0 0
        %3961 = vmatpush1.bf16.msra.mxu0 %v3691
        %3962 = vmatprep.subr.bf16.mxu0 0
        %3963 = vmatpush1.bf16.msra.mxu0 %v3692
        %3964 = vmatprep.subr.bf16.mxu0 0
        %3965 = vmatpush1.bf16.msra.mxu0 %v3693
        %3966 = vmatprep.subr.bf16.mxu0 0
        %3967 = vmatpush1.bf16.msra.mxu0 %v3694
        %3968 = vmatprep.subr.bf16.mxu0 0
        %3969 = vmatpush1.bf16.msra.mxu0 %v3695
        %3970 = vmatprep.subr.bf16.mxu0 0
        %3971 = vmatpush1.bf16.msra.mxu0 %v3696
        %3972 = vmatprep.subr.bf16.mxu0 0
        %3973 = vmatpush1.bf16.msra.mxu0 %v3697
        %3974 = vmatprep.subr.bf16.mxu0 0
        %3975 = vmatpush1.bf16.msra.mxu0 %v3698
        %3976 = vmatprep.subr.bf16.mxu0 0
        %3977 = vmatpush1.bf16.msra.mxu0 %v3699
        %3978 = vmatprep.subr.bf16.mxu0 0
        %3979 = vmatpush1.bf16.msra.mxu0 %v3700
        %3980 = vmatprep.subr.bf16.mxu0 0
        %3981 = vmatpush1.bf16.msra.mxu0 %v3701
        %3982 = vmatprep.subr.bf16.mxu0 0
        %3983 = vmatpush1.bf16.msra.mxu0 %v3702
        %3984 = vmatprep.mubr.bf16.mxu0 %v3371
        %3985 = vmatmul.mubr.bf16.gmra.mrb[0].mxu0 %v3370
        %v3986 = vpop.f32.mrb[0].mxu0
        %v3987 = vadd.f32 %v3826, %v3986
        %v3988 = vpop.f32.mrb[0].mxu0
        %v3989 = vpop.f32.mrb[0].mxu0
        %v3990 = vadd.f32 %v3829, %v3989
        %v3991 = vpop.f32.mrb[0].mxu0
        %3992 = vmatprep.mubr.bf16.mxu0 %v3376
        %3993 = vmatmul.mubr.bf16.gmra.mrb[0].mxu0 %v3375
        %v3994 = vpop.f32.mrb[0].mxu0
        %v3995 = vadd.f32 %v3834, %v3994
        %v3996 = vpop.f32.mrb[0].mxu0
        %v3997 = vpop.f32.mrb[0].mxu0
        %v3998 = vadd.f32 %v3837, %v3997
        %v3999 = vpop.f32.mrb[0].mxu0
        %4000 = vmatprep.mubr.bf16.mxu0 %v3381
        %4001 = vmatmul.mubr.bf16.gmra.mrb[0].mxu0 %v3380
        %v4002 = vpop.f32.mrb[0].mxu0
        %v4003 = vadd.f32 %v3842, %v4002
        %v4004 = vpop.f32.mrb[0].mxu0
        %v4005 = vpop.f32.mrb[0].mxu0
        %v4006 = vadd.f32 %v3845, %v4005
        %v4007 = vpop.f32.mrb[0].mxu0
        %4008 = vmatprep.mubr.bf16.mxu0 %v3386
        %4009 = vmatmul.mubr.bf16.gmra.mrb[0].mxu0 %v3385
        %v4010 = vpop.f32.mrb[0].mxu0
        %v4011 = vadd.f32 %v3850, %v4010
        %v4012 = vpop.f32.mrb[0].mxu0
        %v4013 = vpop.f32.mrb[0].mxu0
        %v4014 = vadd.f32 %v3853, %v4013
        %v4015 = vpop.f32.mrb[0].mxu0
        %4016 = vmatprep.mubr.bf16.mxu0 %v3391
        %4017 = vmatmul.mubr.bf16.gmra.mrb[0].mxu0 %v3390
        %v4018 = vpop.f32.mrb[0].mxu0
        %v4019 = vadd.f32 %v3858, %v4018
        %v4020 = vpop.f32.mrb[0].mxu0
        %v4021 = vpop.f32.mrb[0].mxu0
        %v4022 = vadd.f32 %v3861, %v4021
        %v4023 = vpop.f32.mrb[0].mxu0
        %4024 = vmatprep.mubr.bf16.mxu0 %v3396
        %4025 = vmatmul.mubr.bf16.gmra.mrb[0].mxu0 %v3395
        %v4026 = vpop.f32.mrb[0].mxu0
        %v4027 = vadd.f32 %v3866, %v4026
        %v4028 = vpop.f32.mrb[0].mxu0
        %v4029 = vpop.f32.mrb[0].mxu0
        %v4030 = vadd.f32 %v3869, %v4029
        %v4031 = vpop.f32.mrb[0].mxu0
        %4032 = vmatprep.mubr.bf16.mxu0 %v3401
        %4033 = vmatmul.mubr.bf16.gmra.mrb[0].mxu0 %v3400
        %v4034 = vpop.f32.mrb[0].mxu0
        %v4035 = vadd.f32 %v3874, %v4034
        %v4036 = vpop.f32.mrb[0].mxu0
        %v4037 = vpop.f32.mrb[0].mxu0
        %v4038 = vadd.f32 %v3877, %v4037
        %v4039 = vpop.f32.mrb[0].mxu0
        %4040 = vmatprep.mubr.bf16.mxu0 %v3406
        %4041 = vmatmul.mubr.bf16.gmra.mrb[0].mxu0 %v3405
        %v4042 = vpop.f32.mrb[0].mxu0
        %v4043 = vadd.f32 %v3882, %v4042
        %v4044 = vpop.f32.mrb[0].mxu0
        %v4045 = vpop.f32.mrb[0].mxu0
        %v4046 = vadd.f32 %v3885, %v4045
        %v4047 = vpop.f32.mrb[0].mxu0
        %4048 = vmatprep.mubr.bf16.mxu0 %v3411
        %4049 = vmatmul.mubr.bf16.gmra.mrb[0].mxu0 %v3410
        %v4050 = vpop.f32.mrb[0].mxu0
        %v4051 = vadd.f32 %v3890, %v4050
        %v4052 = vpop.f32.mrb[0].mxu0
        %v4053 = vpop.f32.mrb[0].mxu0
        %v4054 = vadd.f32 %v3893, %v4053
        %v4055 = vpop.f32.mrb[0].mxu0
        %4056 = vmatprep.mubr.bf16.mxu0 %v3416
        %4057 = vmatmul.mubr.bf16.gmra.mrb[0].mxu0 %v3415
        %v4058 = vpop.f32.mrb[0].mxu0
        %v4059 = vadd.f32 %v3898, %v4058
        %v4060 = vpop.f32.mrb[0].mxu0
        %v4061 = vpop.f32.mrb[0].mxu0
        %v4062 = vadd.f32 %v3901, %v4061
        %v4063 = vpop.f32.mrb[0].mxu0
        %4064 = vmatprep.mubr.bf16.mxu0 %v3421
        %4065 = vmatmul.mubr.bf16.gmra.mrb[0].mxu0 %v3420
        %v4066 = vpop.f32.mrb[0].mxu0
        %v4067 = vadd.f32 %v3906, %v4066
        %v4068 = vpop.f32.mrb[0].mxu0
        %v4069 = vpop.f32.mrb[0].mxu0
        %v4070 = vadd.f32 %v3909, %v4069
        %v4071 = vpop.f32.mrb[0].mxu0
        %4072 = vmatprep.mubr.bf16.mxu0 %v3426
        %4073 = vmatmul.mubr.bf16.gmra.mrb[0].mxu0 %v3425
        %v4074 = vpop.f32.mrb[0].mxu0
        %v4075 = vadd.f32 %v3914, %v4074
        %v4076 = vpop.f32.mrb[0].mxu0
        %v4077 = vpop.f32.mrb[0].mxu0
        %v4078 = vadd.f32 %v3917, %v4077
        %v4079 = vpop.f32.mrb[0].mxu0
        %4080 = vmatprep.mubr.bf16.mxu0 %v3431
        %4081 = vmatmul.mubr.bf16.gmra.mrb[0].mxu0 %v3430
        %v4082 = vpop.f32.mrb[0].mxu0
        %v4083 = vadd.f32 %v3922, %v4082
        %v4084 = vpop.f32.mrb[0].mxu0
        %v4085 = vpop.f32.mrb[0].mxu0
        %v4086 = vadd.f32 %v3925, %v4085
        %v4087 = vpop.f32.mrb[0].mxu0
        %4088 = vmatprep.mubr.bf16.mxu0 %v3436
        %4089 = vmatmul.mubr.bf16.gmra.mrb[0].mxu0 %v3435
        %v4090 = vpop.f32.mrb[0].mxu0
        %v4091 = vadd.f32 %v3930, %v4090
        %v4092 = vpop.f32.mrb[0].mxu0
        %v4093 = vpop.f32.mrb[0].mxu0
        %v4094 = vadd.f32 %v3933, %v4093
        %v4095 = vpop.f32.mrb[0].mxu0
        %4096 = vmatprep.mubr.bf16.mxu0 %v3441
        %4097 = vmatmul.mubr.bf16.gmra.mrb[0].mxu0 %v3440
        %v4098 = vpop.f32.mrb[0].mxu0
        %v4099 = vadd.f32 %v3938, %v4098
        %v4100 = vpop.f32.mrb[0].mxu0
        %v4101 = vpop.f32.mrb[0].mxu0
        %v4102 = vadd.f32 %v3941, %v4101
        %v4103 = vpop.f32.mrb[0].mxu0
        %4104 = vmatprep.mubr.bf16.mxu0 %v3446
        %4105 = vmatmul.mubr.bf16.gmra.mrb[0].mxu0 %v3445
        %v4106 = vpop.f32.mrb[0].mxu0
        %v4107 = vadd.f32 %v3946, %v4106
        %v4108 = vpop.f32.mrb[0].mxu0
        %v4109 = vpop.f32.mrb[0].mxu0
        %v4110 = vadd.f32 %v3949, %v4109
        %v4111 = vpop.f32.mrb[0].mxu0
        %4112 = vdwg.mxu0
        %4113 = vmatprep.subr.bf16.mxu0 0
        %4114 = vmatpush1.bf16.msra.mxu0 %v3703
        %4115 = vmatprep.subr.bf16.mxu0 0
        %4116 = vmatpush1.bf16.msra.mxu0 %v3704
        %4117 = vmatprep.subr.bf16.mxu0 0
        %4118 = vmatpush1.bf16.msra.mxu0 %v3705
        %4119 = vmatprep.subr.bf16.mxu0 0
        %4120 = vmatpush1.bf16.msra.mxu0 %v3706
        %4121 = vmatprep.subr.bf16.mxu0 0
        %4122 = vmatpush1.bf16.msra.mxu0 0
        %4123 = vmatprep.subr.bf16.mxu0 0
        %4124 = vmatpush1.bf16.msra.mxu0 0
        %4125 = vmatprep.subr.bf16.mxu0 0
        %4126 = vmatpush1.bf16.msra.mxu0 0
        %4127 = vmatprep.subr.bf16.mxu0 0
        %4128 = vmatpush1.bf16.msra.mxu0 0
        %4129 = vmatprep.subr.bf16.mxu0 0
        %4130 = vmatpush1.bf16.msra.mxu0 0
        %4131 = vmatprep.subr.bf16.mxu0 0
        %4132 = vmatpush1.bf16.msra.mxu0 0
        %4133 = vmatprep.subr.bf16.mxu0 0
        %4134 = vmatpush1.bf16.msra.mxu0 0
        %4135 = vmatprep.subr.bf16.mxu0 0
        %4136 = vmatpush1.bf16.msra.mxu0 0
        %4137 = vmatprep.subr.bf16.mxu0 0
        %4138 = vmatpush1.bf16.msra.mxu0 0
        %4139 = vmatprep.subr.bf16.mxu0 0
        %4140 = vmatpush1.bf16.msra.mxu0 0
        %4141 = vmatprep.subr.bf16.mxu0 0
        %4142 = vmatpush1.bf16.msra.mxu0 0
        %4143 = vmatprep.subr.bf16.mxu0 0
        %4144 = vmatpush1.bf16.msra.mxu0 0
        %4145 = vmatprep.mubr.bf16.mxu0 0
        %4146 = vmatmul.mubr.bf16.gmra.mrb[0].mxu0 %v3744
        %v4147 = vpop.f32.mrb[0].mxu0
        %v4148 = vadd.f32 %v3987, %v4147
        %v4149 = vpop.f32.mrb[0].mxu0
        %v4150 = vpop.f32.mrb[0].mxu0
        %v4151 = vadd.f32 %v3990, %v4150
        %v4152 = vpop.f32.mrb[0].mxu0
        %4153 = vmatprep.mubr.bf16.mxu0 0
        %4154 = vmatmul.mubr.bf16.gmra.mrb[0].mxu0 %v3747
        %v4155 = vpop.f32.mrb[0].mxu0
        %v4156 = vadd.f32 %v3995, %v4155
        %v4157 = vpop.f32.mrb[0].mxu0
        %v4158 = vpop.f32.mrb[0].mxu0
        %v4159 = vadd.f32 %v3998, %v4158
        %v4160 = vpop.f32.mrb[0].mxu0
        %4161 = vmatprep.mubr.bf16.mxu0 0
        %4162 = vmatmul.mubr.bf16.gmra.mrb[0].mxu0 %v3750
        %v4163 = vpop.f32.mrb[0].mxu0
        %v4164 = vadd.f32 %v4003, %v4163
        %v4165 = vpop.f32.mrb[0].mxu0
        %v4166 = vpop.f32.mrb[0].mxu0
        %v4167 = vadd.f32 %v4006, %v4166
        %v4168 = vpop.f32.mrb[0].mxu0
        %4169 = vmatprep.mubr.bf16.mxu0 0
        %4170 = vmatmul.mubr.bf16.gmra.mrb[0].mxu0 %v3753
        %v4171 = vpop.f32.mrb[0].mxu0
        %v4172 = vadd.f32 %v4011, %v4171
        %v4173 = vpop.f32.mrb[0].mxu0
        %v4174 = vpop.f32.mrb[0].mxu0
        %v4175 = vadd.f32 %v4014, %v4174
        %v4176 = vpop.f32.mrb[0].mxu0
        %4177 = vmatprep.mubr.bf16.mxu0 0
        %4178 = vmatmul.mubr.bf16.gmra.mrb[0].mxu0 %v3756
        %v4179 = vpop.f32.mrb[0].mxu0
        %v4180 = vadd.f32 %v4019, %v4179
        %v4181 = vpop.f32.mrb[0].mxu0
        %v4182 = vpop.f32.mrb[0].mxu0
        %v4183 = vadd.f32 %v4022, %v4182
        %v4184 = vpop.f32.mrb[0].mxu0
        %4185 = vmatprep.mubr.bf16.mxu0 0
        %4186 = vmatmul.mubr.bf16.gmra.mrb[0].mxu0 %v3759
        %v4187 = vpop.f32.mrb[0].mxu0
        %v4188 = vadd.f32 %v4027, %v4187
        %v4189 = vpop.f32.mrb[0].mxu0
        %v4190 = vpop.f32.mrb[0].mxu0
        %v4191 = vadd.f32 %v4030, %v4190
        %v4192 = vpop.f32.mrb[0].mxu0
        %4193 = vmatprep.mubr.bf16.mxu0 0
        %4194 = vmatmul.mubr.bf16.gmra.mrb[0].mxu0 %v3762
        %v4195 = vpop.f32.mrb[0].mxu0
        %v4196 = vadd.f32 %v4035, %v4195
        %v4197 = vpop.f32.mrb[0].mxu0
        %v4198 = vpop.f32.mrb[0].mxu0
        %v4199 = vadd.f32 %v4038, %v4198
        %v4200 = vpop.f32.mrb[0].mxu0
        %4201 = vmatprep.mubr.bf16.mxu0 0
        %4202 = vmatmul.mubr.bf16.gmra.mrb[0].mxu0 %v3765
        %v4203 = vpop.f32.mrb[0].mxu0
        %v4204 = vadd.f32 %v4043, %v4203
        %v4205 = vpop.f32.mrb[0].mxu0
        %v4206 = vpop.f32.mrb[0].mxu0
        %v4207 = vadd.f32 %v4046, %v4206
        %v4208 = vpop.f32.mrb[0].mxu0
        %4209 = vmatprep.mubr.bf16.mxu0 0
        %4210 = vmatmul.mubr.bf16.gmra.mrb[0].mxu0 %v3768
        %v4211 = vpop.f32.mrb[0].mxu0
        %v4212 = vadd.f32 %v4051, %v4211
        %v4213 = vpop.f32.mrb[0].mxu0
        %v4214 = vpop.f32.mrb[0].mxu0
        %v4215 = vadd.f32 %v4054, %v4214
        %v4216 = vpop.f32.mrb[0].mxu0
        %4217 = vmatprep.mubr.bf16.mxu0 0
        %4218 = vmatmul.mubr.bf16.gmra.mrb[0].mxu0 %v3771
        %v4219 = vpop.f32.mrb[0].mxu0
        %v4220 = vadd.f32 %v4059, %v4219
        %v4221 = vpop.f32.mrb[0].mxu0
        %v4222 = vpop.f32.mrb[0].mxu0
        %v4223 = vadd.f32 %v4062, %v4222
        %v4224 = vpop.f32.mrb[0].mxu0
        %4225 = vmatprep.mubr.bf16.mxu0 0
        %4226 = vmatmul.mubr.bf16.gmra.mrb[0].mxu0 %v3774
        %v4227 = vpop.f32.mrb[0].mxu0
        %v4228 = vadd.f32 %v4067, %v4227
        %v4229 = vpop.f32.mrb[0].mxu0
        %v4230 = vpop.f32.mrb[0].mxu0
        %v4231 = vadd.f32 %v4070, %v4230
        %v4232 = vpop.f32.mrb[0].mxu0
        %4233 = vmatprep.mubr.bf16.mxu0 0
        %4234 = vmatmul.mubr.bf16.gmra.mrb[0].mxu0 %v3777
        %v4235 = vpop.f32.mrb[0].mxu0
        %v4236 = vadd.f32 %v4075, %v4235
        %v4237 = vpop.f32.mrb[0].mxu0
        %v4238 = vpop.f32.mrb[0].mxu0
        %v4239 = vadd.f32 %v4078, %v4238
        %v4240 = vpop.f32.mrb[0].mxu0
        %4241 = vmatprep.mubr.bf16.mxu0 0
        %4242 = vmatmul.mubr.bf16.gmra.mrb[0].mxu0 %v3780
        %v4243 = vpop.f32.mrb[0].mxu0
        %v4244 = vadd.f32 %v4083, %v4243
        %v4245 = vpop.f32.mrb[0].mxu0
        %v4246 = vpop.f32.mrb[0].mxu0
        %v4247 = vadd.f32 %v4086, %v4246
        %v4248 = vpop.f32.mrb[0].mxu0
        %4249 = vmatprep.mubr.bf16.mxu0 0
        %4250 = vmatmul.mubr.bf16.gmra.mrb[0].mxu0 %v3783
        %v4251 = vpop.f32.mrb[0].mxu0
        %v4252 = vadd.f32 %v4091, %v4251
        %v4253 = vpop.f32.mrb[0].mxu0
        %v4254 = vpop.f32.mrb[0].mxu0
        %v4255 = vadd.f32 %v4094, %v4254
        %v4256 = vpop.f32.mrb[0].mxu0
        %4257 = vmatprep.mubr.bf16.mxu0 0
        %4258 = vmatmul.mubr.bf16.gmra.mrb[0].mxu0 %v3786
        %v4259 = vpop.f32.mrb[0].mxu0
        %v4260 = vadd.f32 %v4099, %v4259
        %v4261 = vpop.f32.mrb[0].mxu0
        %v4262 = vpop.f32.mrb[0].mxu0
        %v4263 = vadd.f32 %v4102, %v4262
        %v4264 = vpop.f32.mrb[0].mxu0
        %4265 = vmatprep.mubr.bf16.mxu0 0
        %4266 = vmatmul.mubr.bf16.gmra.mrb[0].mxu0 %v3789
        %v4267 = vpop.f32.mrb[0].mxu0
        %v4268 = vadd.f32 %v4107, %v4267
        %v4269 = vpop.f32.mrb[0].mxu0
        %v4270 = vpop.f32.mrb[0].mxu0
        %v4271 = vadd.f32 %v4110, %v4270
        %v4272 = vpop.f32.mrb[0].mxu0
        %4273 = vdwg.mxu0
        %v4274 = vmul.f32 %v4148, 0.2
        %v4275 = vmul.f32 %v4151, 0.2
        %v4276 = vmul.f32 %v4156, 0.2
        %v4277 = vmul.f32 %v4159, 0.2
        %v4278 = vmul.f32 %v4164, 0.2
        %v4279 = vmul.f32 %v4167, 0.2
        %v4280 = vmul.f32 %v4172, 0.2
        %v4281 = vmul.f32 %v4175, 0.2
        %v4282 = vmul.f32 %v4180, 0.2
        %v4283 = vmul.f32 %v4183, 0.2
        %v4284 = vmul.f32 %v4188, 0.2
        %v4285 = vmul.f32 %v4191, 0.2
        %v4286 = vmul.f32 %v4196, 0.2
        %v4287 = vmul.f32 %v4199, 0.2
        %v4288 = vmul.f32 %v4204, 0.2
        %v4289 = vmul.f32 %v4207, 0.2
        %v4290 = vmul.f32 %v4212, 0.2
        %v4291 = vmul.f32 %v4215, 0.2
        %v4292 = vmul.f32 %v4220, 0.2
        %v4293 = vmul.f32 %v4223, 0.2
        %v4294 = vmul.f32 %v4228, 0.2
        %v4295 = vmul.f32 %v4231, 0.2
        %v4296 = vmul.f32 %v4236, 0.2
        %v4297 = vmul.f32 %v4239, 0.2
        %v4298 = vmul.f32 %v4244, 0.2
        %v4299 = vmul.f32 %v4247, 0.2
        %v4300 = vmul.f32 %v4252, 0.2
        %v4301 = vmul.f32 %v4255, 0.2
        %v4302 = vmul.f32 %v4260, 0.2
        %v4303 = vmul.f32 %v4263, 0.2
        %v4304 = vmul.f32 %v4268, 0.2
        %v4305 = vmul.f32 %v4271, 0.2
        %v4306 = vmax.f32 %v4148, %v4274
        %v4307 = vmax.f32 %v4151, %v4275
        %v4308 = vmax.f32 %v4156, %v4276
        %v4309 = vmax.f32 %v4159, %v4277
        %v4310 = vmax.f32 %v4164, %v4278
        %v4311 = vmax.f32 %v4167, %v4279
        %v4312 = vmax.f32 %v4172, %v4280
        %v4313 = vmax.f32 %v4175, %v4281
        %v4314 = vmax.f32 %v4180, %v4282
        %v4315 = vmax.f32 %v4183, %v4283
        %v4316 = vmax.f32 %v4188, %v4284
        %v4317 = vmax.f32 %v4191, %v4285
        %v4318 = vmax.f32 %v4196, %v4286
        %v4319 = vmax.f32 %v4199, %v4287
        %v4320 = vmax.f32 %v4204, %v4288
        %v4321 = vmax.f32 %v4207, %v4289
        %v4322 = vmax.f32 %v4212, %v4290
        %v4323 = vmax.f32 %v4215, %v4291
        %v4324 = vmax.f32 %v4220, %v4292
        %v4325 = vmax.f32 %v4223, %v4293
        %v4326 = vmax.f32 %v4228, %v4294
        %v4327 = vmax.f32 %v4231, %v4295
        %v4328 = vmax.f32 %v4236, %v4296
        %v4329 = vmax.f32 %v4239, %v4297
        %v4330 = vmax.f32 %v4244, %v4298
        %v4331 = vmax.f32 %v4247, %v4299
        %v4332 = vmax.f32 %v4252, %v4300
        %v4333 = vmax.f32 %v4255, %v4301
        %v4334 = vmax.f32 %v4260, %v4302
        %v4335 = vmax.f32 %v4263, %v4303
        %v4336 = vmax.f32 %v4268, %v4304
        %v4337 = vmax.f32 %v4271, %v4305
        %s4338 = scalar_lea.vmem [#allocation4], 24
        %4339 = vst [vmem:[%s4338 + $0x1] sm:$0xff] %v4306
        %4340 = vst [vmem:[%s4338 + $0x9] sm:$0xff] %v4307
        %4341 = vst [vmem:[%s4338 + $0x19] sm:$0xff] %v4308
        %4342 = vst [vmem:[%s4338 + $0x21] sm:$0xff] %v4309
        %4343 = vst [vmem:[%s4338 + $0x31] sm:$0xff] %v4310
        %4344 = vst [vmem:[%s4338 + $0x39] sm:$0xff] %v4311
        %4345 = vst [vmem:[%s4338 + $0x49] sm:$0xff] %v4312
        %4346 = vst [vmem:[%s4338 + $0x51] sm:$0xff] %v4313
        %4347 = vst [vmem:[%s4338 + $0x61] sm:$0xff] %v4314
        %4348 = vst [vmem:[%s4338 + $0x69] sm:$0xff] %v4315
        %4349 = vst [vmem:[%s4338 + $0x79] sm:$0xff] %v4316
        %4350 = vst [vmem:[%s4338 + $0x81] sm:$0xff] %v4317
        %4351 = vst [vmem:[%s4338 + $0x91] sm:$0xff] %v4318
        %4352 = vst [vmem:[%s4338 + $0x99] sm:$0xff] %v4319
        %4353 = vst [vmem:[%s4338 + $0xa9] sm:$0xff] %v4320
        %4354 = vst [vmem:[%s4338 + $0xb1] sm:$0xff] %v4321
        %4355 = vst [vmem:[%s4338 + $0xc1] sm:$0xff] %v4322
        %4356 = vst [vmem:[%s4338 + $0xc9] sm:$0xff] %v4323
        %4357 = vst [vmem:[%s4338 + $0xd9] sm:$0xff] %v4324
        %4358 = vst [vmem:[%s4338 + $0xe1] sm:$0xff] %v4325
        %4359 = vst [vmem:[%s4338 + $0xf1] sm:$0xff] %v4326
        %4360 = vst [vmem:[%s4338 + $0xf9] sm:$0xff] %v4327
        %4361 = vst [vmem:[%s4338 + $0x109] sm:$0xff] %v4328
        %4362 = vst [vmem:[%s4338 + $0x111] sm:$0xff] %v4329
        %4363 = vst [vmem:[%s4338 + $0x121] sm:$0xff] %v4330
        %4364 = vst [vmem:[%s4338 + $0x129] sm:$0xff] %v4331
        %4365 = vst [vmem:[%s4338 + $0x139] sm:$0xff] %v4332
        %4366 = vst [vmem:[%s4338 + $0x141] sm:$0xff] %v4333
        %4367 = vst [vmem:[%s4338 + $0x151] sm:$0xff] %v4334
        %4368 = vst [vmem:[%s4338 + $0x159] sm:$0xff] %v4335
        %4369 = vst [vmem:[%s4338 + $0x169] sm:$0xff] %v4336
        %4370 = vst [vmem:[%s4338 + $0x171] sm:$0xff] %v4337
        %v4371 = vld [vmem:[#allocation4] sm:$0xff]
        %v4372 = vld [vmem:[#allocation4 + $0x8] sm:$0xff]
        %v4373 = vld [vmem:[#allocation4 + $0x18] sm:$0xff]
        %v4374 = vld [vmem:[#allocation4 + $0x20] sm:$0xff]
        %v4375 = vld [vmem:[#allocation4 + $0x30] sm:$0xff]
        %v4376 = vld [vmem:[#allocation4 + $0x38] sm:$0xff]
        %v4377 = vld [vmem:[#allocation4 + $0x48] sm:$0xff]
        %v4378 = vld [vmem:[#allocation4 + $0x50] sm:$0xff]
        %v4379 = vld [vmem:[#allocation4 + $0x60] sm:$0xff]
        %v4380 = vld [vmem:[#allocation4 + $0x68] sm:$0xff]
        %v4381 = vld [vmem:[#allocation4 + $0x78] sm:$0xff]
        %v4382 = vld [vmem:[#allocation4 + $0x80] sm:$0xff]
        %v4383 = vld [vmem:[#allocation4 + $0x90] sm:$0xff]
        %v4384 = vld [vmem:[#allocation4 + $0x98] sm:$0xff]
        %v4385 = vld [vmem:[#allocation4 + $0xa8] sm:$0xff]
        %v4386 = vld [vmem:[#allocation4 + $0xb0] sm:$0xff]
        %v4387 = vld [vmem:[#allocation4 + $0xc0] sm:$0xff]
        %v4388 = vld [vmem:[#allocation4 + $0xc8] sm:$0xff]
        %v4389 = vld [vmem:[#allocation4 + $0xd8] sm:$0xff]
        %v4390 = vld [vmem:[#allocation4 + $0xe0] sm:$0xff]
        %v4391 = vld [vmem:[#allocation4 + $0xf0] sm:$0xff]
        %v4392 = vld [vmem:[#allocation4 + $0xf8] sm:$0xff]
        %v4393 = vld [vmem:[#allocation4 + $0x108] sm:$0xff]
        %v4394 = vld [vmem:[#allocation4 + $0x110] sm:$0xff]
        %v4395 = vld [vmem:[#allocation4 + $0x120] sm:$0xff]
        %v4396 = vld [vmem:[#allocation4 + $0x128] sm:$0xff]
        %v4397 = vld [vmem:[#allocation4 + $0x138] sm:$0xff]
        %v4398 = vld [vmem:[#allocation4 + $0x140] sm:$0xff]
        %v4399 = vld [vmem:[#allocation4 + $0x150] sm:$0xff]
        %v4400 = vld [vmem:[#allocation4 + $0x158] sm:$0xff]
        %v4401 = vld [vmem:[#allocation4 + $0x168] sm:$0xff]
        %v4402 = vld [vmem:[#allocation4 + $0x170] sm:$0xff]
        %v4403 = vld [vmem:[%s5] sm:$0x1]
        %v4404 = vlaneseq
        %v4405 = vshrl.u32 %v4404, 7
        %v4406 = vsub.s32 0, %v4405
        %v4407 = vrot.slane %v4403, %v4406
        %v4408 = vmul.f32 %v4371, %v4407
        %v4409 = vmul.f32 %v4372, %v4407
        %v4410 = vmul.f32 %v4373, %v4407
        %v4411 = vmul.f32 %v4374, %v4407
        %v4412 = vmul.f32 %v4375, %v4407
        %v4413 = vmul.f32 %v4376, %v4407
        %v4414 = vmul.f32 %v4377, %v4407
        %v4415 = vmul.f32 %v4378, %v4407
        %v4416 = vmul.f32 %v4379, %v4407
        %v4417 = vmul.f32 %v4380, %v4407
        %v4418 = vmul.f32 %v4381, %v4407
        %v4419 = vmul.f32 %v4382, %v4407
        %v4420 = vmul.f32 %v4383, %v4407
        %v4421 = vmul.f32 %v4384, %v4407
        %v4422 = vmul.f32 %v4385, %v4407
        %v4423 = vmul.f32 %v4386, %v4407
        %v4424 = vmul.f32 %v4387, %v4407
        %v4425 = vmul.f32 %v4388, %v4407
        %v4426 = vmul.f32 %v4389, %v4407
        %v4427 = vmul.f32 %v4390, %v4407
        %v4428 = vmul.f32 %v4391, %v4407
        %v4429 = vmul.f32 %v4392, %v4407
        %v4430 = vmul.f32 %v4393, %v4407
        %v4431 = vmul.f32 %v4394, %v4407
        %v4432 = vmul.f32 %v4395, %v4407
        %v4433 = vmul.f32 %v4396, %v4407
        %v4434 = vmul.f32 %v4397, %v4407
        %v4435 = vmul.f32 %v4398, %v4407
        %v4436 = vmul.f32 %v4399, %v4407
        %v4437 = vmul.f32 %v4400, %v4407
        %v4438 = vmul.f32 %v4401, %v4407
        %v4439 = vmul.f32 %v4402, %v4407
        %4440 = vadd.xlane.f32.xlu0 %v4408
        %v4441 = vpop.xlane.xlu0 %4440
        %4442 = vadd.xlane.f32.xlu0 %v4409
        %v4443 = vpop.xlane.xlu0 %4442
        %4444 = vadd.xlane.f32.xlu0 %v4410
        %v4445 = vpop.xlane.xlu0 %4444
        %4446 = vadd.xlane.f32.xlu0 %v4411
        %v4447 = vpop.xlane.xlu0 %4446
        %4448 = vadd.xlane.f32.xlu0 %v4412
        %v4449 = vpop.xlane.xlu0 %4448
        %4450 = vadd.xlane.f32.xlu0 %v4413
        %v4451 = vpop.xlane.xlu0 %4450
        %4452 = vadd.xlane.f32.xlu0 %v4414
        %v4453 = vpop.xlane.xlu0 %4452
        %4454 = vadd.xlane.f32.xlu0 %v4415
        %v4455 = vpop.xlane.xlu0 %4454
        %4456 = vadd.xlane.f32.xlu0 %v4416
        %v4457 = vpop.xlane.xlu0 %4456
        %4458 = vadd.xlane.f32.xlu0 %v4417
        %v4459 = vpop.xlane.xlu0 %4458
        %4460 = vadd.xlane.f32.xlu0 %v4418
        %v4461 = vpop.xlane.xlu0 %4460
        %4462 = vadd.xlane.f32.xlu0 %v4419
        %v4463 = vpop.xlane.xlu0 %4462
        %4464 = vadd.xlane.f32.xlu0 %v4420
        %v4465 = vpop.xlane.xlu0 %4464
        %4466 = vadd.xlane.f32.xlu0 %v4421
        %v4467 = vpop.xlane.xlu0 %4466
        %4468 = vadd.xlane.f32.xlu0 %v4422
        %v4469 = vpop.xlane.xlu0 %4468
        %4470 = vadd.xlane.f32.xlu0 %v4423
        %v4471 = vpop.xlane.xlu0 %4470
        %4472 = vadd.xlane.f32.xlu0 %v4424
        %v4473 = vpop.xlane.xlu0 %4472
        %4474 = vadd.xlane.f32.xlu0 %v4425
        %v4475 = vpop.xlane.xlu0 %4474
        %4476 = vadd.xlane.f32.xlu0 %v4426
        %v4477 = vpop.xlane.xlu0 %4476
        %4478 = vadd.xlane.f32.xlu0 %v4427
        %v4479 = vpop.xlane.xlu0 %4478
        %4480 = vadd.xlane.f32.xlu0 %v4428
        %v4481 = vpop.xlane.xlu0 %4480
        %4482 = vadd.xlane.f32.xlu0 %v4429
        %v4483 = vpop.xlane.xlu0 %4482
        %4484 = vadd.xlane.f32.xlu0 %v4430
        %v4485 = vpop.xlane.xlu0 %4484
        %4486 = vadd.xlane.f32.xlu0 %v4431
        %v4487 = vpop.xlane.xlu0 %4486
        %4488 = vadd.xlane.f32.xlu0 %v4432
        %v4489 = vpop.xlane.xlu0 %4488
        %4490 = vadd.xlane.f32.xlu0 %v4433
        %v4491 = vpop.xlane.xlu0 %4490
        %4492 = vadd.xlane.f32.xlu0 %v4434
        %v4493 = vpop.xlane.xlu0 %4492
        %4494 = vadd.xlane.f32.xlu0 %v4435
        %v4495 = vpop.xlane.xlu0 %4494
        %4496 = vadd.xlane.f32.xlu0 %v4436
        %v4497 = vpop.xlane.xlu0 %4496
        %4498 = vadd.xlane.f32.xlu0 %v4437
        %v4499 = vpop.xlane.xlu0 %4498
        %4500 = vadd.xlane.f32.xlu0 %v4438
        %v4501 = vpop.xlane.xlu0 %4500
        %4502 = vadd.xlane.f32.xlu0 %v4439
        %v4503 = vpop.xlane.xlu0 %4502
        %v4504 = vadd.f32 %v4441, 0.0
        %v4505 = vadd.f32 %v4443, 0.0
        %v4506 = vadd.f32 %v4445, 0.0
        %v4507 = vadd.f32 %v4447, 0.0
        %v4508 = vadd.f32 %v4449, 0.0
        %v4509 = vadd.f32 %v4451, 0.0
        %v4510 = vadd.f32 %v4453, 0.0
        %v4511 = vadd.f32 %v4455, 0.0
        %v4512 = vadd.f32 %v4457, 0.0
        %v4513 = vadd.f32 %v4459, 0.0
        %v4514 = vadd.f32 %v4461, 0.0
        %v4515 = vadd.f32 %v4463, 0.0
        %v4516 = vadd.f32 %v4465, 0.0
        %v4517 = vadd.f32 %v4467, 0.0
        %v4518 = vadd.f32 %v4469, 0.0
        %v4519 = vadd.f32 %v4471, 0.0
        %v4520 = vadd.f32 %v4473, 0.0
        %v4521 = vadd.f32 %v4475, 0.0
        %v4522 = vadd.f32 %v4477, 0.0
        %v4523 = vadd.f32 %v4479, 0.0
        %v4524 = vadd.f32 %v4481, 0.0
        %v4525 = vadd.f32 %v4483, 0.0
        %v4526 = vadd.f32 %v4485, 0.0
        %v4527 = vadd.f32 %v4487, 0.0
        %v4528 = vadd.f32 %v4489, 0.0
        %v4529 = vadd.f32 %v4491, 0.0
        %v4530 = vadd.f32 %v4493, 0.0
        %v4531 = vadd.f32 %v4495, 0.0
        %v4532 = vadd.f32 %v4497, 0.0
        %v4533 = vadd.f32 %v4499, 0.0
        %v4534 = vadd.f32 %v4501, 0.0
        %v4535 = vadd.f32 %v4503, 0.0
        %v4536 = vld [vmem:[#allocation4 + $0x1] sm:$0xff]
        %v4537 = vld [vmem:[#allocation4 + $0x9] sm:$0xff]
        %v4538 = vld [vmem:[#allocation4 + $0x19] sm:$0xff]
        %v4539 = vld [vmem:[#allocation4 + $0x21] sm:$0xff]
        %v4540 = vld [vmem:[#allocation4 + $0x31] sm:$0xff]
        %v4541 = vld [vmem:[#allocation4 + $0x39] sm:$0xff]
        %v4542 = vld [vmem:[#allocation4 + $0x49] sm:$0xff]
        %v4543 = vld [vmem:[#allocation4 + $0x51] sm:$0xff]
        %v4544 = vld [vmem:[#allocation4 + $0x61] sm:$0xff]
        %v4545 = vld [vmem:[#allocation4 + $0x69] sm:$0xff]
        %v4546 = vld [vmem:[#allocation4 + $0x79] sm:$0xff]
        %v4547 = vld [vmem:[#allocation4 + $0x81] sm:$0xff]
        %v4548 = vld [vmem:[#allocation4 + $0x91] sm:$0xff]
        %v4549 = vld [vmem:[#allocation4 + $0x99] sm:$0xff]
        %v4550 = vld [vmem:[#allocation4 + $0xa9] sm:$0xff]
        %v4551 = vld [vmem:[#allocation4 + $0xb1] sm:$0xff]
        %v4552 = vld [vmem:[#allocation4 + $0xc1] sm:$0xff]
        %v4553 = vld [vmem:[#allocation4 + $0xc9] sm:$0xff]
        %v4554 = vld [vmem:[#allocation4 + $0xd9] sm:$0xff]
        %v4555 = vld [vmem:[#allocation4 + $0xe1] sm:$0xff]
        %v4556 = vld [vmem:[#allocation4 + $0xf1] sm:$0xff]
        %v4557 = vld [vmem:[#allocation4 + $0xf9] sm:$0xff]
        %v4558 = vld [vmem:[#allocation4 + $0x109] sm:$0xff]
        %v4559 = vld [vmem:[#allocation4 + $0x111] sm:$0xff]
        %v4560 = vld [vmem:[#allocation4 + $0x121] sm:$0xff]
        %v4561 = vld [vmem:[#allocation4 + $0x129] sm:$0xff]
        %v4562 = vld [vmem:[#allocation4 + $0x139] sm:$0xff]
        %v4563 = vld [vmem:[#allocation4 + $0x141] sm:$0xff]
        %v4564 = vld [vmem:[#allocation4 + $0x151] sm:$0xff]
        %v4565 = vld [vmem:[#allocation4 + $0x159] sm:$0xff]
        %v4566 = vld [vmem:[#allocation4 + $0x169] sm:$0xff]
        %v4567 = vld [vmem:[#allocation4 + $0x171] sm:$0xff]
        %v4568 = vld [vmem:[%s5 + $0x1] sm:$0x1]
        %v4569 = vlaneseq
        %v4570 = vshrl.u32 %v4569, 7
        %v4571 = vsub.s32 0, %v4570
        %v4572 = vrot.slane %v4568, %v4571
        %v4573 = vmul.f32 %v4536, %v4572
        %v4574 = vmul.f32 %v4537, %v4572
        %v4575 = vmul.f32 %v4538, %v4572
        %v4576 = vmul.f32 %v4539, %v4572
        %v4577 = vmul.f32 %v4540, %v4572
        %v4578 = vmul.f32 %v4541, %v4572
        %v4579 = vmul.f32 %v4542, %v4572
        %v4580 = vmul.f32 %v4543, %v4572
        %v4581 = vmul.f32 %v4544, %v4572
        %v4582 = vmul.f32 %v4545, %v4572
        %v4583 = vmul.f32 %v4546, %v4572
        %v4584 = vmul.f32 %v4547, %v4572
        %v4585 = vmul.f32 %v4548, %v4572
        %v4586 = vmul.f32 %v4549, %v4572
        %v4587 = vmul.f32 %v4550, %v4572
        %v4588 = vmul.f32 %v4551, %v4572
        %v4589 = vmul.f32 %v4552, %v4572
        %v4590 = vmul.f32 %v4553, %v4572
        %v4591 = vmul.f32 %v4554, %v4572
        %v4592 = vmul.f32 %v4555, %v4572
        %v4593 = vmul.f32 %v4556, %v4572
        %v4594 = vmul.f32 %v4557, %v4572
        %v4595 = vmul.f32 %v4558, %v4572
        %v4596 = vmul.f32 %v4559, %v4572
        %v4597 = vmul.f32 %v4560, %v4572
        %v4598 = vmul.f32 %v4561, %v4572
        %v4599 = vmul.f32 %v4562, %v4572
        %v4600 = vmul.f32 %v4563, %v4572
        %v4601 = vmul.f32 %v4564, %v4572
        %v4602 = vmul.f32 %v4565, %v4572
        %v4603 = vmul.f32 %v4566, %v4572
        %v4604 = vmul.f32 %v4567, %v4572
        %4605 = vadd.xlane.f32.xlu0 %v4573
        %v4606 = vpop.xlane.xlu0 %4605
        %4607 = vadd.xlane.f32.xlu0 %v4574
        %v4608 = vpop.xlane.xlu0 %4607
        %4609 = vadd.xlane.f32.xlu0 %v4575
        %v4610 = vpop.xlane.xlu0 %4609
        %4611 = vadd.xlane.f32.xlu0 %v4576
        %v4612 = vpop.xlane.xlu0 %4611
        %4613 = vadd.xlane.f32.xlu0 %v4577
        %v4614 = vpop.xlane.xlu0 %4613
        %4615 = vadd.xlane.f32.xlu0 %v4578
        %v4616 = vpop.xlane.xlu0 %4615
        %4617 = vadd.xlane.f32.xlu0 %v4579
        %v4618 = vpop.xlane.xlu0 %4617
        %4619 = vadd.xlane.f32.xlu0 %v4580
        %v4620 = vpop.xlane.xlu0 %4619
        %4621 = vadd.xlane.f32.xlu0 %v4581
        %v4622 = vpop.xlane.xlu0 %4621
        %4623 = vadd.xlane.f32.xlu0 %v4582
        %v4624 = vpop.xlane.xlu0 %4623
        %4625 = vadd.xlane.f32.xlu0 %v4583
        %v4626 = vpop.xlane.xlu0 %4625
        %4627 = vadd.xlane.f32.xlu0 %v4584
        %v4628 = vpop.xlane.xlu0 %4627
        %4629 = vadd.xlane.f32.xlu0 %v4585
        %v4630 = vpop.xlane.xlu0 %4629
        %4631 = vadd.xlane.f32.xlu0 %v4586
        %v4632 = vpop.xlane.xlu0 %4631
        %4633 = vadd.xlane.f32.xlu0 %v4587
        %v4634 = vpop.xlane.xlu0 %4633
        %4635 = vadd.xlane.f32.xlu0 %v4588
        %v4636 = vpop.xlane.xlu0 %4635
        %4637 = vadd.xlane.f32.xlu0 %v4589
        %v4638 = vpop.xlane.xlu0 %4637
        %4639 = vadd.xlane.f32.xlu0 %v4590
        %v4640 = vpop.xlane.xlu0 %4639
        %4641 = vadd.xlane.f32.xlu0 %v4591
        %v4642 = vpop.xlane.xlu0 %4641
        %4643 = vadd.xlane.f32.xlu0 %v4592
        %v4644 = vpop.xlane.xlu0 %4643
        %4645 = vadd.xlane.f32.xlu0 %v4593
        %v4646 = vpop.xlane.xlu0 %4645
        %4647 = vadd.xlane.f32.xlu0 %v4594
        %v4648 = vpop.xlane.xlu0 %4647
        %4649 = vadd.xlane.f32.xlu0 %v4595
        %v4650 = vpop.xlane.xlu0 %4649
        %4651 = vadd.xlane.f32.xlu0 %v4596
        %v4652 = vpop.xlane.xlu0 %4651
        %4653 = vadd.xlane.f32.xlu0 %v4597
        %v4654 = vpop.xlane.xlu0 %4653
        %4655 = vadd.xlane.f32.xlu0 %v4598
        %v4656 = vpop.xlane.xlu0 %4655
        %4657 = vadd.xlane.f32.xlu0 %v4599
        %v4658 = vpop.xlane.xlu0 %4657
        %4659 = vadd.xlane.f32.xlu0 %v4600
        %v4660 = vpop.xlane.xlu0 %4659
        %4661 = vadd.xlane.f32.xlu0 %v4601
        %v4662 = vpop.xlane.xlu0 %4661
        %4663 = vadd.xlane.f32.xlu0 %v4602
        %v4664 = vpop.xlane.xlu0 %4663
        %4665 = vadd.xlane.f32.xlu0 %v4603
        %v4666 = vpop.xlane.xlu0 %4665
        %4667 = vadd.xlane.f32.xlu0 %v4604
        %v4668 = vpop.xlane.xlu0 %4667
        %v4669 = vadd.f32 %v4504, %v4606
        %v4670 = vadd.f32 %v4505, %v4608
        %v4671 = vadd.f32 %v4506, %v4610
        %v4672 = vadd.f32 %v4507, %v4612
        %v4673 = vadd.f32 %v4508, %v4614
        %v4674 = vadd.f32 %v4509, %v4616
        %v4675 = vadd.f32 %v4510, %v4618
        %v4676 = vadd.f32 %v4511, %v4620
        %v4677 = vadd.f32 %v4512, %v4622
        %v4678 = vadd.f32 %v4513, %v4624
        %v4679 = vadd.f32 %v4514, %v4626
        %v4680 = vadd.f32 %v4515, %v4628
        %v4681 = vadd.f32 %v4516, %v4630
        %v4682 = vadd.f32 %v4517, %v4632
        %v4683 = vadd.f32 %v4518, %v4634
        %v4684 = vadd.f32 %v4519, %v4636
        %v4685 = vadd.f32 %v4520, %v4638
        %v4686 = vadd.f32 %v4521, %v4640
        %v4687 = vadd.f32 %v4522, %v4642
        %v4688 = vadd.f32 %v4523, %v4644
        %v4689 = vadd.f32 %v4524, %v4646
        %v4690 = vadd.f32 %v4525, %v4648
        %v4691 = vadd.f32 %v4526, %v4650
        %v4692 = vadd.f32 %v4527, %v4652
        %v4693 = vadd.f32 %v4528, %v4654
        %v4694 = vadd.f32 %v4529, %v4656
        %v4695 = vadd.f32 %v4530, %v4658
        %v4696 = vadd.f32 %v4531, %v4660
        %v4697 = vadd.f32 %v4532, %v4662
        %v4698 = vadd.f32 %v4533, %v4664
        %v4699 = vadd.f32 %v4534, %v4666
        %v4700 = vadd.f32 %v4535, %v4668
        %v4701 = vld [vmem:[#allocation4 + $0x2] sm:$0xff]
        %v4702 = vld [vmem:[#allocation4 + $0xa] sm:$0xff]
        %v4703 = vld [vmem:[#allocation4 + $0x1a] sm:$0xff]
        %v4704 = vld [vmem:[#allocation4 + $0x22] sm:$0xff]
        %v4705 = vld [vmem:[#allocation4 + $0x32] sm:$0xff]
        %v4706 = vld [vmem:[#allocation4 + $0x3a] sm:$0xff]
        %v4707 = vld [vmem:[#allocation4 + $0x4a] sm:$0xff]
        %v4708 = vld [vmem:[#allocation4 + $0x52] sm:$0xff]
        %v4709 = vld [vmem:[#allocation4 + $0x62] sm:$0xff]
        %v4710 = vld [vmem:[#allocation4 + $0x6a] sm:$0xff]
        %v4711 = vld [vmem:[#allocation4 + $0x7a] sm:$0xff]
        %v4712 = vld [vmem:[#allocation4 + $0x82] sm:$0xff]
        %v4713 = vld [vmem:[#allocation4 + $0x92] sm:$0xff]
        %v4714 = vld [vmem:[#allocation4 + $0x9a] sm:$0xff]
        %v4715 = vld [vmem:[#allocation4 + $0xaa] sm:$0xff]
        %v4716 = vld [vmem:[#allocation4 + $0xb2] sm:$0xff]
        %v4717 = vld [vmem:[#allocation4 + $0xc2] sm:$0xff]
        %v4718 = vld [vmem:[#allocation4 + $0xca] sm:$0xff]
        %v4719 = vld [vmem:[#allocation4 + $0xda] sm:$0xff]
        %v4720 = vld [vmem:[#allocation4 + $0xe2] sm:$0xff]
        %v4721 = vld [vmem:[#allocation4 + $0xf2] sm:$0xff]
        %v4722 = vld [vmem:[#allocation4 + $0xfa] sm:$0xff]
        %v4723 = vld [vmem:[#allocation4 + $0x10a] sm:$0xff]
        %v4724 = vld [vmem:[#allocation4 + $0x112] sm:$0xff]
        %v4725 = vld [vmem:[#allocation4 + $0x122] sm:$0xff]
        %v4726 = vld [vmem:[#allocation4 + $0x12a] sm:$0xff]
        %v4727 = vld [vmem:[#allocation4 + $0x13a] sm:$0xff]
        %v4728 = vld [vmem:[#allocation4 + $0x142] sm:$0xff]
        %v4729 = vld [vmem:[#allocation4 + $0x152] sm:$0xff]
        %v4730 = vld [vmem:[#allocation4 + $0x15a] sm:$0xff]
        %v4731 = vld [vmem:[#allocation4 + $0x16a] sm:$0xff]
        %v4732 = vld [vmem:[#allocation4 + $0x172] sm:$0xff]
        %v4733 = vld [vmem:[%s5 + $0x2] sm:$0x1]
        %v4734 = vlaneseq
        %v4735 = vshrl.u32 %v4734, 7
        %v4736 = vsub.s32 0, %v4735
        %v4737 = vrot.slane %v4733, %v4736
        %v4738 = vmul.f32 %v4701, %v4737
        %v4739 = vmul.f32 %v4702, %v4737
        %v4740 = vmul.f32 %v4703, %v4737
        %v4741 = vmul.f32 %v4704, %v4737
        %v4742 = vmul.f32 %v4705, %v4737
        %v4743 = vmul.f32 %v4706, %v4737
        %v4744 = vmul.f32 %v4707, %v4737
        %v4745 = vmul.f32 %v4708, %v4737
        %v4746 = vmul.f32 %v4709, %v4737
        %v4747 = vmul.f32 %v4710, %v4737
        %v4748 = vmul.f32 %v4711, %v4737
        %v4749 = vmul.f32 %v4712, %v4737
        %v4750 = vmul.f32 %v4713, %v4737
        %v4751 = vmul.f32 %v4714, %v4737
        %v4752 = vmul.f32 %v4715, %v4737
        %v4753 = vmul.f32 %v4716, %v4737
        %v4754 = vmul.f32 %v4717, %v4737
        %v4755 = vmul.f32 %v4718, %v4737
        %v4756 = vmul.f32 %v4719, %v4737
        %v4757 = vmul.f32 %v4720, %v4737
        %v4758 = vmul.f32 %v4721, %v4737
        %v4759 = vmul.f32 %v4722, %v4737
        %v4760 = vmul.f32 %v4723, %v4737
        %v4761 = vmul.f32 %v4724, %v4737
        %v4762 = vmul.f32 %v4725, %v4737
        %v4763 = vmul.f32 %v4726, %v4737
        %v4764 = vmul.f32 %v4727, %v4737
        %v4765 = vmul.f32 %v4728, %v4737
        %v4766 = vmul.f32 %v4729, %v4737
        %v4767 = vmul.f32 %v4730, %v4737
        %v4768 = vmul.f32 %v4731, %v4737
        %v4769 = vmul.f32 %v4732, %v4737
        %4770 = vadd.xlane.f32.xlu0 %v4738
        %v4771 = vpop.xlane.xlu0 %4770
        %4772 = vadd.xlane.f32.xlu0 %v4739
        %v4773 = vpop.xlane.xlu0 %4772
        %4774 = vadd.xlane.f32.xlu0 %v4740
        %v4775 = vpop.xlane.xlu0 %4774
        %4776 = vadd.xlane.f32.xlu0 %v4741
        %v4777 = vpop.xlane.xlu0 %4776
        %4778 = vadd.xlane.f32.xlu0 %v4742
        %v4779 = vpop.xlane.xlu0 %4778
        %4780 = vadd.xlane.f32.xlu0 %v4743
        %v4781 = vpop.xlane.xlu0 %4780
        %4782 = vadd.xlane.f32.xlu0 %v4744
        %v4783 = vpop.xlane.xlu0 %4782
        %4784 = vadd.xlane.f32.xlu0 %v4745
        %v4785 = vpop.xlane.xlu0 %4784
        %4786 = vadd.xlane.f32.xlu0 %v4746
        %v4787 = vpop.xlane.xlu0 %4786
        %4788 = vadd.xlane.f32.xlu0 %v4747
        %v4789 = vpop.xlane.xlu0 %4788
        %4790 = vadd.xlane.f32.xlu0 %v4748
        %v4791 = vpop.xlane.xlu0 %4790
        %4792 = vadd.xlane.f32.xlu0 %v4749
        %v4793 = vpop.xlane.xlu0 %4792
        %4794 = vadd.xlane.f32.xlu0 %v4750
        %v4795 = vpop.xlane.xlu0 %4794
        %4796 = vadd.xlane.f32.xlu0 %v4751
        %v4797 = vpop.xlane.xlu0 %4796
        %4798 = vadd.xlane.f32.xlu0 %v4752
        %v4799 = vpop.xlane.xlu0 %4798
        %4800 = vadd.xlane.f32.xlu0 %v4753
        %v4801 = vpop.xlane.xlu0 %4800
        %4802 = vadd.xlane.f32.xlu0 %v4754
        %v4803 = vpop.xlane.xlu0 %4802
        %4804 = vadd.xlane.f32.xlu0 %v4755
        %v4805 = vpop.xlane.xlu0 %4804
        %4806 = vadd.xlane.f32.xlu0 %v4756
        %v4807 = vpop.xlane.xlu0 %4806
        %4808 = vadd.xlane.f32.xlu0 %v4757
        %v4809 = vpop.xlane.xlu0 %4808
        %4810 = vadd.xlane.f32.xlu0 %v4758
        %v4811 = vpop.xlane.xlu0 %4810
        %4812 = vadd.xlane.f32.xlu0 %v4759
        %v4813 = vpop.xlane.xlu0 %4812
        %4814 = vadd.xlane.f32.xlu0 %v4760
        %v4815 = vpop.xlane.xlu0 %4814
        %4816 = vadd.xlane.f32.xlu0 %v4761
        %v4817 = vpop.xlane.xlu0 %4816
        %4818 = vadd.xlane.f32.xlu0 %v4762
        %v4819 = vpop.xlane.xlu0 %4818
        %4820 = vadd.xlane.f32.xlu0 %v4763
        %v4821 = vpop.xlane.xlu0 %4820
        %4822 = vadd.xlane.f32.xlu0 %v4764
        %v4823 = vpop.xlane.xlu0 %4822
        %4824 = vadd.xlane.f32.xlu0 %v4765
        %v4825 = vpop.xlane.xlu0 %4824
        %4826 = vadd.xlane.f32.xlu0 %v4766
        %v4827 = vpop.xlane.xlu0 %4826
        %4828 = vadd.xlane.f32.xlu0 %v4767
        %v4829 = vpop.xlane.xlu0 %4828
        %4830 = vadd.xlane.f32.xlu0 %v4768
        %v4831 = vpop.xlane.xlu0 %4830
        %4832 = vadd.xlane.f32.xlu0 %v4769
        %v4833 = vpop.xlane.xlu0 %4832
        %v4834 = vadd.f32 %v4669, %v4771
        %v4835 = vadd.f32 %v4670, %v4773
        %v4836 = vadd.f32 %v4671, %v4775
        %v4837 = vadd.f32 %v4672, %v4777
        %v4838 = vadd.f32 %v4673, %v4779
        %v4839 = vadd.f32 %v4674, %v4781
        %v4840 = vadd.f32 %v4675, %v4783
        %v4841 = vadd.f32 %v4676, %v4785
        %v4842 = vadd.f32 %v4677, %v4787
        %v4843 = vadd.f32 %v4678, %v4789
        %v4844 = vadd.f32 %v4679, %v4791
        %v4845 = vadd.f32 %v4680, %v4793
        %v4846 = vadd.f32 %v4681, %v4795
        %v4847 = vadd.f32 %v4682, %v4797
        %v4848 = vadd.f32 %v4683, %v4799
        %v4849 = vadd.f32 %v4684, %v4801
        %v4850 = vadd.f32 %v4685, %v4803
        %v4851 = vadd.f32 %v4686, %v4805
        %v4852 = vadd.f32 %v4687, %v4807
        %v4853 = vadd.f32 %v4688, %v4809
        %v4854 = vadd.f32 %v4689, %v4811
        %v4855 = vadd.f32 %v4690, %v4813
        %v4856 = vadd.f32 %v4691, %v4815
        %v4857 = vadd.f32 %v4692, %v4817
        %v4858 = vadd.f32 %v4693, %v4819
        %v4859 = vadd.f32 %v4694, %v4821
        %v4860 = vadd.f32 %v4695, %v4823
        %v4861 = vadd.f32 %v4696, %v4825
        %v4862 = vadd.f32 %v4697, %v4827
        %v4863 = vadd.f32 %v4698, %v4829
        %v4864 = vadd.f32 %v4699, %v4831
        %v4865 = vadd.f32 %v4700, %v4833
        %v4866 = vld [vmem:[%s4338] sm:$0xff]
        %v4867 = vld [vmem:[%s4338 + $0x8] sm:$0xff]
        %v4868 = vld [vmem:[%s4338 + $0x18] sm:$0xff]
        %v4869 = vld [vmem:[%s4338 + $0x20] sm:$0xff]
        %v4870 = vld [vmem:[%s4338 + $0x30] sm:$0xff]
        %v4871 = vld [vmem:[%s4338 + $0x38] sm:$0xff]
        %v4872 = vld [vmem:[%s4338 + $0x48] sm:$0xff]
        %v4873 = vld [vmem:[%s4338 + $0x50] sm:$0xff]
        %v4874 = vld [vmem:[%s4338 + $0x60] sm:$0xff]
        %v4875 = vld [vmem:[%s4338 + $0x68] sm:$0xff]
        %v4876 = vld [vmem:[%s4338 + $0x78] sm:$0xff]
        %v4877 = vld [vmem:[%s4338 + $0x80] sm:$0xff]
        %v4878 = vld [vmem:[%s4338 + $0x90] sm:$0xff]
        %v4879 = vld [vmem:[%s4338 + $0x98] sm:$0xff]
        %v4880 = vld [vmem:[%s4338 + $0xa8] sm:$0xff]
        %v4881 = vld [vmem:[%s4338 + $0xb0] sm:$0xff]
        %v4882 = vld [vmem:[%s4338 + $0xc0] sm:$0xff]
        %v4883 = vld [vmem:[%s4338 + $0xc8] sm:$0xff]
        %v4884 = vld [vmem:[%s4338 + $0xd8] sm:$0xff]
        %v4885 = vld [vmem:[%s4338 + $0xe0] sm:$0xff]
        %v4886 = vld [vmem:[%s4338 + $0xf0] sm:$0xff]
        %v4887 = vld [vmem:[%s4338 + $0xf8] sm:$0xff]
        %v4888 = vld [vmem:[%s4338 + $0x108] sm:$0xff]
        %v4889 = vld [vmem:[%s4338 + $0x110] sm:$0xff]
        %v4890 = vld [vmem:[%s4338 + $0x120] sm:$0xff]
        %v4891 = vld [vmem:[%s4338 + $0x128] sm:$0xff]
        %v4892 = vld [vmem:[%s4338 + $0x138] sm:$0xff]
        %v4893 = vld [vmem:[%s4338 + $0x140] sm:$0xff]
        %v4894 = vld [vmem:[%s4338 + $0x150] sm:$0xff]
        %v4895 = vld [vmem:[%s4338 + $0x158] sm:$0xff]
        %v4896 = vld [vmem:[%s4338 + $0x168] sm:$0xff]
        %v4897 = vld [vmem:[%s4338 + $0x170] sm:$0xff]
        %v4898 = vld [vmem:[%s5 + $0x3] sm:$0x1]
        %v4899 = vlaneseq
        %v4900 = vshrl.u32 %v4899, 7
        %v4901 = vsub.s32 0, %v4900
        %v4902 = vrot.slane %v4898, %v4901
        %v4903 = vmul.f32 %v4866, %v4902
        %v4904 = vmul.f32 %v4867, %v4902
        %v4905 = vmul.f32 %v4868, %v4902
        %v4906 = vmul.f32 %v4869, %v4902
        %v4907 = vmul.f32 %v4870, %v4902
        %v4908 = vmul.f32 %v4871, %v4902
        %v4909 = vmul.f32 %v4872, %v4902
        %v4910 = vmul.f32 %v4873, %v4902
        %v4911 = vmul.f32 %v4874, %v4902
        %v4912 = vmul.f32 %v4875, %v4902
        %v4913 = vmul.f32 %v4876, %v4902
        %v4914 = vmul.f32 %v4877, %v4902
        %v4915 = vmul.f32 %v4878, %v4902
        %v4916 = vmul.f32 %v4879, %v4902
        %v4917 = vmul.f32 %v4880, %v4902
        %v4918 = vmul.f32 %v4881, %v4902
        %v4919 = vmul.f32 %v4882, %v4902
        %v4920 = vmul.f32 %v4883, %v4902
        %v4921 = vmul.f32 %v4884, %v4902
        %v4922 = vmul.f32 %v4885, %v4902
        %v4923 = vmul.f32 %v4886, %v4902
        %v4924 = vmul.f32 %v4887, %v4902
        %v4925 = vmul.f32 %v4888, %v4902
        %v4926 = vmul.f32 %v4889, %v4902
        %v4927 = vmul.f32 %v4890, %v4902
        %v4928 = vmul.f32 %v4891, %v4902
        %v4929 = vmul.f32 %v4892, %v4902
        %v4930 = vmul.f32 %v4893, %v4902
        %v4931 = vmul.f32 %v4894, %v4902
        %v4932 = vmul.f32 %v4895, %v4902
        %v4933 = vmul.f32 %v4896, %v4902
        %v4934 = vmul.f32 %v4897, %v4902
        %4935 = vadd.xlane.f32.xlu0 %v4903
        %v4936 = vpop.xlane.xlu0 %4935
        %4937 = vadd.xlane.f32.xlu0 %v4904
        %v4938 = vpop.xlane.xlu0 %4937
        %4939 = vadd.xlane.f32.xlu0 %v4905
        %v4940 = vpop.xlane.xlu0 %4939
        %4941 = vadd.xlane.f32.xlu0 %v4906
        %v4942 = vpop.xlane.xlu0 %4941
        %4943 = vadd.xlane.f32.xlu0 %v4907
        %v4944 = vpop.xlane.xlu0 %4943
        %4945 = vadd.xlane.f32.xlu0 %v4908
        %v4946 = vpop.xlane.xlu0 %4945
        %4947 = vadd.xlane.f32.xlu0 %v4909
        %v4948 = vpop.xlane.xlu0 %4947
        %4949 = vadd.xlane.f32.xlu0 %v4910
        %v4950 = vpop.xlane.xlu0 %4949
        %4951 = vadd.xlane.f32.xlu0 %v4911
        %v4952 = vpop.xlane.xlu0 %4951
        %4953 = vadd.xlane.f32.xlu0 %v4912
        %v4954 = vpop.xlane.xlu0 %4953
        %4955 = vadd.xlane.f32.xlu0 %v4913
        %v4956 = vpop.xlane.xlu0 %4955
        %4957 = vadd.xlane.f32.xlu0 %v4914
        %v4958 = vpop.xlane.xlu0 %4957
        %4959 = vadd.xlane.f32.xlu0 %v4915
        %v4960 = vpop.xlane.xlu0 %4959
        %4961 = vadd.xlane.f32.xlu0 %v4916
        %v4962 = vpop.xlane.xlu0 %4961
        %4963 = vadd.xlane.f32.xlu0 %v4917
        %v4964 = vpop.xlane.xlu0 %4963
        %4965 = vadd.xlane.f32.xlu0 %v4918
        %v4966 = vpop.xlane.xlu0 %4965
        %4967 = vadd.xlane.f32.xlu0 %v4919
        %v4968 = vpop.xlane.xlu0 %4967
        %4969 = vadd.xlane.f32.xlu0 %v4920
        %v4970 = vpop.xlane.xlu0 %4969
        %4971 = vadd.xlane.f32.xlu0 %v4921
        %v4972 = vpop.xlane.xlu0 %4971
        %4973 = vadd.xlane.f32.xlu0 %v4922
        %v4974 = vpop.xlane.xlu0 %4973
        %4975 = vadd.xlane.f32.xlu0 %v4923
        %v4976 = vpop.xlane.xlu0 %4975
        %4977 = vadd.xlane.f32.xlu0 %v4924
        %v4978 = vpop.xlane.xlu0 %4977
        %4979 = vadd.xlane.f32.xlu0 %v4925
        %v4980 = vpop.xlane.xlu0 %4979
        %4981 = vadd.xlane.f32.xlu0 %v4926
        %v4982 = vpop.xlane.xlu0 %4981
        %4983 = vadd.xlane.f32.xlu0 %v4927
        %v4984 = vpop.xlane.xlu0 %4983
        %4985 = vadd.xlane.f32.xlu0 %v4928
        %v4986 = vpop.xlane.xlu0 %4985
        %4987 = vadd.xlane.f32.xlu0 %v4929
        %v4988 = vpop.xlane.xlu0 %4987
        %4989 = vadd.xlane.f32.xlu0 %v4930
        %v4990 = vpop.xlane.xlu0 %4989
        %4991 = vadd.xlane.f32.xlu0 %v4931
        %v4992 = vpop.xlane.xlu0 %4991
        %4993 = vadd.xlane.f32.xlu0 %v4932
        %v4994 = vpop.xlane.xlu0 %4993
        %4995 = vadd.xlane.f32.xlu0 %v4933
        %v4996 = vpop.xlane.xlu0 %4995
        %4997 = vadd.xlane.f32.xlu0 %v4934
        %v4998 = vpop.xlane.xlu0 %4997
        %v4999 = vadd.f32 %v4834, %v4936
        %v5000 = vadd.f32 %v4835, %v4938
        %v5001 = vadd.f32 %v4836, %v4940
        %v5002 = vadd.f32 %v4837, %v4942
        %v5003 = vadd.f32 %v4838, %v4944
        %v5004 = vadd.f32 %v4839, %v4946
        %v5005 = vadd.f32 %v4840, %v4948
        %v5006 = vadd.f32 %v4841, %v4950
        %v5007 = vadd.f32 %v4842, %v4952
        %v5008 = vadd.f32 %v4843, %v4954
        %v5009 = vadd.f32 %v4844, %v4956
        %v5010 = vadd.f32 %v4845, %v4958
        %v5011 = vadd.f32 %v4846, %v4960
        %v5012 = vadd.f32 %v4847, %v4962
        %v5013 = vadd.f32 %v4848, %v4964
        %v5014 = vadd.f32 %v4849, %v4966
        %v5015 = vadd.f32 %v4850, %v4968
        %v5016 = vadd.f32 %v4851, %v4970
        %v5017 = vadd.f32 %v4852, %v4972
        %v5018 = vadd.f32 %v4853, %v4974
        %v5019 = vadd.f32 %v4854, %v4976
        %v5020 = vadd.f32 %v4855, %v4978
        %v5021 = vadd.f32 %v4856, %v4980
        %v5022 = vadd.f32 %v4857, %v4982
        %v5023 = vadd.f32 %v4858, %v4984
        %v5024 = vadd.f32 %v4859, %v4986
        %v5025 = vadd.f32 %v4860, %v4988
        %v5026 = vadd.f32 %v4861, %v4990
        %v5027 = vadd.f32 %v4862, %v4992
        %v5028 = vadd.f32 %v4863, %v4994
        %v5029 = vadd.f32 %v4864, %v4996
        %v5030 = vadd.f32 %v4865, %v4998
        %v5031 = vld [vmem:[%s4338 + $0x1] sm:$0xff]
        %v5032 = vld [vmem:[%s4338 + $0x9] sm:$0xff]
        %v5033 = vld [vmem:[%s4338 + $0x19] sm:$0xff]
        %v5034 = vld [vmem:[%s4338 + $0x21] sm:$0xff]
        %v5035 = vld [vmem:[%s4338 + $0x31] sm:$0xff]
        %v5036 = vld [vmem:[%s4338 + $0x39] sm:$0xff]
        %v5037 = vld [vmem:[%s4338 + $0x49] sm:$0xff]
        %v5038 = vld [vmem:[%s4338 + $0x51] sm:$0xff]
        %v5039 = vld [vmem:[%s4338 + $0x61] sm:$0xff]
        %v5040 = vld [vmem:[%s4338 + $0x69] sm:$0xff]
        %v5041 = vld [vmem:[%s4338 + $0x79] sm:$0xff]
        %v5042 = vld [vmem:[%s4338 + $0x81] sm:$0xff]
        %v5043 = vld [vmem:[%s4338 + $0x91] sm:$0xff]
        %v5044 = vld [vmem:[%s4338 + $0x99] sm:$0xff]
        %v5045 = vld [vmem:[%s4338 + $0xa9] sm:$0xff]
        %v5046 = vld [vmem:[%s4338 + $0xb1] sm:$0xff]
        %v5047 = vld [vmem:[%s4338 + $0xc1] sm:$0xff]
        %v5048 = vld [vmem:[%s4338 + $0xc9] sm:$0xff]
        %v5049 = vld [vmem:[%s4338 + $0xd9] sm:$0xff]
        %v5050 = vld [vmem:[%s4338 + $0xe1] sm:$0xff]
        %v5051 = vld [vmem:[%s4338 + $0xf1] sm:$0xff]
        %v5052 = vld [vmem:[%s4338 + $0xf9] sm:$0xff]
        %v5053 = vld [vmem:[%s4338 + $0x109] sm:$0xff]
        %v5054 = vld [vmem:[%s4338 + $0x111] sm:$0xff]
        %v5055 = vld [vmem:[%s4338 + $0x121] sm:$0xff]
        %v5056 = vld [vmem:[%s4338 + $0x129] sm:$0xff]
        %v5057 = vld [vmem:[%s4338 + $0x139] sm:$0xff]
        %v5058 = vld [vmem:[%s4338 + $0x141] sm:$0xff]
        %v5059 = vld [vmem:[%s4338 + $0x151] sm:$0xff]
        %v5060 = vld [vmem:[%s4338 + $0x159] sm:$0xff]
        %v5061 = vld [vmem:[%s4338 + $0x169] sm:$0xff]
        %v5062 = vld [vmem:[%s4338 + $0x171] sm:$0xff]
        %v5063 = vld [vmem:[%s5 + $0x4] sm:$0x1]
        %v5064 = vlaneseq
        %v5065 = vshrl.u32 %v5064, 7
        %v5066 = vsub.s32 0, %v5065
        %v5067 = vrot.slane %v5063, %v5066
        %v5068 = vmul.f32 %v5031, %v5067
        %v5069 = vmul.f32 %v5032, %v5067
        %v5070 = vmul.f32 %v5033, %v5067
        %v5071 = vmul.f32 %v5034, %v5067
        %v5072 = vmul.f32 %v5035, %v5067
        %v5073 = vmul.f32 %v5036, %v5067
        %v5074 = vmul.f32 %v5037, %v5067
        %v5075 = vmul.f32 %v5038, %v5067
        %v5076 = vmul.f32 %v5039, %v5067
        %v5077 = vmul.f32 %v5040, %v5067
        %v5078 = vmul.f32 %v5041, %v5067
        %v5079 = vmul.f32 %v5042, %v5067
        %v5080 = vmul.f32 %v5043, %v5067
        %v5081 = vmul.f32 %v5044, %v5067
        %v5082 = vmul.f32 %v5045, %v5067
        %v5083 = vmul.f32 %v5046, %v5067
        %v5084 = vmul.f32 %v5047, %v5067
        %v5085 = vmul.f32 %v5048, %v5067
        %v5086 = vmul.f32 %v5049, %v5067
        %v5087 = vmul.f32 %v5050, %v5067
        %v5088 = vmul.f32 %v5051, %v5067
        %v5089 = vmul.f32 %v5052, %v5067
        %v5090 = vmul.f32 %v5053, %v5067
        %v5091 = vmul.f32 %v5054, %v5067
        %v5092 = vmul.f32 %v5055, %v5067
        %v5093 = vmul.f32 %v5056, %v5067
        %v5094 = vmul.f32 %v5057, %v5067
        %v5095 = vmul.f32 %v5058, %v5067
        %v5096 = vmul.f32 %v5059, %v5067
        %v5097 = vmul.f32 %v5060, %v5067
        %v5098 = vmul.f32 %v5061, %v5067
        %v5099 = vmul.f32 %v5062, %v5067
        %5100 = vadd.xlane.f32.xlu0 %v5068
        %v5101 = vpop.xlane.xlu0 %5100
        %5102 = vadd.xlane.f32.xlu0 %v5069
        %v5103 = vpop.xlane.xlu0 %5102
        %5104 = vadd.xlane.f32.xlu0 %v5070
        %v5105 = vpop.xlane.xlu0 %5104
        %5106 = vadd.xlane.f32.xlu0 %v5071
        %v5107 = vpop.xlane.xlu0 %5106
        %5108 = vadd.xlane.f32.xlu0 %v5072
        %v5109 = vpop.xlane.xlu0 %5108
        %5110 = vadd.xlane.f32.xlu0 %v5073
        %v5111 = vpop.xlane.xlu0 %5110
        %5112 = vadd.xlane.f32.xlu0 %v5074
        %v5113 = vpop.xlane.xlu0 %5112
        %5114 = vadd.xlane.f32.xlu0 %v5075
        %v5115 = vpop.xlane.xlu0 %5114
        %5116 = vadd.xlane.f32.xlu0 %v5076
        %v5117 = vpop.xlane.xlu0 %5116
        %5118 = vadd.xlane.f32.xlu0 %v5077
        %v5119 = vpop.xlane.xlu0 %5118
        %5120 = vadd.xlane.f32.xlu0 %v5078
        %v5121 = vpop.xlane.xlu0 %5120
        %5122 = vadd.xlane.f32.xlu0 %v5079
        %v5123 = vpop.xlane.xlu0 %5122
        %5124 = vadd.xlane.f32.xlu0 %v5080
        %v5125 = vpop.xlane.xlu0 %5124
        %5126 = vadd.xlane.f32.xlu0 %v5081
        %v5127 = vpop.xlane.xlu0 %5126
        %5128 = vadd.xlane.f32.xlu0 %v5082
        %v5129 = vpop.xlane.xlu0 %5128
        %5130 = vadd.xlane.f32.xlu0 %v5083
        %v5131 = vpop.xlane.xlu0 %5130
        %5132 = vadd.xlane.f32.xlu0 %v5084
        %v5133 = vpop.xlane.xlu0 %5132
        %5134 = vadd.xlane.f32.xlu0 %v5085
        %v5135 = vpop.xlane.xlu0 %5134
        %5136 = vadd.xlane.f32.xlu0 %v5086
        %v5137 = vpop.xlane.xlu0 %5136
        %5138 = vadd.xlane.f32.xlu0 %v5087
        %v5139 = vpop.xlane.xlu0 %5138
        %5140 = vadd.xlane.f32.xlu0 %v5088
        %v5141 = vpop.xlane.xlu0 %5140
        %5142 = vadd.xlane.f32.xlu0 %v5089
        %v5143 = vpop.xlane.xlu0 %5142
        %5144 = vadd.xlane.f32.xlu0 %v5090
        %v5145 = vpop.xlane.xlu0 %5144
        %5146 = vadd.xlane.f32.xlu0 %v5091
        %v5147 = vpop.xlane.xlu0 %5146
        %5148 = vadd.xlane.f32.xlu0 %v5092
        %v5149 = vpop.xlane.xlu0 %5148
        %5150 = vadd.xlane.f32.xlu0 %v5093
        %v5151 = vpop.xlane.xlu0 %5150
        %5152 = vadd.xlane.f32.xlu0 %v5094
        %v5153 = vpop.xlane.xlu0 %5152
        %5154 = vadd.xlane.f32.xlu0 %v5095
        %v5155 = vpop.xlane.xlu0 %5154
        %5156 = vadd.xlane.f32.xlu0 %v5096
        %v5157 = vpop.xlane.xlu0 %5156
        %5158 = vadd.xlane.f32.xlu0 %v5097
        %v5159 = vpop.xlane.xlu0 %5158
        %5160 = vadd.xlane.f32.xlu0 %v5098
        %v5161 = vpop.xlane.xlu0 %5160
        %5162 = vadd.xlane.f32.xlu0 %v5099
        %v5163 = vpop.xlane.xlu0 %5162
        %v5164 = vadd.f32 %v4999, %v5101
        %v5165 = vadd.f32 %v5000, %v5103
        %v5166 = vadd.f32 %v5001, %v5105
        %v5167 = vadd.f32 %v5002, %v5107
        %v5168 = vadd.f32 %v5003, %v5109
        %v5169 = vadd.f32 %v5004, %v5111
        %v5170 = vadd.f32 %v5005, %v5113
        %v5171 = vadd.f32 %v5006, %v5115
        %v5172 = vadd.f32 %v5007, %v5117
        %v5173 = vadd.f32 %v5008, %v5119
        %v5174 = vadd.f32 %v5009, %v5121
        %v5175 = vadd.f32 %v5010, %v5123
        %v5176 = vadd.f32 %v5011, %v5125
        %v5177 = vadd.f32 %v5012, %v5127
        %v5178 = vadd.f32 %v5013, %v5129
        %v5179 = vadd.f32 %v5014, %v5131
        %v5180 = vadd.f32 %v5015, %v5133
        %v5181 = vadd.f32 %v5016, %v5135
        %v5182 = vadd.f32 %v5017, %v5137
        %v5183 = vadd.f32 %v5018, %v5139
        %v5184 = vadd.f32 %v5019, %v5141
        %v5185 = vadd.f32 %v5020, %v5143
        %v5186 = vadd.f32 %v5021, %v5145
        %v5187 = vadd.f32 %v5022, %v5147
        %v5188 = vadd.f32 %v5023, %v5149
        %v5189 = vadd.f32 %v5024, %v5151
        %v5190 = vadd.f32 %v5025, %v5153
        %v5191 = vadd.f32 %v5026, %v5155
        %v5192 = vadd.f32 %v5027, %v5157
        %v5193 = vadd.f32 %v5028, %v5159
        %v5194 = vadd.f32 %v5029, %v5161
        %v5195 = vadd.f32 %v5030, %v5163
        %v5196 = vld [vmem:[%s4338 + $0x2] sm:$0xff]
        %v5197 = vld [vmem:[%s4338 + $0xa] sm:$0xff]
        %v5198 = vld [vmem:[%s4338 + $0x1a] sm:$0xff]
        %v5199 = vld [vmem:[%s4338 + $0x22] sm:$0xff]
        %v5200 = vld [vmem:[%s4338 + $0x32] sm:$0xff]
        %v5201 = vld [vmem:[%s4338 + $0x3a] sm:$0xff]
        %v5202 = vld [vmem:[%s4338 + $0x4a] sm:$0xff]
        %v5203 = vld [vmem:[%s4338 + $0x52] sm:$0xff]
        %v5204 = vld [vmem:[%s4338 + $0x62] sm:$0xff]
        %v5205 = vld [vmem:[%s4338 + $0x6a] sm:$0xff]
        %v5206 = vld [vmem:[%s4338 + $0x7a] sm:$0xff]
        %v5207 = vld [vmem:[%s4338 + $0x82] sm:$0xff]
        %v5208 = vld [vmem:[%s4338 + $0x92] sm:$0xff]
        %v5209 = vld [vmem:[%s4338 + $0x9a] sm:$0xff]
        %v5210 = vld [vmem:[%s4338 + $0xaa] sm:$0xff]
        %v5211 = vld [vmem:[%s4338 + $0xb2] sm:$0xff]
        %v5212 = vld [vmem:[%s4338 + $0xc2] sm:$0xff]
        %v5213 = vld [vmem:[%s4338 + $0xca] sm:$0xff]
        %v5214 = vld [vmem:[%s4338 + $0xda] sm:$0xff]
        %v5215 = vld [vmem:[%s4338 + $0xe2] sm:$0xff]
        %v5216 = vld [vmem:[%s4338 + $0xf2] sm:$0xff]
        %v5217 = vld [vmem:[%s4338 + $0xfa] sm:$0xff]
        %v5218 = vld [vmem:[%s4338 + $0x10a] sm:$0xff]
        %v5219 = vld [vmem:[%s4338 + $0x112] sm:$0xff]
        %v5220 = vld [vmem:[%s4338 + $0x122] sm:$0xff]
        %v5221 = vld [vmem:[%s4338 + $0x12a] sm:$0xff]
        %v5222 = vld [vmem:[%s4338 + $0x13a] sm:$0xff]
        %v5223 = vld [vmem:[%s4338 + $0x142] sm:$0xff]
        %v5224 = vld [vmem:[%s4338 + $0x152] sm:$0xff]
        %v5225 = vld [vmem:[%s4338 + $0x15a] sm:$0xff]
        %v5226 = vld [vmem:[%s4338 + $0x16a] sm:$0xff]
        %v5227 = vld [vmem:[%s4338 + $0x172] sm:$0xff]
        %v5228 = vld [vmem:[%s5 + $0x5] sm:$0x1]
        %v5229 = vlaneseq
        %v5230 = vshrl.u32 %v5229, 7
        %v5231 = vsub.s32 0, %v5230
        %v5232 = vrot.slane %v5228, %v5231
        %v5233 = vmul.f32 %v5196, %v5232
        %v5234 = vmul.f32 %v5197, %v5232
        %v5235 = vmul.f32 %v5198, %v5232
        %v5236 = vmul.f32 %v5199, %v5232
        %v5237 = vmul.f32 %v5200, %v5232
        %v5238 = vmul.f32 %v5201, %v5232
        %v5239 = vmul.f32 %v5202, %v5232
        %v5240 = vmul.f32 %v5203, %v5232
        %v5241 = vmul.f32 %v5204, %v5232
        %v5242 = vmul.f32 %v5205, %v5232
        %v5243 = vmul.f32 %v5206, %v5232
        %v5244 = vmul.f32 %v5207, %v5232
        %v5245 = vmul.f32 %v5208, %v5232
        %v5246 = vmul.f32 %v5209, %v5232
        %v5247 = vmul.f32 %v5210, %v5232
        %v5248 = vmul.f32 %v5211, %v5232
        %v5249 = vmul.f32 %v5212, %v5232
        %v5250 = vmul.f32 %v5213, %v5232
        %v5251 = vmul.f32 %v5214, %v5232
        %v5252 = vmul.f32 %v5215, %v5232
        %v5253 = vmul.f32 %v5216, %v5232
        %v5254 = vmul.f32 %v5217, %v5232
        %v5255 = vmul.f32 %v5218, %v5232
        %v5256 = vmul.f32 %v5219, %v5232
        %v5257 = vmul.f32 %v5220, %v5232
        %v5258 = vmul.f32 %v5221, %v5232
        %v5259 = vmul.f32 %v5222, %v5232
        %v5260 = vmul.f32 %v5223, %v5232
        %v5261 = vmul.f32 %v5224, %v5232
        %v5262 = vmul.f32 %v5225, %v5232
        %v5263 = vmul.f32 %v5226, %v5232
        %v5264 = vmul.f32 %v5227, %v5232
        %5265 = vadd.xlane.f32.xlu0 %v5233
        %v5266 = vpop.xlane.xlu0 %5265
        %5267 = vadd.xlane.f32.xlu0 %v5234
        %v5268 = vpop.xlane.xlu0 %5267
        %5269 = vadd.xlane.f32.xlu0 %v5235
        %v5270 = vpop.xlane.xlu0 %5269
        %5271 = vadd.xlane.f32.xlu0 %v5236
        %v5272 = vpop.xlane.xlu0 %5271
        %5273 = vadd.xlane.f32.xlu0 %v5237
        %v5274 = vpop.xlane.xlu0 %5273
        %5275 = vadd.xlane.f32.xlu0 %v5238
        %v5276 = vpop.xlane.xlu0 %5275
        %5277 = vadd.xlane.f32.xlu0 %v5239
        %v5278 = vpop.xlane.xlu0 %5277
        %5279 = vadd.xlane.f32.xlu0 %v5240
        %v5280 = vpop.xlane.xlu0 %5279
        %5281 = vadd.xlane.f32.xlu0 %v5241
        %v5282 = vpop.xlane.xlu0 %5281
        %5283 = vadd.xlane.f32.xlu0 %v5242
        %v5284 = vpop.xlane.xlu0 %5283
        %5285 = vadd.xlane.f32.xlu0 %v5243
        %v5286 = vpop.xlane.xlu0 %5285
        %5287 = vadd.xlane.f32.xlu0 %v5244
        %v5288 = vpop.xlane.xlu0 %5287
        %5289 = vadd.xlane.f32.xlu0 %v5245
        %v5290 = vpop.xlane.xlu0 %5289
        %5291 = vadd.xlane.f32.xlu0 %v5246
        %v5292 = vpop.xlane.xlu0 %5291
        %5293 = vadd.xlane.f32.xlu0 %v5247
        %v5294 = vpop.xlane.xlu0 %5293
        %5295 = vadd.xlane.f32.xlu0 %v5248
        %v5296 = vpop.xlane.xlu0 %5295
        %5297 = vadd.xlane.f32.xlu0 %v5249
        %v5298 = vpop.xlane.xlu0 %5297
        %5299 = vadd.xlane.f32.xlu0 %v5250
        %v5300 = vpop.xlane.xlu0 %5299
        %5301 = vadd.xlane.f32.xlu0 %v5251
        %v5302 = vpop.xlane.xlu0 %5301
        %5303 = vadd.xlane.f32.xlu0 %v5252
        %v5304 = vpop.xlane.xlu0 %5303
        %5305 = vadd.xlane.f32.xlu0 %v5253
        %v5306 = vpop.xlane.xlu0 %5305
        %5307 = vadd.xlane.f32.xlu0 %v5254
        %v5308 = vpop.xlane.xlu0 %5307
        %5309 = vadd.xlane.f32.xlu0 %v5255
        %v5310 = vpop.xlane.xlu0 %5309
        %5311 = vadd.xlane.f32.xlu0 %v5256
        %v5312 = vpop.xlane.xlu0 %5311
        %5313 = vadd.xlane.f32.xlu0 %v5257
        %v5314 = vpop.xlane.xlu0 %5313
        %5315 = vadd.xlane.f32.xlu0 %v5258
        %v5316 = vpop.xlane.xlu0 %5315
        %5317 = vadd.xlane.f32.xlu0 %v5259
        %v5318 = vpop.xlane.xlu0 %5317
        %5319 = vadd.xlane.f32.xlu0 %v5260
        %v5320 = vpop.xlane.xlu0 %5319
        %5321 = vadd.xlane.f32.xlu0 %v5261
        %v5322 = vpop.xlane.xlu0 %5321
        %5323 = vadd.xlane.f32.xlu0 %v5262
        %v5324 = vpop.xlane.xlu0 %5323
        %5325 = vadd.xlane.f32.xlu0 %v5263
        %v5326 = vpop.xlane.xlu0 %5325
        %5327 = vadd.xlane.f32.xlu0 %v5264
        %v5328 = vpop.xlane.xlu0 %5327
        %v5329 = vadd.f32 %v5164, %v5266
        %v5330 = vadd.f32 %v5165, %v5268
        %v5331 = vadd.f32 %v5166, %v5270
        %v5332 = vadd.f32 %v5167, %v5272
        %v5333 = vadd.f32 %v5168, %v5274
        %v5334 = vadd.f32 %v5169, %v5276
        %v5335 = vadd.f32 %v5170, %v5278
        %v5336 = vadd.f32 %v5171, %v5280
        %v5337 = vadd.f32 %v5172, %v5282
        %v5338 = vadd.f32 %v5173, %v5284
        %v5339 = vadd.f32 %v5174, %v5286
        %v5340 = vadd.f32 %v5175, %v5288
        %v5341 = vadd.f32 %v5176, %v5290
        %v5342 = vadd.f32 %v5177, %v5292
        %v5343 = vadd.f32 %v5178, %v5294
        %v5344 = vadd.f32 %v5179, %v5296
        %v5345 = vadd.f32 %v5180, %v5298
        %v5346 = vadd.f32 %v5181, %v5300
        %v5347 = vadd.f32 %v5182, %v5302
        %v5348 = vadd.f32 %v5183, %v5304
        %v5349 = vadd.f32 %v5184, %v5306
        %v5350 = vadd.f32 %v5185, %v5308
        %v5351 = vadd.f32 %v5186, %v5310
        %v5352 = vadd.f32 %v5187, %v5312
        %v5353 = vadd.f32 %v5188, %v5314
        %v5354 = vadd.f32 %v5189, %v5316
        %v5355 = vadd.f32 %v5190, %v5318
        %v5356 = vadd.f32 %v5191, %v5320
        %v5357 = vadd.f32 %v5192, %v5322
        %v5358 = vadd.f32 %v5193, %v5324
        %v5359 = vadd.f32 %v5194, %v5326
        %v5360 = vadd.f32 %v5195, %v5328
        %s5361 = scalar_lea.vmem [#allocation4], 48
        %v5362 = vld [vmem:[%s5361] sm:$0xff]
        %v5363 = vld [vmem:[%s5361 + $0x8] sm:$0xff]
        %v5364 = vld [vmem:[%s5361 + $0x18] sm:$0xff]
        %v5365 = vld [vmem:[%s5361 + $0x20] sm:$0xff]
        %v5366 = vld [vmem:[%s5361 + $0x30] sm:$0xff]
        %v5367 = vld [vmem:[%s5361 + $0x38] sm:$0xff]
        %v5368 = vld [vmem:[%s5361 + $0x48] sm:$0xff]
        %v5369 = vld [vmem:[%s5361 + $0x50] sm:$0xff]
        %v5370 = vld [vmem:[%s5361 + $0x60] sm:$0xff]
        %v5371 = vld [vmem:[%s5361 + $0x68] sm:$0xff]
        %v5372 = vld [vmem:[%s5361 + $0x78] sm:$0xff]
        %v5373 = vld [vmem:[%s5361 + $0x80] sm:$0xff]
        %v5374 = vld [vmem:[%s5361 + $0x90] sm:$0xff]
        %v5375 = vld [vmem:[%s5361 + $0x98] sm:$0xff]
        %v5376 = vld [vmem:[%s5361 + $0xa8] sm:$0xff]
        %v5377 = vld [vmem:[%s5361 + $0xb0] sm:$0xff]
        %v5378 = vld [vmem:[%s5361 + $0xc0] sm:$0xff]
        %v5379 = vld [vmem:[%s5361 + $0xc8] sm:$0xff]
        %v5380 = vld [vmem:[%s5361 + $0xd8] sm:$0xff]
        %v5381 = vld [vmem:[%s5361 + $0xe0] sm:$0xff]
        %v5382 = vld [vmem:[%s5361 + $0xf0] sm:$0xff]
        %v5383 = vld [vmem:[%s5361 + $0xf8] sm:$0xff]
        %v5384 = vld [vmem:[%s5361 + $0x108] sm:$0xff]
        %v5385 = vld [vmem:[%s5361 + $0x110] sm:$0xff]
        %v5386 = vld [vmem:[%s5361 + $0x120] sm:$0xff]
        %v5387 = vld [vmem:[%s5361 + $0x128] sm:$0xff]
        %v5388 = vld [vmem:[%s5361 + $0x138] sm:$0xff]
        %v5389 = vld [vmem:[%s5361 + $0x140] sm:$0xff]
        %v5390 = vld [vmem:[%s5361 + $0x150] sm:$0xff]
        %v5391 = vld [vmem:[%s5361 + $0x158] sm:$0xff]
        %v5392 = vld [vmem:[%s5361 + $0x168] sm:$0xff]
        %v5393 = vld [vmem:[%s5361 + $0x170] sm:$0xff]
        %v5394 = vld [vmem:[%s5 + $0x6] sm:$0x1]
        %v5395 = vlaneseq
        %v5396 = vshrl.u32 %v5395, 7
        %v5397 = vsub.s32 0, %v5396
        %v5398 = vrot.slane %v5394, %v5397
        %v5399 = vmul.f32 %v5362, %v5398
        %v5400 = vmul.f32 %v5363, %v5398
        %v5401 = vmul.f32 %v5364, %v5398
        %v5402 = vmul.f32 %v5365, %v5398
        %v5403 = vmul.f32 %v5366, %v5398
        %v5404 = vmul.f32 %v5367, %v5398
        %v5405 = vmul.f32 %v5368, %v5398
        %v5406 = vmul.f32 %v5369, %v5398
        %v5407 = vmul.f32 %v5370, %v5398
        %v5408 = vmul.f32 %v5371, %v5398
        %v5409 = vmul.f32 %v5372, %v5398
        %v5410 = vmul.f32 %v5373, %v5398
        %v5411 = vmul.f32 %v5374, %v5398
        %v5412 = vmul.f32 %v5375, %v5398
        %v5413 = vmul.f32 %v5376, %v5398
        %v5414 = vmul.f32 %v5377, %v5398
        %v5415 = vmul.f32 %v5378, %v5398
        %v5416 = vmul.f32 %v5379, %v5398
        %v5417 = vmul.f32 %v5380, %v5398
        %v5418 = vmul.f32 %v5381, %v5398
        %v5419 = vmul.f32 %v5382, %v5398
        %v5420 = vmul.f32 %v5383, %v5398
        %v5421 = vmul.f32 %v5384, %v5398
        %v5422 = vmul.f32 %v5385, %v5398
        %v5423 = vmul.f32 %v5386, %v5398
        %v5424 = vmul.f32 %v5387, %v5398
        %v5425 = vmul.f32 %v5388, %v5398
        %v5426 = vmul.f32 %v5389, %v5398
        %v5427 = vmul.f32 %v5390, %v5398
        %v5428 = vmul.f32 %v5391, %v5398
        %v5429 = vmul.f32 %v5392, %v5398
        %v5430 = vmul.f32 %v5393, %v5398
        %5431 = vadd.xlane.f32.xlu0 %v5399
        %v5432 = vpop.xlane.xlu0 %5431
        %5433 = vadd.xlane.f32.xlu0 %v5400
        %v5434 = vpop.xlane.xlu0 %5433
        %5435 = vadd.xlane.f32.xlu0 %v5401
        %v5436 = vpop.xlane.xlu0 %5435
        %5437 = vadd.xlane.f32.xlu0 %v5402
        %v5438 = vpop.xlane.xlu0 %5437
        %5439 = vadd.xlane.f32.xlu0 %v5403
        %v5440 = vpop.xlane.xlu0 %5439
        %5441 = vadd.xlane.f32.xlu0 %v5404
        %v5442 = vpop.xlane.xlu0 %5441
        %5443 = vadd.xlane.f32.xlu0 %v5405
        %v5444 = vpop.xlane.xlu0 %5443
        %5445 = vadd.xlane.f32.xlu0 %v5406
        %v5446 = vpop.xlane.xlu0 %5445
        %5447 = vadd.xlane.f32.xlu0 %v5407
        %v5448 = vpop.xlane.xlu0 %5447
        %5449 = vadd.xlane.f32.xlu0 %v5408
        %v5450 = vpop.xlane.xlu0 %5449
        %5451 = vadd.xlane.f32.xlu0 %v5409
        %v5452 = vpop.xlane.xlu0 %5451
        %5453 = vadd.xlane.f32.xlu0 %v5410
        %v5454 = vpop.xlane.xlu0 %5453
        %5455 = vadd.xlane.f32.xlu0 %v5411
        %v5456 = vpop.xlane.xlu0 %5455
        %5457 = vadd.xlane.f32.xlu0 %v5412
        %v5458 = vpop.xlane.xlu0 %5457
        %5459 = vadd.xlane.f32.xlu0 %v5413
        %v5460 = vpop.xlane.xlu0 %5459
        %5461 = vadd.xlane.f32.xlu0 %v5414
        %v5462 = vpop.xlane.xlu0 %5461
        %5463 = vadd.xlane.f32.xlu0 %v5415
        %v5464 = vpop.xlane.xlu0 %5463
        %5465 = vadd.xlane.f32.xlu0 %v5416
        %v5466 = vpop.xlane.xlu0 %5465
        %5467 = vadd.xlane.f32.xlu0 %v5417
        %v5468 = vpop.xlane.xlu0 %5467
        %5469 = vadd.xlane.f32.xlu0 %v5418
        %v5470 = vpop.xlane.xlu0 %5469
        %5471 = vadd.xlane.f32.xlu0 %v5419
        %v5472 = vpop.xlane.xlu0 %5471
        %5473 = vadd.xlane.f32.xlu0 %v5420
        %v5474 = vpop.xlane.xlu0 %5473
        %5475 = vadd.xlane.f32.xlu0 %v5421
        %v5476 = vpop.xlane.xlu0 %5475
        %5477 = vadd.xlane.f32.xlu0 %v5422
        %v5478 = vpop.xlane.xlu0 %5477
        %5479 = vadd.xlane.f32.xlu0 %v5423
        %v5480 = vpop.xlane.xlu0 %5479
        %5481 = vadd.xlane.f32.xlu0 %v5424
        %v5482 = vpop.xlane.xlu0 %5481
        %5483 = vadd.xlane.f32.xlu0 %v5425
        %v5484 = vpop.xlane.xlu0 %5483
        %5485 = vadd.xlane.f32.xlu0 %v5426
        %v5486 = vpop.xlane.xlu0 %5485
        %5487 = vadd.xlane.f32.xlu0 %v5427
        %v5488 = vpop.xlane.xlu0 %5487
        %5489 = vadd.xlane.f32.xlu0 %v5428
        %v5490 = vpop.xlane.xlu0 %5489
        %5491 = vadd.xlane.f32.xlu0 %v5429
        %v5492 = vpop.xlane.xlu0 %5491
        %5493 = vadd.xlane.f32.xlu0 %v5430
        %v5494 = vpop.xlane.xlu0 %5493
        %v5495 = vadd.f32 %v5329, %v5432
        %v5496 = vadd.f32 %v5330, %v5434
        %v5497 = vadd.f32 %v5331, %v5436
        %v5498 = vadd.f32 %v5332, %v5438
        %v5499 = vadd.f32 %v5333, %v5440
        %v5500 = vadd.f32 %v5334, %v5442
        %v5501 = vadd.f32 %v5335, %v5444
        %v5502 = vadd.f32 %v5336, %v5446
        %v5503 = vadd.f32 %v5337, %v5448
        %v5504 = vadd.f32 %v5338, %v5450
        %v5505 = vadd.f32 %v5339, %v5452
        %v5506 = vadd.f32 %v5340, %v5454
        %v5507 = vadd.f32 %v5341, %v5456
        %v5508 = vadd.f32 %v5342, %v5458
        %v5509 = vadd.f32 %v5343, %v5460
        %v5510 = vadd.f32 %v5344, %v5462
        %v5511 = vadd.f32 %v5345, %v5464
        %v5512 = vadd.f32 %v5346, %v5466
        %v5513 = vadd.f32 %v5347, %v5468
        %v5514 = vadd.f32 %v5348, %v5470
        %v5515 = vadd.f32 %v5349, %v5472
        %v5516 = vadd.f32 %v5350, %v5474
        %v5517 = vadd.f32 %v5351, %v5476
        %v5518 = vadd.f32 %v5352, %v5478
        %v5519 = vadd.f32 %v5353, %v5480
        %v5520 = vadd.f32 %v5354, %v5482
        %v5521 = vadd.f32 %v5355, %v5484
        %v5522 = vadd.f32 %v5356, %v5486
        %v5523 = vadd.f32 %v5357, %v5488
        %v5524 = vadd.f32 %v5358, %v5490
        %v5525 = vadd.f32 %v5359, %v5492
        %v5526 = vadd.f32 %v5360, %v5494
        %v5527 = vld [vmem:[%s5361 + $0x1] sm:$0xff]
        %v5528 = vld [vmem:[%s5361 + $0x9] sm:$0xff]
        %v5529 = vld [vmem:[%s5361 + $0x19] sm:$0xff]
        %v5530 = vld [vmem:[%s5361 + $0x21] sm:$0xff]
        %v5531 = vld [vmem:[%s5361 + $0x31] sm:$0xff]
        %v5532 = vld [vmem:[%s5361 + $0x39] sm:$0xff]
        %v5533 = vld [vmem:[%s5361 + $0x49] sm:$0xff]
        %v5534 = vld [vmem:[%s5361 + $0x51] sm:$0xff]
        %v5535 = vld [vmem:[%s5361 + $0x61] sm:$0xff]
        %v5536 = vld [vmem:[%s5361 + $0x69] sm:$0xff]
        %v5537 = vld [vmem:[%s5361 + $0x79] sm:$0xff]
        %v5538 = vld [vmem:[%s5361 + $0x81] sm:$0xff]
        %v5539 = vld [vmem:[%s5361 + $0x91] sm:$0xff]
        %v5540 = vld [vmem:[%s5361 + $0x99] sm:$0xff]
        %v5541 = vld [vmem:[%s5361 + $0xa9] sm:$0xff]
        %v5542 = vld [vmem:[%s5361 + $0xb1] sm:$0xff]
        %v5543 = vld [vmem:[%s5361 + $0xc1] sm:$0xff]
        %v5544 = vld [vmem:[%s5361 + $0xc9] sm:$0xff]
        %v5545 = vld [vmem:[%s5361 + $0xd9] sm:$0xff]
        %v5546 = vld [vmem:[%s5361 + $0xe1] sm:$0xff]
        %v5547 = vld [vmem:[%s5361 + $0xf1] sm:$0xff]
        %v5548 = vld [vmem:[%s5361 + $0xf9] sm:$0xff]
        %v5549 = vld [vmem:[%s5361 + $0x109] sm:$0xff]
        %v5550 = vld [vmem:[%s5361 + $0x111] sm:$0xff]
        %v5551 = vld [vmem:[%s5361 + $0x121] sm:$0xff]
        %v5552 = vld [vmem:[%s5361 + $0x129] sm:$0xff]
        %v5553 = vld [vmem:[%s5361 + $0x139] sm:$0xff]
        %v5554 = vld [vmem:[%s5361 + $0x141] sm:$0xff]
        %v5555 = vld [vmem:[%s5361 + $0x151] sm:$0xff]
        %v5556 = vld [vmem:[%s5361 + $0x159] sm:$0xff]
        %v5557 = vld [vmem:[%s5361 + $0x169] sm:$0xff]
        %v5558 = vld [vmem:[%s5361 + $0x171] sm:$0xff]
        %v5559 = vld [vmem:[%s5 + $0x7] sm:$0x1]
        %v5560 = vlaneseq
        %v5561 = vshrl.u32 %v5560, 7
        %v5562 = vsub.s32 0, %v5561
        %v5563 = vrot.slane %v5559, %v5562
        %v5564 = vmul.f32 %v5527, %v5563
        %v5565 = vmul.f32 %v5528, %v5563
        %v5566 = vmul.f32 %v5529, %v5563
        %v5567 = vmul.f32 %v5530, %v5563
        %v5568 = vmul.f32 %v5531, %v5563
        %v5569 = vmul.f32 %v5532, %v5563
        %v5570 = vmul.f32 %v5533, %v5563
        %v5571 = vmul.f32 %v5534, %v5563
        %v5572 = vmul.f32 %v5535, %v5563
        %v5573 = vmul.f32 %v5536, %v5563
        %v5574 = vmul.f32 %v5537, %v5563
        %v5575 = vmul.f32 %v5538, %v5563
        %v5576 = vmul.f32 %v5539, %v5563
        %v5577 = vmul.f32 %v5540, %v5563
        %v5578 = vmul.f32 %v5541, %v5563
        %v5579 = vmul.f32 %v5542, %v5563
        %v5580 = vmul.f32 %v5543, %v5563
        %v5581 = vmul.f32 %v5544, %v5563
        %v5582 = vmul.f32 %v5545, %v5563
        %v5583 = vmul.f32 %v5546, %v5563
        %v5584 = vmul.f32 %v5547, %v5563
        %v5585 = vmul.f32 %v5548, %v5563
        %v5586 = vmul.f32 %v5549, %v5563
        %v5587 = vmul.f32 %v5550, %v5563
        %v5588 = vmul.f32 %v5551, %v5563
        %v5589 = vmul.f32 %v5552, %v5563
        %v5590 = vmul.f32 %v5553, %v5563
        %v5591 = vmul.f32 %v5554, %v5563
        %v5592 = vmul.f32 %v5555, %v5563
        %v5593 = vmul.f32 %v5556, %v5563
        %v5594 = vmul.f32 %v5557, %v5563
        %v5595 = vmul.f32 %v5558, %v5563
        %5596 = vadd.xlane.f32.xlu0 %v5564
        %v5597 = vpop.xlane.xlu0 %5596
        %5598 = vadd.xlane.f32.xlu0 %v5565
        %v5599 = vpop.xlane.xlu0 %5598
        %5600 = vadd.xlane.f32.xlu0 %v5566
        %v5601 = vpop.xlane.xlu0 %5600
        %5602 = vadd.xlane.f32.xlu0 %v5567
        %v5603 = vpop.xlane.xlu0 %5602
        %5604 = vadd.xlane.f32.xlu0 %v5568
        %v5605 = vpop.xlane.xlu0 %5604
        %5606 = vadd.xlane.f32.xlu0 %v5569
        %v5607 = vpop.xlane.xlu0 %5606
        %5608 = vadd.xlane.f32.xlu0 %v5570
        %v5609 = vpop.xlane.xlu0 %5608
        %5610 = vadd.xlane.f32.xlu0 %v5571
        %v5611 = vpop.xlane.xlu0 %5610
        %5612 = vadd.xlane.f32.xlu0 %v5572
        %v5613 = vpop.xlane.xlu0 %5612
        %5614 = vadd.xlane.f32.xlu0 %v5573
        %v5615 = vpop.xlane.xlu0 %5614
        %5616 = vadd.xlane.f32.xlu0 %v5574
        %v5617 = vpop.xlane.xlu0 %5616
        %5618 = vadd.xlane.f32.xlu0 %v5575
        %v5619 = vpop.xlane.xlu0 %5618
        %5620 = vadd.xlane.f32.xlu0 %v5576
        %v5621 = vpop.xlane.xlu0 %5620
        %5622 = vadd.xlane.f32.xlu0 %v5577
        %v5623 = vpop.xlane.xlu0 %5622
        %5624 = vadd.xlane.f32.xlu0 %v5578
        %v5625 = vpop.xlane.xlu0 %5624
        %5626 = vadd.xlane.f32.xlu0 %v5579
        %v5627 = vpop.xlane.xlu0 %5626
        %5628 = vadd.xlane.f32.xlu0 %v5580
        %v5629 = vpop.xlane.xlu0 %5628
        %5630 = vadd.xlane.f32.xlu0 %v5581
        %v5631 = vpop.xlane.xlu0 %5630
        %5632 = vadd.xlane.f32.xlu0 %v5582
        %v5633 = vpop.xlane.xlu0 %5632
        %5634 = vadd.xlane.f32.xlu0 %v5583
        %v5635 = vpop.xlane.xlu0 %5634
        %5636 = vadd.xlane.f32.xlu0 %v5584
        %v5637 = vpop.xlane.xlu0 %5636
        %5638 = vadd.xlane.f32.xlu0 %v5585
        %v5639 = vpop.xlane.xlu0 %5638
        %5640 = vadd.xlane.f32.xlu0 %v5586
        %v5641 = vpop.xlane.xlu0 %5640
        %5642 = vadd.xlane.f32.xlu0 %v5587
        %v5643 = vpop.xlane.xlu0 %5642
        %5644 = vadd.xlane.f32.xlu0 %v5588
        %v5645 = vpop.xlane.xlu0 %5644
        %5646 = vadd.xlane.f32.xlu0 %v5589
        %v5647 = vpop.xlane.xlu0 %5646
        %5648 = vadd.xlane.f32.xlu0 %v5590
        %v5649 = vpop.xlane.xlu0 %5648
        %5650 = vadd.xlane.f32.xlu0 %v5591
        %v5651 = vpop.xlane.xlu0 %5650
        %5652 = vadd.xlane.f32.xlu0 %v5592
        %v5653 = vpop.xlane.xlu0 %5652
        %5654 = vadd.xlane.f32.xlu0 %v5593
        %v5655 = vpop.xlane.xlu0 %5654
        %5656 = vadd.xlane.f32.xlu0 %v5594
        %v5657 = vpop.xlane.xlu0 %5656
        %5658 = vadd.xlane.f32.xlu0 %v5595
        %v5659 = vpop.xlane.xlu0 %5658
        %v5660 = vadd.f32 %v5495, %v5597
        %v5661 = vadd.f32 %v5496, %v5599
        %v5662 = vadd.f32 %v5497, %v5601
        %v5663 = vadd.f32 %v5498, %v5603
        %v5664 = vadd.f32 %v5499, %v5605
        %v5665 = vadd.f32 %v5500, %v5607
        %v5666 = vadd.f32 %v5501, %v5609
        %v5667 = vadd.f32 %v5502, %v5611
        %v5668 = vadd.f32 %v5503, %v5613
        %v5669 = vadd.f32 %v5504, %v5615
        %v5670 = vadd.f32 %v5505, %v5617
        %v5671 = vadd.f32 %v5506, %v5619
        %v5672 = vadd.f32 %v5507, %v5621
        %v5673 = vadd.f32 %v5508, %v5623
        %v5674 = vadd.f32 %v5509, %v5625
        %v5675 = vadd.f32 %v5510, %v5627
        %v5676 = vadd.f32 %v5511, %v5629
        %v5677 = vadd.f32 %v5512, %v5631
        %v5678 = vadd.f32 %v5513, %v5633
        %v5679 = vadd.f32 %v5514, %v5635
        %v5680 = vadd.f32 %v5515, %v5637
        %v5681 = vadd.f32 %v5516, %v5639
        %v5682 = vadd.f32 %v5517, %v5641
        %v5683 = vadd.f32 %v5518, %v5643
        %v5684 = vadd.f32 %v5519, %v5645
        %v5685 = vadd.f32 %v5520, %v5647
        %v5686 = vadd.f32 %v5521, %v5649
        %v5687 = vadd.f32 %v5522, %v5651
        %v5688 = vadd.f32 %v5523, %v5653
        %v5689 = vadd.f32 %v5524, %v5655
        %v5690 = vadd.f32 %v5525, %v5657
        %v5691 = vadd.f32 %v5526, %v5659
        %v5692 = vld [vmem:[%s5361 + $0x2] sm:$0xff]
        %v5693 = vld [vmem:[%s5361 + $0xa] sm:$0xff]
        %v5694 = vld [vmem:[%s5361 + $0x1a] sm:$0xff]
        %v5695 = vld [vmem:[%s5361 + $0x22] sm:$0xff]
        %v5696 = vld [vmem:[%s5361 + $0x32] sm:$0xff]
        %v5697 = vld [vmem:[%s5361 + $0x3a] sm:$0xff]
        %v5698 = vld [vmem:[%s5361 + $0x4a] sm:$0xff]
        %v5699 = vld [vmem:[%s5361 + $0x52] sm:$0xff]
        %v5700 = vld [vmem:[%s5361 + $0x62] sm:$0xff]
        %v5701 = vld [vmem:[%s5361 + $0x6a] sm:$0xff]
        %v5702 = vld [vmem:[%s5361 + $0x7a] sm:$0xff]
        %v5703 = vld [vmem:[%s5361 + $0x82] sm:$0xff]
        %v5704 = vld [vmem:[%s5361 + $0x92] sm:$0xff]
        %v5705 = vld [vmem:[%s5361 + $0x9a] sm:$0xff]
        %v5706 = vld [vmem:[%s5361 + $0xaa] sm:$0xff]
        %v5707 = vld [vmem:[%s5361 + $0xb2] sm:$0xff]
        %v5708 = vld [vmem:[%s5361 + $0xc2] sm:$0xff]
        %v5709 = vld [vmem:[%s5361 + $0xca] sm:$0xff]
        %v5710 = vld [vmem:[%s5361 + $0xda] sm:$0xff]
        %v5711 = vld [vmem:[%s5361 + $0xe2] sm:$0xff]
        %v5712 = vld [vmem:[%s5361 + $0xf2] sm:$0xff]
        %v5713 = vld [vmem:[%s5361 + $0xfa] sm:$0xff]
        %v5714 = vld [vmem:[%s5361 + $0x10a] sm:$0xff]
        %v5715 = vld [vmem:[%s5361 + $0x112] sm:$0xff]
        %v5716 = vld [vmem:[%s5361 + $0x122] sm:$0xff]
        %v5717 = vld [vmem:[%s5361 + $0x12a] sm:$0xff]
        %v5718 = vld [vmem:[%s5361 + $0x13a] sm:$0xff]
        %v5719 = vld [vmem:[%s5361 + $0x142] sm:$0xff]
        %v5720 = vld [vmem:[%s5361 + $0x152] sm:$0xff]
        %v5721 = vld [vmem:[%s5361 + $0x15a] sm:$0xff]
        %v5722 = vld [vmem:[%s5361 + $0x16a] sm:$0xff]
        %v5723 = vld [vmem:[%s5361 + $0x172] sm:$0xff]
        %v5724 = vld [vmem:[%s5 + $0x8] sm:$0x1]
        %v5725 = vlaneseq
        %v5726 = vshrl.u32 %v5725, 7
        %v5727 = vsub.s32 0, %v5726
        %v5728 = vrot.slane %v5724, %v5727
        %v5729 = vmul.f32 %v5692, %v5728
        %v5730 = vmul.f32 %v5693, %v5728
        %v5731 = vmul.f32 %v5694, %v5728
        %v5732 = vmul.f32 %v5695, %v5728
        %v5733 = vmul.f32 %v5696, %v5728
        %v5734 = vmul.f32 %v5697, %v5728
        %v5735 = vmul.f32 %v5698, %v5728
        %v5736 = vmul.f32 %v5699, %v5728
        %v5737 = vmul.f32 %v5700, %v5728
        %v5738 = vmul.f32 %v5701, %v5728
        %v5739 = vmul.f32 %v5702, %v5728
        %v5740 = vmul.f32 %v5703, %v5728
        %v5741 = vmul.f32 %v5704, %v5728
        %v5742 = vmul.f32 %v5705, %v5728
        %v5743 = vmul.f32 %v5706, %v5728
        %v5744 = vmul.f32 %v5707, %v5728
        %v5745 = vmul.f32 %v5708, %v5728
        %v5746 = vmul.f32 %v5709, %v5728
        %v5747 = vmul.f32 %v5710, %v5728
        %v5748 = vmul.f32 %v5711, %v5728
        %v5749 = vmul.f32 %v5712, %v5728
        %v5750 = vmul.f32 %v5713, %v5728
        %v5751 = vmul.f32 %v5714, %v5728
        %v5752 = vmul.f32 %v5715, %v5728
        %v5753 = vmul.f32 %v5716, %v5728
        %v5754 = vmul.f32 %v5717, %v5728
        %v5755 = vmul.f32 %v5718, %v5728
        %v5756 = vmul.f32 %v5719, %v5728
        %v5757 = vmul.f32 %v5720, %v5728
        %v5758 = vmul.f32 %v5721, %v5728
        %v5759 = vmul.f32 %v5722, %v5728
        %v5760 = vmul.f32 %v5723, %v5728
        %5761 = vadd.xlane.f32.xlu0 %v5729
        %v5762 = vpop.xlane.xlu0 %5761
        %5763 = vadd.xlane.f32.xlu0 %v5730
        %v5764 = vpop.xlane.xlu0 %5763
        %5765 = vadd.xlane.f32.xlu0 %v5731
        %v5766 = vpop.xlane.xlu0 %5765
        %5767 = vadd.xlane.f32.xlu0 %v5732
        %v5768 = vpop.xlane.xlu0 %5767
        %5769 = vadd.xlane.f32.xlu0 %v5733
        %v5770 = vpop.xlane.xlu0 %5769
        %5771 = vadd.xlane.f32.xlu0 %v5734
        %v5772 = vpop.xlane.xlu0 %5771
        %5773 = vadd.xlane.f32.xlu0 %v5735
        %v5774 = vpop.xlane.xlu0 %5773
        %5775 = vadd.xlane.f32.xlu0 %v5736
        %v5776 = vpop.xlane.xlu0 %5775
        %5777 = vadd.xlane.f32.xlu0 %v5737
        %v5778 = vpop.xlane.xlu0 %5777
        %5779 = vadd.xlane.f32.xlu0 %v5738
        %v5780 = vpop.xlane.xlu0 %5779
        %5781 = vadd.xlane.f32.xlu0 %v5739
        %v5782 = vpop.xlane.xlu0 %5781
        %5783 = vadd.xlane.f32.xlu0 %v5740
        %v5784 = vpop.xlane.xlu0 %5783
        %5785 = vadd.xlane.f32.xlu0 %v5741
        %v5786 = vpop.xlane.xlu0 %5785
        %5787 = vadd.xlane.f32.xlu0 %v5742
        %v5788 = vpop.xlane.xlu0 %5787
        %5789 = vadd.xlane.f32.xlu0 %v5743
        %v5790 = vpop.xlane.xlu0 %5789
        %5791 = vadd.xlane.f32.xlu0 %v5744
        %v5792 = vpop.xlane.xlu0 %5791
        %5793 = vadd.xlane.f32.xlu0 %v5745
        %v5794 = vpop.xlane.xlu0 %5793
        %5795 = vadd.xlane.f32.xlu0 %v5746
        %v5796 = vpop.xlane.xlu0 %5795
        %5797 = vadd.xlane.f32.xlu0 %v5747
        %v5798 = vpop.xlane.xlu0 %5797
        %5799 = vadd.xlane.f32.xlu0 %v5748
        %v5800 = vpop.xlane.xlu0 %5799
        %5801 = vadd.xlane.f32.xlu0 %v5749
        %v5802 = vpop.xlane.xlu0 %5801
        %5803 = vadd.xlane.f32.xlu0 %v5750
        %v5804 = vpop.xlane.xlu0 %5803
        %5805 = vadd.xlane.f32.xlu0 %v5751
        %v5806 = vpop.xlane.xlu0 %5805
        %5807 = vadd.xlane.f32.xlu0 %v5752
        %v5808 = vpop.xlane.xlu0 %5807
        %5809 = vadd.xlane.f32.xlu0 %v5753
        %v5810 = vpop.xlane.xlu0 %5809
        %5811 = vadd.xlane.f32.xlu0 %v5754
        %v5812 = vpop.xlane.xlu0 %5811
        %5813 = vadd.xlane.f32.xlu0 %v5755
        %v5814 = vpop.xlane.xlu0 %5813
        %5815 = vadd.xlane.f32.xlu0 %v5756
        %v5816 = vpop.xlane.xlu0 %5815
        %5817 = vadd.xlane.f32.xlu0 %v5757
        %v5818 = vpop.xlane.xlu0 %5817
        %5819 = vadd.xlane.f32.xlu0 %v5758
        %v5820 = vpop.xlane.xlu0 %5819
        %5821 = vadd.xlane.f32.xlu0 %v5759
        %v5822 = vpop.xlane.xlu0 %5821
        %5823 = vadd.xlane.f32.xlu0 %v5760
        %v5824 = vpop.xlane.xlu0 %5823
        %v5825 = vadd.f32 %v5660, %v5762
        %v5826 = vadd.f32 %v5661, %v5764
        %v5827 = vadd.f32 %v5662, %v5766
        %v5828 = vadd.f32 %v5663, %v5768
        %v5829 = vadd.f32 %v5664, %v5770
        %v5830 = vadd.f32 %v5665, %v5772
        %v5831 = vadd.f32 %v5666, %v5774
        %v5832 = vadd.f32 %v5667, %v5776
        %v5833 = vadd.f32 %v5668, %v5778
        %v5834 = vadd.f32 %v5669, %v5780
        %v5835 = vadd.f32 %v5670, %v5782
        %v5836 = vadd.f32 %v5671, %v5784
        %v5837 = vadd.f32 %v5672, %v5786
        %v5838 = vadd.f32 %v5673, %v5788
        %v5839 = vadd.f32 %v5674, %v5790
        %v5840 = vadd.f32 %v5675, %v5792
        %v5841 = vadd.f32 %v5676, %v5794
        %v5842 = vadd.f32 %v5677, %v5796
        %v5843 = vadd.f32 %v5678, %v5798
        %v5844 = vadd.f32 %v5679, %v5800
        %v5845 = vadd.f32 %v5680, %v5802
        %v5846 = vadd.f32 %v5681, %v5804
        %v5847 = vadd.f32 %v5682, %v5806
        %v5848 = vadd.f32 %v5683, %v5808
        %v5849 = vadd.f32 %v5684, %v5810
        %v5850 = vadd.f32 %v5685, %v5812
        %v5851 = vadd.f32 %v5686, %v5814
        %v5852 = vadd.f32 %v5687, %v5816
        %v5853 = vadd.f32 %v5688, %v5818
        %v5854 = vadd.f32 %v5689, %v5820
        %v5855 = vadd.f32 %v5690, %v5822
        %v5856 = vadd.f32 %v5691, %v5824
        %v5857 = vld [vmem:[#allocation5] sm:$0x1]
        %v5859 = vlaneseq
        %v5860 = vshrl.u32 %v5859, 7
        %v5861 = vsub.s32 0, %v5860
        %v5862 = vrot.slane %v5857, %v5861
        %5863 = vset.pattern.permute.xlu0 0
        %5864 = vperm.xlu0 %5863, %v5862
        %v5865 = vpop.permute.xlu0 %5864
        %v5867 = vadd.f32 %v5825, %v5865
        %v5868 = vadd.f32 %v5826, %v5865
        %v5869 = vadd.f32 %v5827, %v5865
        %v5870 = vadd.f32 %v5828, %v5865
        %v5871 = vadd.f32 %v5829, %v5865
        %v5872 = vadd.f32 %v5830, %v5865
        %v5873 = vadd.f32 %v5831, %v5865
        %v5874 = vadd.f32 %v5832, %v5865
        %v5875 = vadd.f32 %v5833, %v5865
        %v5876 = vadd.f32 %v5834, %v5865
        %v5877 = vadd.f32 %v5835, %v5865
        %v5878 = vadd.f32 %v5836, %v5865
        %v5879 = vadd.f32 %v5837, %v5865
        %v5880 = vadd.f32 %v5838, %v5865
        %v5881 = vadd.f32 %v5839, %v5865
        %v5882 = vadd.f32 %v5840, %v5865
        %v5883 = vadd.f32 %v5841, %v5865
        %v5884 = vadd.f32 %v5842, %v5865
        %v5885 = vadd.f32 %v5843, %v5865
        %v5886 = vadd.f32 %v5844, %v5865
        %v5887 = vadd.f32 %v5845, %v5865
        %v5888 = vadd.f32 %v5846, %v5865
        %v5889 = vadd.f32 %v5847, %v5865
        %v5890 = vadd.f32 %v5848, %v5865
        %v5891 = vadd.f32 %v5849, %v5865
        %v5892 = vadd.f32 %v5850, %v5865
        %v5893 = vadd.f32 %v5851, %v5865
        %v5894 = vadd.f32 %v5852, %v5865
        %v5895 = vadd.f32 %v5853, %v5865
        %v5896 = vadd.f32 %v5854, %v5865
        %v5897 = vadd.f32 %v5855, %v5865
        %v5898 = vadd.f32 %v5856, %v5865
        %v5899 = vsub.f32 0.0, %v5867
        %v5900 = vsub.f32 0.0, %v5868
        %v5901 = vsub.f32 0.0, %v5869
        %v5902 = vsub.f32 0.0, %v5870
        %v5903 = vsub.f32 0.0, %v5871
        %v5904 = vsub.f32 0.0, %v5872
        %v5905 = vsub.f32 0.0, %v5873
        %v5906 = vsub.f32 0.0, %v5874
        %v5907 = vsub.f32 0.0, %v5875
        %v5908 = vsub.f32 0.0, %v5876
        %v5909 = vsub.f32 0.0, %v5877
        %v5910 = vsub.f32 0.0, %v5878
        %v5911 = vsub.f32 0.0, %v5879
        %v5912 = vsub.f32 0.0, %v5880
        %v5913 = vsub.f32 0.0, %v5881
        %v5914 = vsub.f32 0.0, %v5882
        %v5915 = vsub.f32 0.0, %v5883
        %v5916 = vsub.f32 0.0, %v5884
        %v5917 = vsub.f32 0.0, %v5885
        %v5918 = vsub.f32 0.0, %v5886
        %v5919 = vsub.f32 0.0, %v5887
        %v5920 = vsub.f32 0.0, %v5888
        %v5921 = vsub.f32 0.0, %v5889
        %v5922 = vsub.f32 0.0, %v5890
        %v5923 = vsub.f32 0.0, %v5891
        %v5924 = vsub.f32 0.0, %v5892
        %v5925 = vsub.f32 0.0, %v5893
        %v5926 = vsub.f32 0.0, %v5894
        %v5927 = vsub.f32 0.0, %v5895
        %v5928 = vsub.f32 0.0, %v5896
        %v5929 = vsub.f32 0.0, %v5897
        %v5930 = vsub.f32 0.0, %v5898
        %v5931 = vmul.f32 %v5899, 1.442695
        %v5932 = vpow.pop %v5931
        %v5933 = vmul.f32 %v5900, 1.442695
        %v5934 = vpow.pop %v5933
        %v5935 = vmul.f32 %v5901, 1.442695
        %v5936 = vpow.pop %v5935
        %v5937 = vmul.f32 %v5902, 1.442695
        %v5938 = vpow.pop %v5937
        %v5939 = vmul.f32 %v5903, 1.442695
        %v5940 = vpow.pop %v5939
        %v5941 = vmul.f32 %v5904, 1.442695
        %v5942 = vpow.pop %v5941
        %v5943 = vmul.f32 %v5905, 1.442695
        %v5944 = vpow.pop %v5943
        %v5945 = vmul.f32 %v5906, 1.442695
        %v5946 = vpow.pop %v5945
        %v5947 = vmul.f32 %v5907, 1.442695
        %v5948 = vpow.pop %v5947
        %v5949 = vmul.f32 %v5908, 1.442695
        %v5950 = vpow.pop %v5949
        %v5951 = vmul.f32 %v5909, 1.442695
        %v5952 = vpow.pop %v5951
        %v5953 = vmul.f32 %v5910, 1.442695
        %v5954 = vpow.pop %v5953
        %v5955 = vmul.f32 %v5911, 1.442695
        %v5956 = vpow.pop %v5955
        %v5957 = vmul.f32 %v5912, 1.442695
        %v5958 = vpow.pop %v5957
        %v5959 = vmul.f32 %v5913, 1.442695
        %v5960 = vpow.pop %v5959
        %v5961 = vmul.f32 %v5914, 1.442695
        %v5962 = vpow.pop %v5961
        %v5963 = vmul.f32 %v5915, 1.442695
        %v5964 = vpow.pop %v5963
        %v5965 = vmul.f32 %v5916, 1.442695
        %v5966 = vpow.pop %v5965
        %v5967 = vmul.f32 %v5917, 1.442695
        %v5968 = vpow.pop %v5967
        %v5969 = vmul.f32 %v5918, 1.442695
        %v5970 = vpow.pop %v5969
        %v5971 = vmul.f32 %v5919, 1.442695
        %v5972 = vpow.pop %v5971
        %v5973 = vmul.f32 %v5920, 1.442695
        %v5974 = vpow.pop %v5973
        %v5975 = vmul.f32 %v5921, 1.442695
        %v5976 = vpow.pop %v5975
        %v5977 = vmul.f32 %v5922, 1.442695
        %v5978 = vpow.pop %v5977
        %v5979 = vmul.f32 %v5923, 1.442695
        %v5980 = vpow.pop %v5979
        %v5981 = vmul.f32 %v5924, 1.442695
        %v5982 = vpow.pop %v5981
        %v5983 = vmul.f32 %v5925, 1.442695
        %v5984 = vpow.pop %v5983
        %v5985 = vmul.f32 %v5926, 1.442695
        %v5986 = vpow.pop %v5985
        %v5987 = vmul.f32 %v5927, 1.442695
        %v5988 = vpow.pop %v5987
        %v5989 = vmul.f32 %v5928, 1.442695
        %v5990 = vpow.pop %v5989
        %v5991 = vmul.f32 %v5929, 1.442695
        %v5992 = vpow.pop %v5991
        %v5993 = vmul.f32 %v5930, 1.442695
        %v5994 = vpow.pop %v5993
        %v5995 = vadd.f32 %v5932, 1.0
        %v5996 = vadd.f32 %v5934, 1.0
        %v5997 = vadd.f32 %v5936, 1.0
        %v5998 = vadd.f32 %v5938, 1.0
        %v5999 = vadd.f32 %v5940, 1.0
        %v6000 = vadd.f32 %v5942, 1.0
        %v6001 = vadd.f32 %v5944, 1.0
        %v6002 = vadd.f32 %v5946, 1.0
        %v6003 = vadd.f32 %v5948, 1.0
        %v6004 = vadd.f32 %v5950, 1.0
        %v6005 = vadd.f32 %v5952, 1.0
        %v6006 = vadd.f32 %v5954, 1.0
        %v6007 = vadd.f32 %v5956, 1.0
        %v6008 = vadd.f32 %v5958, 1.0
        %v6009 = vadd.f32 %v5960, 1.0
        %v6010 = vadd.f32 %v5962, 1.0
        %v6011 = vadd.f32 %v5964, 1.0
        %v6012 = vadd.f32 %v5966, 1.0
        %v6013 = vadd.f32 %v5968, 1.0
        %v6014 = vadd.f32 %v5970, 1.0
        %v6015 = vadd.f32 %v5972, 1.0
        %v6016 = vadd.f32 %v5974, 1.0
        %v6017 = vadd.f32 %v5976, 1.0
        %v6018 = vadd.f32 %v5978, 1.0
        %v6019 = vadd.f32 %v5980, 1.0
        %v6020 = vadd.f32 %v5982, 1.0
        %v6021 = vadd.f32 %v5984, 1.0
        %v6022 = vadd.f32 %v5986, 1.0
        %v6023 = vadd.f32 %v5988, 1.0
        %v6024 = vadd.f32 %v5990, 1.0
        %v6025 = vadd.f32 %v5992, 1.0
        %v6026 = vadd.f32 %v5994, 1.0
        %v6027 = vrcp.pop %v5995
        %v6028 = vmul.f32 1.0, %v6027
        %v6029 = vrcp.pop %v5996
        %v6030 = vmul.f32 1.0, %v6029
        %v6031 = vrcp.pop %v5997
        %v6032 = vmul.f32 1.0, %v6031
        %v6033 = vrcp.pop %v5998
        %v6034 = vmul.f32 1.0, %v6033
        %v6035 = vrcp.pop %v5999
        %v6036 = vmul.f32 1.0, %v6035
        %v6037 = vrcp.pop %v6000
        %v6038 = vmul.f32 1.0, %v6037
        %v6039 = vrcp.pop %v6001
        %v6040 = vmul.f32 1.0, %v6039
        %v6041 = vrcp.pop %v6002
        %v6042 = vmul.f32 1.0, %v6041
        %v6043 = vrcp.pop %v6003
        %v6044 = vmul.f32 1.0, %v6043
        %v6045 = vrcp.pop %v6004
        %v6046 = vmul.f32 1.0, %v6045
        %v6047 = vrcp.pop %v6005
        %v6048 = vmul.f32 1.0, %v6047
        %v6049 = vrcp.pop %v6006
        %v6050 = vmul.f32 1.0, %v6049
        %v6051 = vrcp.pop %v6007
        %v6052 = vmul.f32 1.0, %v6051
        %v6053 = vrcp.pop %v6008
        %v6054 = vmul.f32 1.0, %v6053
        %v6055 = vrcp.pop %v6009
        %v6056 = vmul.f32 1.0, %v6055
        %v6057 = vrcp.pop %v6010
        %v6058 = vmul.f32 1.0, %v6057
        %v6059 = vrcp.pop %v6011
        %v6060 = vmul.f32 1.0, %v6059
        %v6061 = vrcp.pop %v6012
        %v6062 = vmul.f32 1.0, %v6061
        %v6063 = vrcp.pop %v6013
        %v6064 = vmul.f32 1.0, %v6063
        %v6065 = vrcp.pop %v6014
        %v6066 = vmul.f32 1.0, %v6065
        %v6067 = vrcp.pop %v6015
        %v6068 = vmul.f32 1.0, %v6067
        %v6069 = vrcp.pop %v6016
        %v6070 = vmul.f32 1.0, %v6069
        %v6071 = vrcp.pop %v6017
        %v6072 = vmul.f32 1.0, %v6071
        %v6073 = vrcp.pop %v6018
        %v6074 = vmul.f32 1.0, %v6073
        %v6075 = vrcp.pop %v6019
        %v6076 = vmul.f32 1.0, %v6075
        %v6077 = vrcp.pop %v6020
        %v6078 = vmul.f32 1.0, %v6077
        %v6079 = vrcp.pop %v6021
        %v6080 = vmul.f32 1.0, %v6079
        %v6081 = vrcp.pop %v6022
        %v6082 = vmul.f32 1.0, %v6081
        %v6083 = vrcp.pop %v6023
        %v6084 = vmul.f32 1.0, %v6083
        %v6085 = vrcp.pop %v6024
        %v6086 = vmul.f32 1.0, %v6085
        %v6087 = vrcp.pop %v6025
        %v6088 = vmul.f32 1.0, %v6087
        %v6089 = vrcp.pop %v6026
        %v6090 = vmul.f32 1.0, %v6089
        %v6123 = vlaneseq
        %v6124 = vand.u32 %v6123, 127
        %v6125 = vlaneseq
        %v6126 = vshrl.u32 %v6125, 7
        %v6127 = vsub.s32 %v6124, %v6126
        %v6128 = vrot.slane %v6028, %v6127
        %v6129 = vadd.s32 %v6124, 4294967288
        %v6130 = vlaneseq
        %v6131 = vshrl.u32 %v6130, 7
        %v6132 = vsub.s32 %v6129, %v6131
        %v6133 = vrot.slane %v6030, %v6132
        %vm6134 = vcmask 130112
        %v6135 = vsel %vm6134, %v6133, %v6128
        %v6136 = vlaneseq
        %v6137 = vshrl.u32 %v6136, 7
        %v6138 = vsub.s32 %v6124, %v6137
        %v6139 = vrot.slane %v6032, %v6138
        %v6140 = vlaneseq
        %v6141 = vshrl.u32 %v6140, 7
        %v6142 = vsub.s32 %v6129, %v6141
        %v6143 = vrot.slane %v6034, %v6142
        %v6144 = vsel %vm6134, %v6143, %v6139
        %v6145 = vlaneseq
        %v6146 = vshrl.u32 %v6145, 7
        %v6147 = vsub.s32 %v6124, %v6146
        %v6148 = vrot.slane %v6036, %v6147
        %v6149 = vlaneseq
        %v6150 = vshrl.u32 %v6149, 7
        %v6151 = vsub.s32 %v6129, %v6150
        %v6152 = vrot.slane %v6038, %v6151
        %v6153 = vsel %vm6134, %v6152, %v6148
        %v6154 = vlaneseq
        %v6155 = vshrl.u32 %v6154, 7
        %v6156 = vsub.s32 %v6124, %v6155
        %v6157 = vrot.slane %v6040, %v6156
        %v6158 = vlaneseq
        %v6159 = vshrl.u32 %v6158, 7
        %v6160 = vsub.s32 %v6129, %v6159
        %v6161 = vrot.slane %v6042, %v6160
        %v6162 = vsel %vm6134, %v6161, %v6157
        %v6163 = vlaneseq
        %v6164 = vshrl.u32 %v6163, 7
        %v6165 = vsub.s32 %v6124, %v6164
        %v6166 = vrot.slane %v6044, %v6165
        %v6167 = vlaneseq
        %v6168 = vshrl.u32 %v6167, 7
        %v6169 = vsub.s32 %v6129, %v6168
        %v6170 = vrot.slane %v6046, %v6169
        %v6171 = vsel %vm6134, %v6170, %v6166
        %v6172 = vlaneseq
        %v6173 = vshrl.u32 %v6172, 7
        %v6174 = vsub.s32 %v6124, %v6173
        %v6175 = vrot.slane %v6048, %v6174
        %v6176 = vlaneseq
        %v6177 = vshrl.u32 %v6176, 7
        %v6178 = vsub.s32 %v6129, %v6177
        %v6179 = vrot.slane %v6050, %v6178
        %v6180 = vsel %vm6134, %v6179, %v6175
        %v6181 = vlaneseq
        %v6182 = vshrl.u32 %v6181, 7
        %v6183 = vsub.s32 %v6124, %v6182
        %v6184 = vrot.slane %v6052, %v6183
        %v6185 = vlaneseq
        %v6186 = vshrl.u32 %v6185, 7
        %v6187 = vsub.s32 %v6129, %v6186
        %v6188 = vrot.slane %v6054, %v6187
        %v6189 = vsel %vm6134, %v6188, %v6184
        %v6190 = vlaneseq
        %v6191 = vshrl.u32 %v6190, 7
        %v6192 = vsub.s32 %v6124, %v6191
        %v6193 = vrot.slane %v6056, %v6192
        %v6194 = vlaneseq
        %v6195 = vshrl.u32 %v6194, 7
        %v6196 = vsub.s32 %v6129, %v6195
        %v6197 = vrot.slane %v6058, %v6196
        %v6198 = vsel %vm6134, %v6197, %v6193
        %v6199 = vlaneseq
        %v6200 = vshrl.u32 %v6199, 7
        %v6201 = vsub.s32 %v6124, %v6200
        %v6202 = vrot.slane %v6060, %v6201
        %v6203 = vlaneseq
        %v6204 = vshrl.u32 %v6203, 7
        %v6205 = vsub.s32 %v6129, %v6204
        %v6206 = vrot.slane %v6062, %v6205
        %v6207 = vsel %vm6134, %v6206, %v6202
        %v6208 = vlaneseq
        %v6209 = vshrl.u32 %v6208, 7
        %v6210 = vsub.s32 %v6124, %v6209
        %v6211 = vrot.slane %v6064, %v6210
        %v6212 = vlaneseq
        %v6213 = vshrl.u32 %v6212, 7
        %v6214 = vsub.s32 %v6129, %v6213
        %v6215 = vrot.slane %v6066, %v6214
        %v6216 = vsel %vm6134, %v6215, %v6211
        %v6217 = vlaneseq
        %v6218 = vshrl.u32 %v6217, 7
        %v6219 = vsub.s32 %v6124, %v6218
        %v6220 = vrot.slane %v6068, %v6219
        %v6221 = vlaneseq
        %v6222 = vshrl.u32 %v6221, 7
        %v6223 = vsub.s32 %v6129, %v6222
        %v6224 = vrot.slane %v6070, %v6223
        %v6225 = vsel %vm6134, %v6224, %v6220
        %v6226 = vlaneseq
        %v6227 = vshrl.u32 %v6226, 7
        %v6228 = vsub.s32 %v6124, %v6227
        %v6229 = vrot.slane %v6072, %v6228
        %v6230 = vlaneseq
        %v6231 = vshrl.u32 %v6230, 7
        %v6232 = vsub.s32 %v6129, %v6231
        %v6233 = vrot.slane %v6074, %v6232
        %v6234 = vsel %vm6134, %v6233, %v6229
        %v6235 = vlaneseq
        %v6236 = vshrl.u32 %v6235, 7
        %v6237 = vsub.s32 %v6124, %v6236
        %v6238 = vrot.slane %v6076, %v6237
        %v6239 = vlaneseq
        %v6240 = vshrl.u32 %v6239, 7
        %v6241 = vsub.s32 %v6129, %v6240
        %v6242 = vrot.slane %v6078, %v6241
        %v6243 = vsel %vm6134, %v6242, %v6238
        %v6244 = vlaneseq
        %v6245 = vshrl.u32 %v6244, 7
        %v6246 = vsub.s32 %v6124, %v6245
        %v6247 = vrot.slane %v6080, %v6246
        %v6248 = vlaneseq
        %v6249 = vshrl.u32 %v6248, 7
        %v6250 = vsub.s32 %v6129, %v6249
        %v6251 = vrot.slane %v6082, %v6250
        %v6252 = vsel %vm6134, %v6251, %v6247
        %v6253 = vlaneseq
        %v6254 = vshrl.u32 %v6253, 7
        %v6255 = vsub.s32 %v6124, %v6254
        %v6256 = vrot.slane %v6084, %v6255
        %v6257 = vlaneseq
        %v6258 = vshrl.u32 %v6257, 7
        %v6259 = vsub.s32 %v6129, %v6258
        %v6260 = vrot.slane %v6086, %v6259
        %v6261 = vsel %vm6134, %v6260, %v6256
        %v6262 = vlaneseq
        %v6263 = vshrl.u32 %v6262, 7
        %v6264 = vsub.s32 %v6124, %v6263
        %v6265 = vrot.slane %v6088, %v6264
        %v6266 = vlaneseq
        %v6267 = vshrl.u32 %v6266, 7
        %v6268 = vsub.s32 %v6129, %v6267
        %v6269 = vrot.slane %v6090, %v6268
        %v6270 = vsel %vm6134, %v6269, %v6265
        %vm6271 = vcmask 1041409
        %v6272 = vsel %vm6271, %v6144, %v6135
        %vm6273 = vcmask 1042434
        %v6274 = vsel %vm6273, %v6153, %v6272
        %vm6275 = vcmask 1043459
        %v6276 = vsel %vm6275, %v6162, %v6274
        %vm6277 = vcmask 1044484
        %v6278 = vsel %vm6277, %v6171, %v6276
        %vm6279 = vcmask 1045509
        %v6280 = vsel %vm6279, %v6180, %v6278
        %vm6281 = vcmask 1046534
        %v6282 = vsel %vm6281, %v6189, %v6280
        %vm6283 = vcmask 1047559
        %v6284 = vsel %vm6283, %v6198, %v6282
        %v6285 = vsel %vm6271, %v6216, %v6207
        %v6286 = vsel %vm6273, %v6225, %v6285
        %v6287 = vsel %vm6275, %v6234, %v6286
        %v6288 = vsel %vm6277, %v6243, %v6287
        %v6289 = vsel %vm6279, %v6252, %v6288
        %v6290 = vsel %vm6281, %v6261, %v6289
        %v6291 = vsel %vm6283, %v6270, %v6290
        %6294 = vst.msk [vmem:[%s273] sm:$0xff] %vm1920, %v6284
        %6295 = vst.msk [vmem:[%s273 + $0x8] sm:$0xff] %vm1920, %v6291
        %s6296 = sand.u32 %s183, 1
        %s6297 = scalar_lea.sflag [#allocation7], %s6296
        %s6298 = sand.u32 %s183, 1
        %s6299 = smul.addr %s6298, 16
        %s6300 = scalar_lea.vmem [#allocation6], %s6299
        // Predicated region
        $region49: #{discriminator_forward.1} parent=47 // pred_check
          %p6301 = pneg %p193
        $region50: #{discriminator_forward.1} parent=47 // pred_check_branch
          %6303 = sbr.rel (%p6301) target = $region52
        $region51: #{discriminator_forward.1} parent=47 // pred_region
          %s6305 = ssub.s32 256, 256
          %6306 = vsyncadd %s6297, %s6305
          %s6307 = smul.addr %s23, 2
          %s6308 = smul.addr %s6307, 128
          %s6309 = scalar_lea.hbm %s7, %s6308
          %s6310 = sshll.u32 %s6300, 4
          %s6311 = int_to_ptr.vmem [resolvable:$true] %s6310
          %6316 = dma.vmem_to_hbm [thread:$0]  %s6311, 256, %s6309, %s6297, 128, 128, 8
        $region52: #{discriminator_forward.1} parent=47 // pred_fallthru
          _
      $region48: #{discriminator_forward.1} parent=5 // pred_fallthru
        _
      %p6317 = scmp.le.s32.totalorder 2, %s18
      // Predicated region
      $region53: #{discriminator_forward.1} parent=5 // pred_check
        %p6318 = pneg %p6317
      $region54: #{discriminator_forward.1} parent=5 // pred_check_branch
        %6320 = sbr.rel (%p6318) target = $region56
      $region55: #{discriminator_forward.1} parent=5 // pred_region
        %s6321 = ssub.s32 %s18, 2
        // Predicated region
        $region57: #{discriminator_forward.1} parent=55 // pred_check
          %p6322 = pneg %p199
        $region58: #{discriminator_forward.1} parent=55 // pred_check_branch
          %6324 = sbr.rel (%p6322) target = $region60
        $region59: #{discriminator_forward.1} parent=55 // pred_region
          %s6325 = sand.u32 %s184, 1
          %s6326 = scalar_lea.sflag [#allocation7], %s6325
          %s6327 = sand.u32 %s184, 1
          %s6328 = smul.addr %s6327, 16
          %s6329 = scalar_lea.vmem [#allocation6], %s6328
          %6330 = dma.done %s6326, 256
        $region60: #{discriminator_forward.1} parent=55 // pred_fallthru
          _
      $region56: #{discriminator_forward.1} parent=5 // pred_fallthru
        _
    $region6: #{discriminator_forward.1} parent=1 // loop_footer
      %s22 = sadd.s32 1, %s18
    $region7: #{discriminator_forward.1} parent=1 // loop_footer_branch
      %17 = sbr.rel target = $region3
    $region8: #{discriminator_forward.1} parent=1 // loop_exit
      _
    %6331 = vsyncpa [#allocation7], 1
    %s6332 = scalar_lea.sflag [#allocation7], 1
    %6333 = vsyncpa %s6332, 1

</llo_original>
